<compile_context>
chip_gen: v7x
topology: tpu7x:2x2x1
jax: 0.10.0
libtpu: 0.0.40
codegen_flags: <defaults>
</compile_context>

<pallas_src>
import functools
import math

import jax
import jax.numpy as jnp
from jax.experimental import pallas as pl
from jax.experimental.pallas import tpu as pltpu


def _attention_kernel(x_ref, wqkv_ref, bqkv_ref, wproj_ref, bproj_ref, o_ref,
                      *, n_heads, head_dim, dim, scale):
    # x_ref:     (bb, T, dim)
    # wqkv_ref:  (dim, 3*dim), bqkv_ref: (1, 3*dim)
    # wproj_ref: (dim, dim),   bproj_ref: (1, dim)
    bb, T, _ = x_ref.shape
    in_dtype = x_ref.dtype

    # ---- Fused QKV projection over all bb*T tokens (one big MXU matmul) ----
    x2d = x_ref[...].reshape(bb * T, dim)                         # (bb*T, dim)
    qkv = jnp.dot(x2d, wqkv_ref[...],
                  preferred_element_type=jnp.float32) + bqkv_ref[...]  # f32
    qkv = qkv.reshape(bb, T, 3 * dim)

    # Column layout of qkv matches torch's reshape (T, 3, H, hd):
    #   q = cols [0, dim), k = [dim, 2*dim), v = [2*dim, 3*dim);
    #   head h occupies [h*hd, (h+1)*hd) inside each third.
    head_outs = []
    for h in range(n_heads):
        lo = h * head_dim
        hi = lo + head_dim
        # Fold the softmax scale into q while still in f32.
        qh = (qkv[:, :, lo:hi] * scale).astype(in_dtype)               # (bb,T,hd)
        kh = qkv[:, :, dim + lo:dim + hi].astype(in_dtype)             # (bb,T,hd)
        vh = qkv[:, :, 2 * dim + lo:2 * dim + hi].astype(in_dtype)     # (bb,T,hd)

        # Batched scores over the bb samples of this block: (bb, T, T) f32.
        s = jnp.einsum("bqd,bkd->bqk", qh, kh,
                       preferred_element_type=jnp.float32)

        # Numerically stable softmax; exp + approximate reciprocal on EUP.
        s_max = jnp.max(s, axis=-1, keepdims=True)
        p = jnp.exp(s - s_max)
        p = p * pl.reciprocal(jnp.sum(p, axis=-1, keepdims=True), approx=True)
        # attn dropout (eval mode) == identity.
        # TODO(synk): training-mode dropout would need pltpu.prng_seed/prng_random_bits.

        head_outs.append(
            jnp.einsum("bqk,bkd->bqd", p.astype(in_dtype), vh,
                       preferred_element_type=jnp.float32))            # (bb,T,hd) f32

    ctx = jnp.concatenate(head_outs, axis=-1)                          # (bb,T,dim) f32
    ctx = ctx.reshape(bb * T, dim).astype(in_dtype)

    # ---- Output projection: (bb*T, dim) @ (dim, dim) ----
    y = jnp.dot(ctx, wproj_ref[...],
                preferred_element_type=jnp.float32) + bproj_ref[...]
    # proj dropout (eval mode) == identity.
    o_ref[...] = y.reshape(bb, T, dim).astype(o_ref.dtype)


def _pick_batch_block(B, T, D, n_heads, itemsize, budget_bytes=8 * 1024 * 1024):
    """Largest divisor of B whose per-block working set stays under budget."""
    best = 1
    for bb in range(1, B + 1):
        if B % bb:
            continue
        per_block = bb * (
            2 * T * D * itemsize          # x block + out block
            + T * 3 * D * 4               # qkv intermediate (f32)
            + 2 * n_heads * T * T * 4     # scores + probs (f32)
            + 2 * T * D * 4               # head outputs + ctx (f32)
        )
        if per_block <= budget_bytes:
            best = bb
    return best


def attention_pallas(x, w_qkv, b_qkv, w_proj, b_proj, *, n_heads):
    """x: (n_samples, n_tokens, dim) -> (n_samples, n_tokens, dim)."""
    B, T, D = x.shape
    assert D % n_heads == 0, "dim must be divisible by n_heads"
    head_dim = D // n_heads
    scale = head_dim ** (-0.5)

    bb = _pick_batch_block(B, T, D, n_heads, x.dtype.itemsize)

    b_qkv2 = b_qkv.reshape(1, 3 * D)
    b_proj2 = b_proj.reshape(1, D)

    kernel = functools.partial(
        _attention_kernel,
        n_heads=n_heads, head_dim=head_dim, dim=D, scale=scale)

    # NOTE: weights/biases have constant index_maps so they are DMA'd once and
    # stay resident across the grid.
    return pl.pallas_call(
        kernel,
        out_shape=jax.ShapeDtypeStruct((B, T, D), x.dtype),
        grid_spec=pltpu.PrefetchScalarGridSpec(
            num_scalar_prefetch=0,
            grid=(B // bb,),
            in_specs=[
                pl.BlockSpec((bb, T, D), lambda b: (b, 0, 0)),     # x (bb samples)
                pl.BlockSpec((D, 3 * D), lambda b: (0, 0)),        # w_qkv (resident)
                pl.BlockSpec((1, 3 * D), lambda b: (0, 0)),        # b_qkv
                pl.BlockSpec((D, D), lambda b: (0, 0)),            # w_proj (resident)
                pl.BlockSpec((1, D), lambda b: (0, 0)),            # b_proj
            ],
            out_specs=pl.BlockSpec((bb, T, D), lambda b: (b, 0, 0)),
        ),
        compiler_params=pltpu.CompilerParams(
            dimension_semantics=("parallel",),
            vmem_limit_bytes=48 * 1024 * 1024,
        ),
    )(x, w_qkv, b_qkv2, w_proj, b_proj2)


def init_linear_params(key, fan_in, fan_out, dtype=jnp.float32):
    # Mimic nn.Linear default init: U(-1/sqrt(fan_in), 1/sqrt(fan_in)).
    kw, kb = jax.random.split(key)
    bound = 1.0 / math.sqrt(fan_in)
    # Stored transposed relative to torch (kernel does x @ w): (fan_in, fan_out).
    w = jax.random.uniform(kw, (fan_in, fan_out), dtype, -bound, bound)
    b = jax.random.uniform(kb, (fan_out,), dtype, -bound, bound)
    return w, b


def attention_reference(x, w_qkv, b_qkv, w_proj, b_proj, *, n_heads):
    """Pure-JAX replica of the torch Attention.forward (eval mode)."""
    B, T, D = x.shape
    hd = D // n_heads
    scale = hd ** (-0.5)
    qkv = jnp.einsum("btd,de->bte", x, w_qkv) + b_qkv               # (B,T,3D)
    qkv = qkv.reshape(B, T, 3, n_heads, hd).transpose(2, 0, 3, 1, 4)  # (3,B,H,T,hd)
    q, k, v = qkv[0], qkv[1], qkv[2]
    dp = jnp.einsum("bhtd,bhsd->bhts", q, k) * scale
    attn = jax.nn.softmax(dp, axis=-1)
    out = jnp.einsum("bhts,bhsd->bhtd", attn, v)                    # (B,H,T,hd)
    out = out.transpose(0, 2, 1, 3).reshape(B, T, D)
    return jnp.einsum("btd,de->bte", out, w_proj) + b_proj


if __name__ == "__main__":
    # Small shapes consistent with the module: (n_samples, n_patches+1, dim).
    B, T = 2, 8
    dim, n_heads = 128, 8   # head_dim = 16; dim and 3*dim are lane-dense (x128)

    key = jax.random.PRNGKey(0)
    kx, kqkv, kproj = jax.random.split(key, 3)

    x = jax.random.normal(kx, (B, T, dim), jnp.float32)
    w_qkv, b_qkv = init_linear_params(kqkv, dim, 3 * dim)
    w_proj, b_proj = init_linear_params(kproj, dim, dim)

    out = attention_pallas(x, w_qkv, b_qkv, w_proj, b_proj, n_heads=n_heads)
    out = jax.block_until_ready(out)

    ref = attention_reference(x, w_qkv, b_qkv, w_proj, b_proj, n_heads=n_heads)
    assert out.shape == (B, T, dim)
    assert jnp.allclose(out, ref, atol=2e-2, rtol=2e-2), "mismatch vs reference"

    print("KERNEL_OK")
</pallas_src>

<mosaic_0001>
module attributes {stable_mosaic.version = 11 : i64} {
  func.func @_attention_kernel(%arg0: i32, %arg1: memref<2x8x128xf32, #tpu.memory_space<vmem>>, %arg2: memref<128x384xf32, #tpu.memory_space<vmem>>, %arg3: memref<1x384xf32, #tpu.memory_space<vmem>>, %arg4: memref<128x128xf32, #tpu.memory_space<vmem>>, %arg5: memref<1x128xf32, #tpu.memory_space<vmem>>, %arg6: memref<2x8x128xf32, #tpu.memory_space<vmem>>) attributes {dimension_semantics = [#tpu.dimension_semantics<parallel>], iteration_bounds = array<i64: 1>, scalar_prefetch = 0 : i64, scratch_operands = 0 : i64, tpu.core_type = #tpu.core_type<tc>, window_params = [{transform_indices = @transform_0, window_bounds = array<i64: 2, 8, 128>}, {pipeline_mode = #tpu.pipeline_mode<synchronous>, transform_indices = @transform_1, window_bounds = array<i64: 128, 384>}, {pipeline_mode = #tpu.pipeline_mode<synchronous>, transform_indices = @transform_2, window_bounds = array<i64: 1, 384>}, {pipeline_mode = #tpu.pipeline_mode<synchronous>, transform_indices = @transform_3, window_bounds = array<i64: 128, 128>}, {pipeline_mode = #tpu.pipeline_mode<synchronous>, transform_indices = @transform_4, window_bounds = array<i64: 1, 128>}, {transform_indices = @transform_5, window_bounds = array<i64: 2, 8, 128>}]} {
    %c0 = arith.constant 0 : index
    %c0_0 = arith.constant 0 : index
    %c0_1 = arith.constant 0 : index
    %0 = vector.load %arg1[%c0, %c0_0, %c0_1] : memref<2x8x128xf32, #tpu.memory_space<vmem>>, vector<2x8x128xf32>
    %1 = vector.shape_cast %0 : vector<2x8x128xf32> to vector<16x128xf32>
    %c0_2 = arith.constant 0 : index
    %c0_3 = arith.constant 0 : index
    %2 = vector.load %arg2[%c0_2, %c0_3] : memref<128x384xf32, #tpu.memory_space<vmem>>, vector<128x384xf32>
    %cst = arith.constant dense<0.000000e+00> : vector<16x384xf32>
    %3 = tpu.matmul %1, %2, %cst {dimension_numbers = #tpu.dot_dimension_numbers<[1], [0], [0], [1], [0, 0, 1, 1], [], []>} : vector<16x128xf32>, vector<128x384xf32>, vector<16x384xf32> -> vector<16x384xf32>
    %c0_4 = arith.constant 0 : index
    %c0_5 = arith.constant 0 : index
    %4 = vector.load %arg3[%c0_4, %c0_5] : memref<1x384xf32, #tpu.memory_space<vmem>>, vector<1x384xf32>
    %5 = vector.broadcast %4 : vector<1x384xf32> to vector<16x384xf32>
    %6 = arith.addf %3, %5 : vector<16x384xf32>
    %7 = vector.shape_cast %6 : vector<16x384xf32> to vector<2x8x384xf32>
    %8 = vector.extract_strided_slice %7 {offsets = [0, 0, 0], sizes = [2, 8, 16], strides = [1, 1, 1]} : vector<2x8x384xf32> to vector<2x8x16xf32>
    %cst_6 = arith.constant 2.500000e-01 : f32
    %9 = vector.broadcast %cst_6 : f32 to vector<2x8x16xf32>
    %10 = arith.mulf %8, %9 : vector<2x8x16xf32>
    %11 = vector.extract_strided_slice %7 {offsets = [0, 0, 128], sizes = [2, 8, 16], strides = [1, 1, 1]} : vector<2x8x384xf32> to vector<2x8x16xf32>
    %12 = vector.extract_strided_slice %7 {offsets = [0, 0, 256], sizes = [2, 8, 16], strides = [1, 1, 1]} : vector<2x8x384xf32> to vector<2x8x16xf32>
    "tpu.trace_start"() <{level = 10 : i32, message = "bqd,bkd->bqk"}> : () -> ()
    %cst_7 = arith.constant dense<0.000000e+00> : vector<2x8x8xf32>
    %13 = tpu.matmul %10, %11, %cst_7 {dimension_numbers = #tpu.dot_dimension_numbers<[2], [2], [1], [1], [0, 0, 0, 1, 1, 1], [0], [0]>} : vector<2x8x16xf32>, vector<2x8x16xf32>, vector<2x8x8xf32> -> vector<2x8x8xf32>
    "tpu.trace_stop"() : () -> ()
    %cst_8 = arith.constant dense<0xFF800000> : vector<2x8xf32>
    %14 = vector.multi_reduction <maximumf>, %13, %cst_8 [2] : vector<2x8x8xf32> to vector<2x8xf32>
    %15 = vector.shape_cast %14 : vector<2x8xf32> to vector<2x8x1xf32>
    %16 = vector.broadcast %15 : vector<2x8x1xf32> to vector<2x8x8xf32>
    %17 = arith.subf %13, %16 : vector<2x8x8xf32>
    %18 = math.exp %17 : vector<2x8x8xf32>
    %cst_9 = arith.constant dense<0.000000e+00> : vector<2x8xf32>
    %19 = vector.multi_reduction <add>, %18, %cst_9 [2] : vector<2x8x8xf32> to vector<2x8xf32>
    %20 = vector.shape_cast %19 : vector<2x8xf32> to vector<2x8x1xf32>
    %21 = tpu.reciprocal %20 {approx = true} : vector<2x8x1xf32> -> vector<2x8x1xf32>
    %22 = vector.broadcast %21 : vector<2x8x1xf32> to vector<2x8x8xf32>
    %23 = arith.mulf %18, %22 : vector<2x8x8xf32>
    "tpu.trace_start"() <{level = 10 : i32, message = "bqk,bkd->bqd"}> : () -> ()
    %cst_10 = arith.constant dense<0.000000e+00> : vector<2x8x16xf32>
    %24 = tpu.matmul %23, %12, %cst_10 {dimension_numbers = #tpu.dot_dimension_numbers<[2], [1], [1], [2], [0, 0, 0, 1, 1, 2], [0], [0]>} : vector<2x8x8xf32>, vector<2x8x16xf32>, vector<2x8x16xf32> -> vector<2x8x16xf32>
    "tpu.trace_stop"() : () -> ()
    %25 = vector.extract_strided_slice %7 {offsets = [0, 0, 16], sizes = [2, 8, 16], strides = [1, 1, 1]} : vector<2x8x384xf32> to vector<2x8x16xf32>
    %cst_11 = arith.constant 2.500000e-01 : f32
    %26 = vector.broadcast %cst_11 : f32 to vector<2x8x16xf32>
    %27 = arith.mulf %25, %26 : vector<2x8x16xf32>
    %28 = vector.extract_strided_slice %7 {offsets = [0, 0, 144], sizes = [2, 8, 16], strides = [1, 1, 1]} : vector<2x8x384xf32> to vector<2x8x16xf32>
    %29 = vector.extract_strided_slice %7 {offsets = [0, 0, 272], sizes = [2, 8, 16], strides = [1, 1, 1]} : vector<2x8x384xf32> to vector<2x8x16xf32>
    "tpu.trace_start"() <{level = 10 : i32, message = "bqd,bkd->bqk"}> : () -> ()
    %cst_12 = arith.constant dense<0.000000e+00> : vector<2x8x8xf32>
    %30 = tpu.matmul %27, %28, %cst_12 {dimension_numbers = #tpu.dot_dimension_numbers<[2], [2], [1], [1], [0, 0, 0, 1, 1, 1], [0], [0]>} : vector<2x8x16xf32>, vector<2x8x16xf32>, vector<2x8x8xf32> -> vector<2x8x8xf32>
    "tpu.trace_stop"() : () -> ()
    %cst_13 = arith.constant dense<0xFF800000> : vector<2x8xf32>
    %31 = vector.multi_reduction <maximumf>, %30, %cst_13 [2] : vector<2x8x8xf32> to vector<2x8xf32>
    %32 = vector.shape_cast %31 : vector<2x8xf32> to vector<2x8x1xf32>
    %33 = vector.broadcast %32 : vector<2x8x1xf32> to vector<2x8x8xf32>
    %34 = arith.subf %30, %33 : vector<2x8x8xf32>
    %35 = math.exp %34 : vector<2x8x8xf32>
    %cst_14 = arith.constant dense<0.000000e+00> : vector<2x8xf32>
    %36 = vector.multi_reduction <add>, %35, %cst_14 [2] : vector<2x8x8xf32> to vector<2x8xf32>
    %37 = vector.shape_cast %36 : vector<2x8xf32> to vector<2x8x1xf32>
    %38 = tpu.reciprocal %37 {approx = true} : vector<2x8x1xf32> -> vector<2x8x1xf32>
    %39 = vector.broadcast %38 : vector<2x8x1xf32> to vector<2x8x8xf32>
    %40 = arith.mulf %35, %39 : vector<2x8x8xf32>
    "tpu.trace_start"() <{level = 10 : i32, message = "bqk,bkd->bqd"}> : () -> ()
    %cst_15 = arith.constant dense<0.000000e+00> : vector<2x8x16xf32>
    %41 = tpu.matmul %40, %29, %cst_15 {dimension_numbers = #tpu.dot_dimension_numbers<[2], [1], [1], [2], [0, 0, 0, 1, 1, 2], [0], [0]>} : vector<2x8x8xf32>, vector<2x8x16xf32>, vector<2x8x16xf32> -> vector<2x8x16xf32>
    "tpu.trace_stop"() : () -> ()
    %42 = vector.extract_strided_slice %7 {offsets = [0, 0, 32], sizes = [2, 8, 16], strides = [1, 1, 1]} : vector<2x8x384xf32> to vector<2x8x16xf32>
    %cst_16 = arith.constant 2.500000e-01 : f32
    %43 = vector.broadcast %cst_16 : f32 to vector<2x8x16xf32>
    %44 = arith.mulf %42, %43 : vector<2x8x16xf32>
    %45 = vector.extract_strided_slice %7 {offsets = [0, 0, 160], sizes = [2, 8, 16], strides = [1, 1, 1]} : vector<2x8x384xf32> to vector<2x8x16xf32>
    %46 = vector.extract_strided_slice %7 {offsets = [0, 0, 288], sizes = [2, 8, 16], strides = [1, 1, 1]} : vector<2x8x384xf32> to vector<2x8x16xf32>
    "tpu.trace_start"() <{level = 10 : i32, message = "bqd,bkd->bqk"}> : () -> ()
    %cst_17 = arith.constant dense<0.000000e+00> : vector<2x8x8xf32>
    %47 = tpu.matmul %44, %45, %cst_17 {dimension_numbers = #tpu.dot_dimension_numbers<[2], [2], [1], [1], [0, 0, 0, 1, 1, 1], [0], [0]>} : vector<2x8x16xf32>, vector<2x8x16xf32>, vector<2x8x8xf32> -> vector<2x8x8xf32>
    "tpu.trace_stop"() : () -> ()
    %cst_18 = arith.constant dense<0xFF800000> : vector<2x8xf32>
    %48 = vector.multi_reduction <maximumf>, %47, %cst_18 [2] : vector<2x8x8xf32> to vector<2x8xf32>
    %49 = vector.shape_cast %48 : vector<2x8xf32> to vector<2x8x1xf32>
    %50 = vector.broadcast %49 : vector<2x8x1xf32> to vector<2x8x8xf32>
    %51 = arith.subf %47, %50 : vector<2x8x8xf32>
    %52 = math.exp %51 : vector<2x8x8xf32>
    %cst_19 = arith.constant dense<0.000000e+00> : vector<2x8xf32>
    %53 = vector.multi_reduction <add>, %52, %cst_19 [2] : vector<2x8x8xf32> to vector<2x8xf32>
    %54 = vector.shape_cast %53 : vector<2x8xf32> to vector<2x8x1xf32>
    %55 = tpu.reciprocal %54 {approx = true} : vector<2x8x1xf32> -> vector<2x8x1xf32>
    %56 = vector.broadcast %55 : vector<2x8x1xf32> to vector<2x8x8xf32>
    %57 = arith.mulf %52, %56 : vector<2x8x8xf32>
    "tpu.trace_start"() <{level = 10 : i32, message = "bqk,bkd->bqd"}> : () -> ()
    %cst_20 = arith.constant dense<0.000000e+00> : vector<2x8x16xf32>
    %58 = tpu.matmul %57, %46, %cst_20 {dimension_numbers = #tpu.dot_dimension_numbers<[2], [1], [1], [2], [0, 0, 0, 1, 1, 2], [0], [0]>} : vector<2x8x8xf32>, vector<2x8x16xf32>, vector<2x8x16xf32> -> vector<2x8x16xf32>
    "tpu.trace_stop"() : () -> ()
    %59 = vector.extract_strided_slice %7 {offsets = [0, 0, 48], sizes = [2, 8, 16], strides = [1, 1, 1]} : vector<2x8x384xf32> to vector<2x8x16xf32>
    %cst_21 = arith.constant 2.500000e-01 : f32
    %60 = vector.broadcast %cst_21 : f32 to vector<2x8x16xf32>
    %61 = arith.mulf %59, %60 : vector<2x8x16xf32>
    %62 = vector.extract_strided_slice %7 {offsets = [0, 0, 176], sizes = [2, 8, 16], strides = [1, 1, 1]} : vector<2x8x384xf32> to vector<2x8x16xf32>
    %63 = vector.extract_strided_slice %7 {offsets = [0, 0, 304], sizes = [2, 8, 16], strides = [1, 1, 1]} : vector<2x8x384xf32> to vector<2x8x16xf32>
    "tpu.trace_start"() <{level = 10 : i32, message = "bqd,bkd->bqk"}> : () -> ()
    %cst_22 = arith.constant dense<0.000000e+00> : vector<2x8x8xf32>
    %64 = tpu.matmul %61, %62, %cst_22 {dimension_numbers = #tpu.dot_dimension_numbers<[2], [2], [1], [1], [0, 0, 0, 1, 1, 1], [0], [0]>} : vector<2x8x16xf32>, vector<2x8x16xf32>, vector<2x8x8xf32> -> vector<2x8x8xf32>
    "tpu.trace_stop"() : () -> ()
    %cst_23 = arith.constant dense<0xFF800000> : vector<2x8xf32>
    %65 = vector.multi_reduction <maximumf>, %64, %cst_23 [2] : vector<2x8x8xf32> to vector<2x8xf32>
    %66 = vector.shape_cast %65 : vector<2x8xf32> to vector<2x8x1xf32>
    %67 = vector.broadcast %66 : vector<2x8x1xf32> to vector<2x8x8xf32>
    %68 = arith.subf %64, %67 : vector<2x8x8xf32>
    %69 = math.exp %68 : vector<2x8x8xf32>
    %cst_24 = arith.constant dense<0.000000e+00> : vector<2x8xf32>
    %70 = vector.multi_reduction <add>, %69, %cst_24 [2] : vector<2x8x8xf32> to vector<2x8xf32>
    %71 = vector.shape_cast %70 : vector<2x8xf32> to vector<2x8x1xf32>
    %72 = tpu.reciprocal %71 {approx = true} : vector<2x8x1xf32> -> vector<2x8x1xf32>
    %73 = vector.broadcast %72 : vector<2x8x1xf32> to vector<2x8x8xf32>
    %74 = arith.mulf %69, %73 : vector<2x8x8xf32>
    "tpu.trace_start"() <{level = 10 : i32, message = "bqk,bkd->bqd"}> : () -> ()
    %cst_25 = arith.constant dense<0.000000e+00> : vector<2x8x16xf32>
    %75 = tpu.matmul %74, %63, %cst_25 {dimension_numbers = #tpu.dot_dimension_numbers<[2], [1], [1], [2], [0, 0, 0, 1, 1, 2], [0], [0]>} : vector<2x8x8xf32>, vector<2x8x16xf32>, vector<2x8x16xf32> -> vector<2x8x16xf32>
    "tpu.trace_stop"() : () -> ()
    %76 = vector.extract_strided_slice %7 {offsets = [0, 0, 64], sizes = [2, 8, 16], strides = [1, 1, 1]} : vector<2x8x384xf32> to vector<2x8x16xf32>
    %cst_26 = arith.constant 2.500000e-01 : f32
    %77 = vector.broadcast %cst_26 : f32 to vector<2x8x16xf32>
    %78 = arith.mulf %76, %77 : vector<2x8x16xf32>
    %79 = vector.extract_strided_slice %7 {offsets = [0, 0, 192], sizes = [2, 8, 16], strides = [1, 1, 1]} : vector<2x8x384xf32> to vector<2x8x16xf32>
    %80 = vector.extract_strided_slice %7 {offsets = [0, 0, 320], sizes = [2, 8, 16], strides = [1, 1, 1]} : vector<2x8x384xf32> to vector<2x8x16xf32>
    "tpu.trace_start"() <{level = 10 : i32, message = "bqd,bkd->bqk"}> : () -> ()
    %cst_27 = arith.constant dense<0.000000e+00> : vector<2x8x8xf32>
    %81 = tpu.matmul %78, %79, %cst_27 {dimension_numbers = #tpu.dot_dimension_numbers<[2], [2], [1], [1], [0, 0, 0, 1, 1, 1], [0], [0]>} : vector<2x8x16xf32>, vector<2x8x16xf32>, vector<2x8x8xf32> -> vector<2x8x8xf32>
    "tpu.trace_stop"() : () -> ()
    %cst_28 = arith.constant dense<0xFF800000> : vector<2x8xf32>
    %82 = vector.multi_reduction <maximumf>, %81, %cst_28 [2] : vector<2x8x8xf32> to vector<2x8xf32>
    %83 = vector.shape_cast %82 : vector<2x8xf32> to vector<2x8x1xf32>
    %84 = vector.broadcast %83 : vector<2x8x1xf32> to vector<2x8x8xf32>
    %85 = arith.subf %81, %84 : vector<2x8x8xf32>
    %86 = math.exp %85 : vector<2x8x8xf32>
    %cst_29 = arith.constant dense<0.000000e+00> : vector<2x8xf32>
    %87 = vector.multi_reduction <add>, %86, %cst_29 [2] : vector<2x8x8xf32> to vector<2x8xf32>
    %88 = vector.shape_cast %87 : vector<2x8xf32> to vector<2x8x1xf32>
    %89 = tpu.reciprocal %88 {approx = true} : vector<2x8x1xf32> -> vector<2x8x1xf32>
    %90 = vector.broadcast %89 : vector<2x8x1xf32> to vector<2x8x8xf32>
    %91 = arith.mulf %86, %90 : vector<2x8x8xf32>
    "tpu.trace_start"() <{level = 10 : i32, message = "bqk,bkd->bqd"}> : () -> ()
    %cst_30 = arith.constant dense<0.000000e+00> : vector<2x8x16xf32>
    %92 = tpu.matmul %91, %80, %cst_30 {dimension_numbers = #tpu.dot_dimension_numbers<[2], [1], [1], [2], [0, 0, 0, 1, 1, 2], [0], [0]>} : vector<2x8x8xf32>, vector<2x8x16xf32>, vector<2x8x16xf32> -> vector<2x8x16xf32>
    "tpu.trace_stop"() : () -> ()
    %93 = vector.extract_strided_slice %7 {offsets = [0, 0, 80], sizes = [2, 8, 16], strides = [1, 1, 1]} : vector<2x8x384xf32> to vector<2x8x16xf32>
    %cst_31 = arith.constant 2.500000e-01 : f32
    %94 = vector.broadcast %cst_31 : f32 to vector<2x8x16xf32>
    %95 = arith.mulf %93, %94 : vector<2x8x16xf32>
    %96 = vector.extract_strided_slice %7 {offsets = [0, 0, 208], sizes = [2, 8, 16], strides = [1, 1, 1]} : vector<2x8x384xf32> to vector<2x8x16xf32>
    %97 = vector.extract_strided_slice %7 {offsets = [0, 0, 336], sizes = [2, 8, 16], strides = [1, 1, 1]} : vector<2x8x384xf32> to vector<2x8x16xf32>
    "tpu.trace_start"() <{level = 10 : i32, message = "bqd,bkd->bqk"}> : () -> ()
    %cst_32 = arith.constant dense<0.000000e+00> : vector<2x8x8xf32>
    %98 = tpu.matmul %95, %96, %cst_32 {dimension_numbers = #tpu.dot_dimension_numbers<[2], [2], [1], [1], [0, 0, 0, 1, 1, 1], [0], [0]>} : vector<2x8x16xf32>, vector<2x8x16xf32>, vector<2x8x8xf32> -> vector<2x8x8xf32>
    "tpu.trace_stop"() : () -> ()
    %cst_33 = arith.constant dense<0xFF800000> : vector<2x8xf32>
    %99 = vector.multi_reduction <maximumf>, %98, %cst_33 [2] : vector<2x8x8xf32> to vector<2x8xf32>
    %100 = vector.shape_cast %99 : vector<2x8xf32> to vector<2x8x1xf32>
    %101 = vector.broadcast %100 : vector<2x8x1xf32> to vector<2x8x8xf32>
    %102 = arith.subf %98, %101 : vector<2x8x8xf32>
    %103 = math.exp %102 : vector<2x8x8xf32>
    %cst_34 = arith.constant dense<0.000000e+00> : vector<2x8xf32>
    %104 = vector.multi_reduction <add>, %103, %cst_34 [2] : vector<2x8x8xf32> to vector<2x8xf32>
    %105 = vector.shape_cast %104 : vector<2x8xf32> to vector<2x8x1xf32>
    %106 = tpu.reciprocal %105 {approx = true} : vector<2x8x1xf32> -> vector<2x8x1xf32>
    %107 = vector.broadcast %106 : vector<2x8x1xf32> to vector<2x8x8xf32>
    %108 = arith.mulf %103, %107 : vector<2x8x8xf32>
    "tpu.trace_start"() <{level = 10 : i32, message = "bqk,bkd->bqd"}> : () -> ()
    %cst_35 = arith.constant dense<0.000000e+00> : vector<2x8x16xf32>
    %109 = tpu.matmul %108, %97, %cst_35 {dimension_numbers = #tpu.dot_dimension_numbers<[2], [1], [1], [2], [0, 0, 0, 1, 1, 2], [0], [0]>} : vector<2x8x8xf32>, vector<2x8x16xf32>, vector<2x8x16xf32> -> vector<2x8x16xf32>
    "tpu.trace_stop"() : () -> ()
    %110 = vector.extract_strided_slice %7 {offsets = [0, 0, 96], sizes = [2, 8, 16], strides = [1, 1, 1]} : vector<2x8x384xf32> to vector<2x8x16xf32>
    %cst_36 = arith.constant 2.500000e-01 : f32
    %111 = vector.broadcast %cst_36 : f32 to vector<2x8x16xf32>
    %112 = arith.mulf %110, %111 : vector<2x8x16xf32>
    %113 = vector.extract_strided_slice %7 {offsets = [0, 0, 224], sizes = [2, 8, 16], strides = [1, 1, 1]} : vector<2x8x384xf32> to vector<2x8x16xf32>
    %114 = vector.extract_strided_slice %7 {offsets = [0, 0, 352], sizes = [2, 8, 16], strides = [1, 1, 1]} : vector<2x8x384xf32> to vector<2x8x16xf32>
    "tpu.trace_start"() <{level = 10 : i32, message = "bqd,bkd->bqk"}> : () -> ()
    %cst_37 = arith.constant dense<0.000000e+00> : vector<2x8x8xf32>
    %115 = tpu.matmul %112, %113, %cst_37 {dimension_numbers = #tpu.dot_dimension_numbers<[2], [2], [1], [1], [0, 0, 0, 1, 1, 1], [0], [0]>} : vector<2x8x16xf32>, vector<2x8x16xf32>, vector<2x8x8xf32> -> vector<2x8x8xf32>
    "tpu.trace_stop"() : () -> ()
    %cst_38 = arith.constant dense<0xFF800000> : vector<2x8xf32>
    %116 = vector.multi_reduction <maximumf>, %115, %cst_38 [2] : vector<2x8x8xf32> to vector<2x8xf32>
    %117 = vector.shape_cast %116 : vector<2x8xf32> to vector<2x8x1xf32>
    %118 = vector.broadcast %117 : vector<2x8x1xf32> to vector<2x8x8xf32>
    %119 = arith.subf %115, %118 : vector<2x8x8xf32>
    %120 = math.exp %119 : vector<2x8x8xf32>
    %cst_39 = arith.constant dense<0.000000e+00> : vector<2x8xf32>
    %121 = vector.multi_reduction <add>, %120, %cst_39 [2] : vector<2x8x8xf32> to vector<2x8xf32>
    %122 = vector.shape_cast %121 : vector<2x8xf32> to vector<2x8x1xf32>
    %123 = tpu.reciprocal %122 {approx = true} : vector<2x8x1xf32> -> vector<2x8x1xf32>
    %124 = vector.broadcast %123 : vector<2x8x1xf32> to vector<2x8x8xf32>
    %125 = arith.mulf %120, %124 : vector<2x8x8xf32>
    "tpu.trace_start"() <{level = 10 : i32, message = "bqk,bkd->bqd"}> : () -> ()
    %cst_40 = arith.constant dense<0.000000e+00> : vector<2x8x16xf32>
    %126 = tpu.matmul %125, %114, %cst_40 {dimension_numbers = #tpu.dot_dimension_numbers<[2], [1], [1], [2], [0, 0, 0, 1, 1, 2], [0], [0]>} : vector<2x8x8xf32>, vector<2x8x16xf32>, vector<2x8x16xf32> -> vector<2x8x16xf32>
    "tpu.trace_stop"() : () -> ()
    %127 = vector.extract_strided_slice %7 {offsets = [0, 0, 112], sizes = [2, 8, 16], strides = [1, 1, 1]} : vector<2x8x384xf32> to vector<2x8x16xf32>
    %cst_41 = arith.constant 2.500000e-01 : f32
    %128 = vector.broadcast %cst_41 : f32 to vector<2x8x16xf32>
    %129 = arith.mulf %127, %128 : vector<2x8x16xf32>
    %130 = vector.extract_strided_slice %7 {offsets = [0, 0, 240], sizes = [2, 8, 16], strides = [1, 1, 1]} : vector<2x8x384xf32> to vector<2x8x16xf32>
    %131 = vector.extract_strided_slice %7 {offsets = [0, 0, 368], sizes = [2, 8, 16], strides = [1, 1, 1]} : vector<2x8x384xf32> to vector<2x8x16xf32>
    "tpu.trace_start"() <{level = 10 : i32, message = "bqd,bkd->bqk"}> : () -> ()
    %cst_42 = arith.constant dense<0.000000e+00> : vector<2x8x8xf32>
    %132 = tpu.matmul %129, %130, %cst_42 {dimension_numbers = #tpu.dot_dimension_numbers<[2], [2], [1], [1], [0, 0, 0, 1, 1, 1], [0], [0]>} : vector<2x8x16xf32>, vector<2x8x16xf32>, vector<2x8x8xf32> -> vector<2x8x8xf32>
    "tpu.trace_stop"() : () -> ()
    %cst_43 = arith.constant dense<0xFF800000> : vector<2x8xf32>
    %133 = vector.multi_reduction <maximumf>, %132, %cst_43 [2] : vector<2x8x8xf32> to vector<2x8xf32>
    %134 = vector.shape_cast %133 : vector<2x8xf32> to vector<2x8x1xf32>
    %135 = vector.broadcast %134 : vector<2x8x1xf32> to vector<2x8x8xf32>
    %136 = arith.subf %132, %135 : vector<2x8x8xf32>
    %137 = math.exp %136 : vector<2x8x8xf32>
    %cst_44 = arith.constant dense<0.000000e+00> : vector<2x8xf32>
    %138 = vector.multi_reduction <add>, %137, %cst_44 [2] : vector<2x8x8xf32> to vector<2x8xf32>
    %139 = vector.shape_cast %138 : vector<2x8xf32> to vector<2x8x1xf32>
    %140 = tpu.reciprocal %139 {approx = true} : vector<2x8x1xf32> -> vector<2x8x1xf32>
    %141 = vector.broadcast %140 : vector<2x8x1xf32> to vector<2x8x8xf32>
    %142 = arith.mulf %137, %141 : vector<2x8x8xf32>
    "tpu.trace_start"() <{level = 10 : i32, message = "bqk,bkd->bqd"}> : () -> ()
    %cst_45 = arith.constant dense<0.000000e+00> : vector<2x8x16xf32>
    %143 = tpu.matmul %142, %131, %cst_45 {dimension_numbers = #tpu.dot_dimension_numbers<[2], [1], [1], [2], [0, 0, 0, 1, 1, 2], [0], [0]>} : vector<2x8x8xf32>, vector<2x8x16xf32>, vector<2x8x16xf32> -> vector<2x8x16xf32>
    "tpu.trace_stop"() : () -> ()
    %144 = tpu.concatenate %24, %41, %58, %75, %92, %109, %126, %143 in 2 : vector<2x8x16xf32>, vector<2x8x16xf32>, vector<2x8x16xf32>, vector<2x8x16xf32>, vector<2x8x16xf32>, vector<2x8x16xf32>, vector<2x8x16xf32>, vector<2x8x16xf32> -> vector<2x8x128xf32>
    %145 = vector.shape_cast %144 : vector<2x8x128xf32> to vector<16x128xf32>
    %c0_46 = arith.constant 0 : index
    %c0_47 = arith.constant 0 : index
    %146 = vector.load %arg4[%c0_46, %c0_47] : memref<128x128xf32, #tpu.memory_space<vmem>>, vector<128x128xf32>
    %cst_48 = arith.constant dense<0.000000e+00> : vector<16x128xf32>
    %147 = tpu.matmul %145, %146, %cst_48 {dimension_numbers = #tpu.dot_dimension_numbers<[1], [0], [0], [1], [0, 0, 1, 1], [], []>} : vector<16x128xf32>, vector<128x128xf32>, vector<16x128xf32> -> vector<16x128xf32>
    %c0_49 = arith.constant 0 : index
    %c0_50 = arith.constant 0 : index
    %148 = vector.load %arg5[%c0_49, %c0_50] : memref<1x128xf32, #tpu.memory_space<vmem>>, vector<1x128xf32>
    %149 = vector.broadcast %148 : vector<1x128xf32> to vector<16x128xf32>
    %150 = arith.addf %147, %149 : vector<16x128xf32>
    %151 = vector.shape_cast %150 : vector<16x128xf32> to vector<2x8x128xf32>
    %c0_51 = arith.constant 0 : index
    %c0_52 = arith.constant 0 : index
    %c0_53 = arith.constant 0 : index
    %152 = vector.load %arg6[%c0_51, %c0_52, %c0_53] : memref<2x8x128xf32, #tpu.memory_space<vmem>>, vector<2x8x128xf32>
    tpu.vector_store %arg6[%c0_51, %c0_52, %c0_53], %151 {strides = array<i32>} : memref<2x8x128xf32, #tpu.memory_space<vmem>>, vector<2x8x128xf32>,
    return
  }
  func.func @transform_0(%arg0: i32) -> (i32, i32, i32) {
    %c0_i32 = arith.constant 0 : i32
    %c0_i32_0 = arith.constant 0 : i32
    %c0_i32_1 = arith.constant 0 : i32
    return %arg0, %c0_i32, %c0_i32_0 : i32, i32, i32
  }
  func.func @transform_1(%arg0: i32) -> (i32, i32) {
    %c0_i32 = arith.constant 0 : i32
    %c0_i32_0 = arith.constant 0 : i32
    %c0_i32_1 = arith.constant 0 : i32
    return %c0_i32, %c0_i32_0 : i32, i32
  }
  func.func @transform_2(%arg0: i32) -> (i32, i32) {
    %c0_i32 = arith.constant 0 : i32
    %c0_i32_0 = arith.constant 0 : i32
    %c0_i32_1 = arith.constant 0 : i32
    return %c0_i32, %c0_i32_0 : i32, i32
  }
  func.func @transform_3(%arg0: i32) -> (i32, i32) {
    %c0_i32 = arith.constant 0 : i32
    %c0_i32_0 = arith.constant 0 : i32
    %c0_i32_1 = arith.constant 0 : i32
    return %c0_i32, %c0_i32_0 : i32, i32
  }
  func.func @transform_4(%arg0: i32) -> (i32, i32) {
    %c0_i32 = arith.constant 0 : i32
    %c0_i32_0 = arith.constant 0 : i32
    %c0_i32_1 = arith.constant 0 : i32
    return %c0_i32, %c0_i32_0 : i32, i32
  }
  func.func @transform_5(%arg0: i32) -> (i32, i32, i32) {
    %c0_i32 = arith.constant 0 : i32
    %c0_i32_0 = arith.constant 0 : i32
    %c0_i32_1 = arith.constant 0 : i32
    return %arg0, %c0_i32, %c0_i32_0 : i32, i32, i32
  }
}

</mosaic_0001>

<llo_original>
// kernel: tpu_custom_call.1
$region0: #{tpu_custom_call.1}
  #allocation0 [shape = 'u32[]', space=smem, size = 0x4, offset = 0x4, fixed_abs, tag = 'smem constant byte address 0x4 - core index']
  #allocation1 [shape = 'u32[144,128]{1,0:T(1,128)}', space=vmem, size = 0x12000, scoped, tag = 'internal scratch']
  %s0 = inlined_call_operand.hbm [shape: f32[2,8,128], index: 0, kind: input, shape index: {}]
  %s1 = inlined_call_operand.hbm [shape: f32[128,384], index: 1, kind: input, shape index: {}]
  %s2 = inlined_call_operand.vmem [shape: f32[1,384], index: 2, kind: input, shape index: {}]
  %s3 = inlined_call_operand.hbm [shape: f32[128,128], index: 3, kind: input, shape index: {}]
  %s4 = inlined_call_operand.vmem [shape: f32[1,128], index: 4, kind: input, shape index: {}]
  %s5 = inlined_call_operand.hbm [shape: f32[2,8,128], index: 5, kind: output, shape index: {}]
  %s6 = sld [smem:[#allocation0]]
  $region42: #{tpu_custom_call.1} parent=0
    _
  %s8 = ssub.s32 1, %s6
  %s9 = scalar_select 0, %s8, %s6
  $region1: #{tpu_custom_call.1} parent=0
    #allocation2 [shape = 'u8[8192]{0}', space=vmem, size = 0x2000, scoped, tag = 'input window, operand 0, single buffered']
    #allocation3 [shape = 's32[1]{0}', space=sflag, size = 0x4, scoped, tag = 'scoped memory for tpu_custom_call.1']
    #allocation4 [shape = 's32[1]{0}', space=sflag, size = 0x4, scoped, tag = 'scoped memory for tpu_custom_call.1']
    #allocation5 [shape = 'u8[196608]{0}', space=vmem, size = 0x30000, scoped, tag = 'input window, operand 1, single buffered']
    #allocation6 [shape = 's32[1]{0}', space=sflag, size = 0x4, scoped, tag = 'scoped memory for tpu_custom_call.1']
    #allocation7 [shape = 'u8[65536]{0}', space=vmem, size = 0x10000, scoped, tag = 'input window, operand 3, single buffered']
    #allocation8 [shape = 'u8[8192]{0}', space=vmem, size = 0x2000, scoped, tag = 'output window, operand 0, single buffered']
    %10 = vsyncpa [#allocation3], 0
    %11 = vsyncpa [#allocation6], 0
    %12 = vsyncpa [#allocation4], 0
    // Predicated region
    $region2: #{tpu_custom_call.1} parent=1 // pred_check
      _
    $region3: #{tpu_custom_call.1} parent=1 // pred_check_branch
      %14 = sbr.rel (0) target = $region5
    $region4: #{tpu_custom_call.1} parent=1 // pred_region
      %s16 = ssub.s32 256, 256
      %17 = vsyncadd [#allocation3], %s16
      %s18 = sshll.u32 [#allocation2], 4
      %s19 = int_to_ptr.vmem [resolvable:$true] %s18
      %24 = dma.hbm_to_vmem [thread:$0]  %s0, 256, %s19, [#allocation3], 128, 128, 8
    $region5: #{tpu_custom_call.1} parent=1 // pred_fallthru
      _
    // Predicated region
    $region6: #{tpu_custom_call.1} parent=1 // pred_check
      _
    $region7: #{tpu_custom_call.1} parent=1 // pred_check_branch
      %26 = sbr.rel (0) target = $region9
    $region8: #{tpu_custom_call.1} parent=1 // pred_region
      %s28 = ssub.s32 6144, 6144
      %29 = vsyncadd [#allocation6], %s28
      %s30 = sshll.u32 [#allocation5], 4
      %s31 = int_to_ptr.vmem [resolvable:$true] %s30
      %36 = dma.hbm_to_vmem [thread:$0]  %s1, 6144, %s31, [#allocation6], 384, 384, 24
    $region9: #{tpu_custom_call.1} parent=1 // pred_fallthru
      _
    // Predicated region
    $region10: #{tpu_custom_call.1} parent=1 // pred_check
      _
    $region11: #{tpu_custom_call.1} parent=1 // pred_check_branch
      %38 = sbr.rel (0) target = $region13
    $region12: #{tpu_custom_call.1} parent=1 // pred_region
      _
    $region13: #{tpu_custom_call.1} parent=1 // pred_fallthru
      _
    // Predicated region
    $region14: #{tpu_custom_call.1} parent=1 // pred_check
      _
    $region15: #{tpu_custom_call.1} parent=1 // pred_check_branch
      %40 = sbr.rel (0) target = $region17
    $region16: #{tpu_custom_call.1} parent=1 // pred_region
      %s42 = ssub.s32 2048, 2048
      %43 = vsyncadd [#allocation6], %s42
      %s44 = sshll.u32 [#allocation7], 4
      %s45 = int_to_ptr.vmem [resolvable:$true] %s44
      %50 = dma.hbm_to_vmem [thread:$0]  %s3, 2048, %s45, [#allocation6], 128, 128, 8
    $region17: #{tpu_custom_call.1} parent=1 // pred_fallthru
      _
    // Predicated region
    $region18: #{tpu_custom_call.1} parent=1 // pred_check
      _
    $region19: #{tpu_custom_call.1} parent=1 // pred_check_branch
      %52 = sbr.rel (0) target = $region21
    $region20: #{tpu_custom_call.1} parent=1 // pred_region
      _
    $region21: #{tpu_custom_call.1} parent=1 // pred_fallthru
      _
    // Predicated region
    $region22: #{tpu_custom_call.1} parent=1 // pred_check
      _
    $region23: #{tpu_custom_call.1} parent=1 // pred_check_branch
      %54 = sbr.rel (0) target = $region25
    $region24: #{tpu_custom_call.1} parent=1 // pred_region
      %55 = dma.done [#allocation3], 256
    $region25: #{tpu_custom_call.1} parent=1 // pred_fallthru
      _
    // Predicated region
    $region26: #{tpu_custom_call.1} parent=1 // pred_check
      _
    $region27: #{tpu_custom_call.1} parent=1 // pred_check_branch
      %57 = sbr.rel (0) target = $region29
    $region28: #{tpu_custom_call.1} parent=1 // pred_region
      %58 = dma.done [#allocation6], 6144
    $region29: #{tpu_custom_call.1} parent=1 // pred_fallthru
      _
    // Predicated region
    $region30: #{tpu_custom_call.1} parent=1 // pred_check
      _
    $region31: #{tpu_custom_call.1} parent=1 // pred_check_branch
      %60 = sbr.rel (0) target = $region33
    $region32: #{tpu_custom_call.1} parent=1 // pred_region
      %61 = dma.done [#allocation6], 2048
    $region33: #{tpu_custom_call.1} parent=1 // pred_fallthru
      _
    %v62 = vld [vmem:[#allocation2] sm:$0xff]
    %v63 = vld [vmem:[#allocation2 + $0x8] sm:$0xff]
    %v64 = vld [vmem:[#allocation5] sm:$0xff]
    %v65 = vld [vmem:[#allocation5 + $0x8] sm:$0xff]
    %v66 = vld [vmem:[#allocation5 + $0x10] sm:$0xff]
    %v67 = vld [vmem:[#allocation5 + $0x18] sm:$0xff]
    %v68 = vld [vmem:[#allocation5 + $0x20] sm:$0xff]
    %v69 = vld [vmem:[#allocation5 + $0x28] sm:$0xff]
    %v70 = vld [vmem:[#allocation5 + $0x30] sm:$0xff]
    %v71 = vld [vmem:[#allocation5 + $0x38] sm:$0xff]
    %v72 = vld [vmem:[#allocation5 + $0x40] sm:$0xff]
    %v73 = vld [vmem:[#allocation5 + $0x48] sm:$0xff]
    %v74 = vld [vmem:[#allocation5 + $0x50] sm:$0xff]
    %v75 = vld [vmem:[#allocation5 + $0x58] sm:$0xff]
    %v76 = vld [vmem:[#allocation5 + $0x60] sm:$0xff]
    %v77 = vld [vmem:[#allocation5 + $0x68] sm:$0xff]
    %v78 = vld [vmem:[#allocation5 + $0x70] sm:$0xff]
    %v79 = vld [vmem:[#allocation5 + $0x78] sm:$0xff]
    %v80 = vld [vmem:[#allocation5 + $0x80] sm:$0xff]
    %v81 = vld [vmem:[#allocation5 + $0x88] sm:$0xff]
    %v82 = vld [vmem:[#allocation5 + $0x90] sm:$0xff]
    %v83 = vld [vmem:[#allocation5 + $0x98] sm:$0xff]
    %v84 = vld [vmem:[#allocation5 + $0xa0] sm:$0xff]
    %v85 = vld [vmem:[#allocation5 + $0xa8] sm:$0xff]
    %v86 = vld [vmem:[#allocation5 + $0xb0] sm:$0xff]
    %v87 = vld [vmem:[#allocation5 + $0xb8] sm:$0xff]
    %v88 = vld [vmem:[#allocation5 + $0xc0] sm:$0xff]
    %v89 = vld [vmem:[#allocation5 + $0xc8] sm:$0xff]
    %v90 = vld [vmem:[#allocation5 + $0xd0] sm:$0xff]
    %v91 = vld [vmem:[#allocation5 + $0xd8] sm:$0xff]
    %v92 = vld [vmem:[#allocation5 + $0xe0] sm:$0xff]
    %v93 = vld [vmem:[#allocation5 + $0xe8] sm:$0xff]
    %v94 = vld [vmem:[#allocation5 + $0xf0] sm:$0xff]
    %v95 = vld [vmem:[#allocation5 + $0xf8] sm:$0xff]
    %v96 = vld [vmem:[#allocation5 + $0x100] sm:$0xff]
    %v97 = vld [vmem:[#allocation5 + $0x108] sm:$0xff]
    %v98 = vld [vmem:[#allocation5 + $0x110] sm:$0xff]
    %v99 = vld [vmem:[#allocation5 + $0x118] sm:$0xff]
    %v100 = vld [vmem:[#allocation5 + $0x120] sm:$0xff]
    %v101 = vld [vmem:[#allocation5 + $0x128] sm:$0xff]
    %v102 = vld [vmem:[#allocation5 + $0x130] sm:$0xff]
    %v103 = vld [vmem:[#allocation5 + $0x138] sm:$0xff]
    %v104 = vld [vmem:[#allocation5 + $0x140] sm:$0xff]
    %v105 = vld [vmem:[#allocation5 + $0x148] sm:$0xff]
    %v106 = vld [vmem:[#allocation5 + $0x150] sm:$0xff]
    %v107 = vld [vmem:[#allocation5 + $0x158] sm:$0xff]
    %v108 = vld [vmem:[#allocation5 + $0x160] sm:$0xff]
    %v109 = vld [vmem:[#allocation5 + $0x168] sm:$0xff]
    %v110 = vld [vmem:[#allocation5 + $0x170] sm:$0xff]
    %v111 = vld [vmem:[#allocation5 + $0x178] sm:$0xff]
    %v112 = vld [vmem:[%s2] sm:$0x7]
    %v114 = vlaneseq
    %v115 = vshrl.u32 %v114, 7
    %v116 = vsub.s32 0, %v115
    %v117 = vrot.slane %v112, %v116
    %v118 = vlaneseq
    %v119 = vshrl.u32 %v118, 7
    %v120 = vsub.s32 1, %v119
    %v121 = vrot.slane %v112, %v120
    %v122 = vlaneseq
    %v123 = vshrl.u32 %v122, 7
    %v124 = vsub.s32 2, %v123
    %v125 = vrot.slane %v112, %v124
    %129 = vmatprep.subr.mxu0 %v65
    %130 = vmatpush1.msra.mxu0 %v64
    %131 = vmatprep.subr.mxu0 %v68
    %132 = vmatpush1.msra.mxu0 %v67
    %133 = vmatprep.subr.mxu0 %v71
    %134 = vmatpush1.msra.mxu0 %v70
    %135 = vmatprep.subr.mxu0 %v74
    %136 = vmatpush1.msra.mxu0 %v73
    %137 = vmatprep.subr.mxu0 %v77
    %138 = vmatpush1.msra.mxu0 %v76
    %139 = vmatprep.subr.mxu0 %v80
    %140 = vmatpush1.msra.mxu0 %v79
    %141 = vmatprep.subr.mxu0 %v83
    %142 = vmatpush1.msra.mxu0 %v82
    %143 = vmatprep.subr.mxu0 %v86
    %144 = vmatpush1.msra.mxu0 %v85
    %145 = vmatprep.subr.mxu0 %v89
    %146 = vmatpush1.msra.mxu0 %v88
    %147 = vmatprep.subr.mxu0 %v92
    %148 = vmatpush1.msra.mxu0 %v91
    %149 = vmatprep.subr.mxu0 %v95
    %150 = vmatpush1.msra.mxu0 %v94
    %151 = vmatprep.subr.mxu0 %v98
    %152 = vmatpush1.msra.mxu0 %v97
    %153 = vmatprep.subr.mxu0 %v101
    %154 = vmatpush1.msra.mxu0 %v100
    %155 = vmatprep.subr.mxu0 %v104
    %156 = vmatpush1.msra.mxu0 %v103
    %157 = vmatprep.subr.mxu0 %v107
    %158 = vmatpush1.msra.mxu0 %v106
    %159 = vmatprep.subr.mxu0 %v110
    %160 = vmatpush1.msra.mxu0 %v109
    %161 = vmatprep.subr.mxu0 0.0
    %162 = vmatpush1.msra.mxu0 0.0
    %163 = vmatprep.subr.mxu0 0.0
    %164 = vmatpush1.msra.mxu0 0.0
    %165 = vmatprep.subr.mxu0 0.0
    %166 = vmatpush1.msra.mxu0 0.0
    %167 = vmatprep.subr.mxu0 0.0
    %168 = vmatpush1.msra.mxu0 0.0
    %169 = vmatprep.subr.mxu0 0.0
    %170 = vmatpush1.msra.mxu0 0.0
    %171 = vmatprep.subr.mxu0 0.0
    %172 = vmatpush1.msra.mxu0 0.0
    %173 = vmatprep.subr.mxu0 0.0
    %174 = vmatpush1.msra.mxu0 0.0
    %175 = vmatprep.subr.mxu0 0.0
    %176 = vmatpush1.msra.mxu0 0.0
    %177 = vmatprep.subr.mxu0 0.0
    %178 = vmatpush1.msra.mxu0 0.0
    %179 = vmatprep.subr.mxu0 0.0
    %180 = vmatpush1.msra.mxu0 0.0
    %181 = vmatprep.subr.mxu0 0.0
    %182 = vmatpush1.msra.mxu0 0.0
    %183 = vmatprep.subr.mxu0 0.0
    %184 = vmatpush1.msra.mxu0 0.0
    %185 = vmatprep.subr.mxu0 0.0
    %186 = vmatpush1.msra.mxu0 0.0
    %187 = vmatprep.subr.mxu0 0.0
    %188 = vmatpush1.msra.mxu0 0.0
    %189 = vmatprep.subr.mxu0 0.0
    %190 = vmatpush1.msra.mxu0 0.0
    %191 = vmatprep.subr.mxu0 0.0
    %192 = vmatpush1.msra.mxu0 0.0
    %193 = vmatprep.mubr.f32.mxu0 0.0
    %194 = vmatmul.mubr.f32.gmra.mrb[0].mxu0 %v62
    %v195 = vpop.f32.mrb[0].mxu0
    %v196 = vadd.f32 %v117, %v195
    %v197 = vpop.f32.mrb[0].mxu0
    %v198 = vadd.f32 %v121, %v197
    %199 = vmatprep.mubr.f32.mxu0 0.0
    %200 = vmatmul.mubr.f32.gmra.mrb[0].mxu0 %v63
    %v201 = vpop.f32.mrb[0].mxu0
    %v202 = vadd.f32 %v117, %v201
    %v203 = vpop.f32.mrb[0].mxu0
    %v204 = vadd.f32 %v121, %v203
    %205 = vdwg.mxu0
    %206 = vmatprep.subr.mxu0 0.0
    %207 = vmatpush1.msra.mxu0 %v66
    %208 = vmatprep.subr.mxu0 0.0
    %209 = vmatpush1.msra.mxu0 %v69
    %210 = vmatprep.subr.mxu0 0.0
    %211 = vmatpush1.msra.mxu0 %v72
    %212 = vmatprep.subr.mxu0 0.0
    %213 = vmatpush1.msra.mxu0 %v75
    %214 = vmatprep.subr.mxu0 0.0
    %215 = vmatpush1.msra.mxu0 %v78
    %216 = vmatprep.subr.mxu0 0.0
    %217 = vmatpush1.msra.mxu0 %v81
    %218 = vmatprep.subr.mxu0 0.0
    %219 = vmatpush1.msra.mxu0 %v84
    %220 = vmatprep.subr.mxu0 0.0
    %221 = vmatpush1.msra.mxu0 %v87
    %222 = vmatprep.subr.mxu0 0.0
    %223 = vmatpush1.msra.mxu0 %v90
    %224 = vmatprep.subr.mxu0 0.0
    %225 = vmatpush1.msra.mxu0 %v93
    %226 = vmatprep.subr.mxu0 0.0
    %227 = vmatpush1.msra.mxu0 %v96
    %228 = vmatprep.subr.mxu0 0.0
    %229 = vmatpush1.msra.mxu0 %v99
    %230 = vmatprep.subr.mxu0 0.0
    %231 = vmatpush1.msra.mxu0 %v102
    %232 = vmatprep.subr.mxu0 0.0
    %233 = vmatpush1.msra.mxu0 %v105
    %234 = vmatprep.subr.mxu0 0.0
    %235 = vmatpush1.msra.mxu0 %v108
    %236 = vmatprep.subr.mxu0 0.0
    %237 = vmatpush1.msra.mxu0 %v111
    %238 = vmatprep.subr.mxu0 0.0
    %239 = vmatpush1.msra.mxu0 0.0
    %240 = vmatprep.subr.mxu0 0.0
    %241 = vmatpush1.msra.mxu0 0.0
    %242 = vmatprep.subr.mxu0 0.0
    %243 = vmatpush1.msra.mxu0 0.0
    %244 = vmatprep.subr.mxu0 0.0
    %245 = vmatpush1.msra.mxu0 0.0
    %246 = vmatprep.subr.mxu0 0.0
    %247 = vmatpush1.msra.mxu0 0.0
    %248 = vmatprep.subr.mxu0 0.0
    %249 = vmatpush1.msra.mxu0 0.0
    %250 = vmatprep.subr.mxu0 0.0
    %251 = vmatpush1.msra.mxu0 0.0
    %252 = vmatprep.subr.mxu0 0.0
    %253 = vmatpush1.msra.mxu0 0.0
    %254 = vmatprep.subr.mxu0 0.0
    %255 = vmatpush1.msra.mxu0 0.0
    %256 = vmatprep.subr.mxu0 0.0
    %257 = vmatpush1.msra.mxu0 0.0
    %258 = vmatprep.subr.mxu0 0.0
    %259 = vmatpush1.msra.mxu0 0.0
    %260 = vmatprep.subr.mxu0 0.0
    %261 = vmatpush1.msra.mxu0 0.0
    %262 = vmatprep.subr.mxu0 0.0
    %263 = vmatpush1.msra.mxu0 0.0
    %264 = vmatprep.subr.mxu0 0.0
    %265 = vmatpush1.msra.mxu0 0.0
    %266 = vmatprep.subr.mxu0 0.0
    %267 = vmatpush1.msra.mxu0 0.0
    %268 = vmatprep.subr.mxu0 0.0
    %269 = vmatpush1.msra.mxu0 0.0
    %270 = vmatprep.mubr.f32.mxu0 0.0
    %271 = vmatmul.mubr.f32.gmra.mrb[0].mxu0 %v62
    %v272 = vpop.f32.mrb[0].mxu0
    %v273 = vadd.f32 %v125, %v272
    %v274 = vpop.f32.mrb[0].mxu0
    %275 = vmatprep.mubr.f32.mxu0 0.0
    %276 = vmatmul.mubr.f32.gmra.mrb[0].mxu0 %v63
    %v277 = vpop.f32.mrb[0].mxu0
    %v278 = vadd.f32 %v125, %v277
    %v279 = vpop.f32.mrb[0].mxu0
    %280 = vdwg.mxu0
    %v281 = vmul.f32 %v196, 0.25
    %v282 = vmul.f32 %v202, 0.25
    %vm283 = vcmask 130048
    %v285 = vsel %vm283, %v281, 0
    %v288 = vsel %vm283, %v198, 0
    %290 = vmatprep.subr.mxu0 0.0
    %291 = vmatpush1.xpose.msra.mxu0 %v288
    %292 = vmatprep.subr.mxu0 0.0
    %293 = vmatpush1.xpose.msra.mxu0 0.0
    %294 = vmatprep.subr.mxu0 0.0
    %295 = vmatpush1.xpose.msra.mxu0 0.0
    %296 = vmatprep.subr.mxu0 0.0
    %297 = vmatpush1.xpose.msra.mxu0 0.0
    %298 = vmatprep.subr.mxu0 0.0
    %299 = vmatpush1.xpose.msra.mxu0 0.0
    %300 = vmatprep.subr.mxu0 0.0
    %301 = vmatpush1.xpose.msra.mxu0 0.0
    %302 = vmatprep.subr.mxu0 0.0
    %303 = vmatpush1.xpose.msra.mxu0 0.0
    %304 = vmatprep.subr.mxu0 0.0
    %305 = vmatpush1.xpose.msra.mxu0 0.0
    %306 = vmatprep.subr.mxu0 0.0
    %307 = vmatpush1.xpose.msra.mxu0 0.0
    %308 = vmatprep.subr.mxu0 0.0
    %309 = vmatpush1.xpose.msra.mxu0 0.0
    %310 = vmatprep.subr.mxu0 0.0
    %311 = vmatpush1.xpose.msra.mxu0 0.0
    %312 = vmatprep.subr.mxu0 0.0
    %313 = vmatpush1.xpose.msra.mxu0 0.0
    %314 = vmatprep.subr.mxu0 0.0
    %315 = vmatpush1.xpose.msra.mxu0 0.0
    %316 = vmatprep.subr.mxu0 0.0
    %317 = vmatpush1.xpose.msra.mxu0 0.0
    %318 = vmatprep.subr.mxu0 0.0
    %319 = vmatpush1.xpose.msra.mxu0 0.0
    %320 = vmatprep.subr.mxu0 0.0
    %321 = vmatpush1.xpose.msra.mxu0 0.0
    %322 = vmatprep.subr.mxu0 0.0
    %323 = vmatpush1.xpose.msra.mxu0 0.0
    %324 = vmatprep.subr.mxu0 0.0
    %325 = vmatpush1.xpose.msra.mxu0 0.0
    %326 = vmatprep.subr.mxu0 0.0
    %327 = vmatpush1.xpose.msra.mxu0 0.0
    %328 = vmatprep.subr.mxu0 0.0
    %329 = vmatpush1.xpose.msra.mxu0 0.0
    %330 = vmatprep.subr.mxu0 0.0
    %331 = vmatpush1.xpose.msra.mxu0 0.0
    %332 = vmatprep.subr.mxu0 0.0
    %333 = vmatpush1.xpose.msra.mxu0 0.0
    %334 = vmatprep.subr.mxu0 0.0
    %335 = vmatpush1.xpose.msra.mxu0 0.0
    %336 = vmatprep.subr.mxu0 0.0
    %337 = vmatpush1.xpose.msra.mxu0 0.0
    %338 = vmatprep.subr.mxu0 0.0
    %339 = vmatpush1.xpose.msra.mxu0 0.0
    %340 = vmatprep.subr.mxu0 0.0
    %341 = vmatpush1.xpose.msra.mxu0 0.0
    %342 = vmatprep.subr.mxu0 0.0
    %343 = vmatpush1.xpose.msra.mxu0 0.0
    %344 = vmatprep.subr.mxu0 0.0
    %345 = vmatpush1.xpose.msra.mxu0 0.0
    %346 = vmatprep.subr.mxu0 0.0
    %347 = vmatpush1.xpose.msra.mxu0 0.0
    %348 = vmatprep.subr.mxu0 0.0
    %349 = vmatpush1.xpose.msra.mxu0 0.0
    %350 = vmatprep.subr.mxu0 0.0
    %351 = vmatpush1.xpose.msra.mxu0 0.0
    %352 = vmatprep.subr.mxu0 0.0
    %353 = vmatpush1.xpose.msra.mxu0 0.0
    %354 = vmatprep.mubr.f32.mxu0 0.0
    %355 = vmatmul.mubr.f32.gmra.mrb[0].mxu0 %v285
    %v356 = vpop.f32.mrb[0].mxu0
    %v357 = vadd.f32 0.0, %v356
    %v358 = vpop.f32.mrb[0].mxu0
    %359 = vdwg.mxu0
    %v361 = vsel %vm283, %v282, 0
    %v364 = vsel %vm283, %v204, 0
    %366 = vmatprep.subr.mxu0 0.0
    %367 = vmatpush1.xpose.msra.mxu0 %v364
    %368 = vmatprep.subr.mxu0 0.0
    %369 = vmatpush1.xpose.msra.mxu0 0.0
    %370 = vmatprep.subr.mxu0 0.0
    %371 = vmatpush1.xpose.msra.mxu0 0.0
    %372 = vmatprep.subr.mxu0 0.0
    %373 = vmatpush1.xpose.msra.mxu0 0.0
    %374 = vmatprep.subr.mxu0 0.0
    %375 = vmatpush1.xpose.msra.mxu0 0.0
    %376 = vmatprep.subr.mxu0 0.0
    %377 = vmatpush1.xpose.msra.mxu0 0.0
    %378 = vmatprep.subr.mxu0 0.0
    %379 = vmatpush1.xpose.msra.mxu0 0.0
    %380 = vmatprep.subr.mxu0 0.0
    %381 = vmatpush1.xpose.msra.mxu0 0.0
    %382 = vmatprep.subr.mxu0 0.0
    %383 = vmatpush1.xpose.msra.mxu0 0.0
    %384 = vmatprep.subr.mxu0 0.0
    %385 = vmatpush1.xpose.msra.mxu0 0.0
    %386 = vmatprep.subr.mxu0 0.0
    %387 = vmatpush1.xpose.msra.mxu0 0.0
    %388 = vmatprep.subr.mxu0 0.0
    %389 = vmatpush1.xpose.msra.mxu0 0.0
    %390 = vmatprep.subr.mxu0 0.0
    %391 = vmatpush1.xpose.msra.mxu0 0.0
    %392 = vmatprep.subr.mxu0 0.0
    %393 = vmatpush1.xpose.msra.mxu0 0.0
    %394 = vmatprep.subr.mxu0 0.0
    %395 = vmatpush1.xpose.msra.mxu0 0.0
    %396 = vmatprep.subr.mxu0 0.0
    %397 = vmatpush1.xpose.msra.mxu0 0.0
    %398 = vmatprep.subr.mxu0 0.0
    %399 = vmatpush1.xpose.msra.mxu0 0.0
    %400 = vmatprep.subr.mxu0 0.0
    %401 = vmatpush1.xpose.msra.mxu0 0.0
    %402 = vmatprep.subr.mxu0 0.0
    %403 = vmatpush1.xpose.msra.mxu0 0.0
    %404 = vmatprep.subr.mxu0 0.0
    %405 = vmatpush1.xpose.msra.mxu0 0.0
    %406 = vmatprep.subr.mxu0 0.0
    %407 = vmatpush1.xpose.msra.mxu0 0.0
    %408 = vmatprep.subr.mxu0 0.0
    %409 = vmatpush1.xpose.msra.mxu0 0.0
    %410 = vmatprep.subr.mxu0 0.0
    %411 = vmatpush1.xpose.msra.mxu0 0.0
    %412 = vmatprep.subr.mxu0 0.0
    %413 = vmatpush1.xpose.msra.mxu0 0.0
    %414 = vmatprep.subr.mxu0 0.0
    %415 = vmatpush1.xpose.msra.mxu0 0.0
    %416 = vmatprep.subr.mxu0 0.0
    %417 = vmatpush1.xpose.msra.mxu0 0.0
    %418 = vmatprep.subr.mxu0 0.0
    %419 = vmatpush1.xpose.msra.mxu0 0.0
    %420 = vmatprep.subr.mxu0 0.0
    %421 = vmatpush1.xpose.msra.mxu0 0.0
    %422 = vmatprep.subr.mxu0 0.0
    %423 = vmatpush1.xpose.msra.mxu0 0.0
    %424 = vmatprep.subr.mxu0 0.0
    %425 = vmatpush1.xpose.msra.mxu0 0.0
    %426 = vmatprep.subr.mxu0 0.0
    %427 = vmatpush1.xpose.msra.mxu0 0.0
    %428 = vmatprep.subr.mxu0 0.0
    %429 = vmatpush1.xpose.msra.mxu0 0.0
    %430 = vmatprep.mubr.f32.mxu0 0.0
    %431 = vmatmul.mubr.f32.gmra.mrb[0].mxu0 %v361
    %v432 = vpop.f32.mrb[0].mxu0
    %v433 = vadd.f32 0.0, %v432
    %v434 = vpop.f32.mrb[0].mxu0
    %435 = vdwg.mxu0
    %vm436 = vcmask 64512
    %v437 = vsel %vm436, %v357, -inf
    %438 = vmax.xlane.f32.xlu0 %v437
    %v439 = vpop.xlane.xlu0 %438
    %v440 = vsel %vm436, %v433, -inf
    %441 = vmax.xlane.f32.xlu0 %v440
    %v442 = vpop.xlane.xlu0 %441
    %v443 = vsub.f32 %v357, %v439
    %v444 = vsub.f32 %v433, %v442
    %v445 = vmul.f32 %v443, 1.442695
    %v446 = vpow.pop %v445
    %v447 = vmul.f32 %v444, 1.442695
    %v448 = vpow.pop %v447
    %v449 = vsel %vm436, %v446, 0.0
    %450 = vadd.xlane.f32.xlu0 %v449
    %v451 = vpop.xlane.xlu0 %450
    %v452 = vsel %vm436, %v448, 0.0
    %453 = vadd.xlane.f32.xlu0 %v452
    %v454 = vpop.xlane.xlu0 %453
    %v455 = vrcp.pop %v451
    %v456 = vrcp.pop %v454
    %v457 = vmul.f32 %v446, %v455
    %v458 = vmul.f32 %v448, %v456
    %v460 = vsel %vm436, %v457, 0
    %462 = vmatprep.subr.mxu0 0.0
    %463 = vmatpush1.msra.mxu0 %v273
    %464 = vmatprep.subr.mxu0 0.0
    %465 = vmatpush1.msra.mxu0 0.0
    %466 = vmatprep.subr.mxu0 0.0
    %467 = vmatpush1.msra.mxu0 0.0
    %468 = vmatprep.subr.mxu0 0.0
    %469 = vmatpush1.msra.mxu0 0.0
    %470 = vmatprep.subr.mxu0 0.0
    %471 = vmatpush1.msra.mxu0 0.0
    %472 = vmatprep.subr.mxu0 0.0
    %473 = vmatpush1.msra.mxu0 0.0
    %474 = vmatprep.subr.mxu0 0.0
    %475 = vmatpush1.msra.mxu0 0.0
    %476 = vmatprep.subr.mxu0 0.0
    %477 = vmatpush1.msra.mxu0 0.0
    %478 = vmatprep.subr.mxu0 0.0
    %479 = vmatpush1.msra.mxu0 0.0
    %480 = vmatprep.subr.mxu0 0.0
    %481 = vmatpush1.msra.mxu0 0.0
    %482 = vmatprep.subr.mxu0 0.0
    %483 = vmatpush1.msra.mxu0 0.0
    %484 = vmatprep.subr.mxu0 0.0
    %485 = vmatpush1.msra.mxu0 0.0
    %486 = vmatprep.subr.mxu0 0.0
    %487 = vmatpush1.msra.mxu0 0.0
    %488 = vmatprep.subr.mxu0 0.0
    %489 = vmatpush1.msra.mxu0 0.0
    %490 = vmatprep.subr.mxu0 0.0
    %491 = vmatpush1.msra.mxu0 0.0
    %492 = vmatprep.subr.mxu0 0.0
    %493 = vmatpush1.msra.mxu0 0.0
    %494 = vmatprep.subr.mxu0 0.0
    %495 = vmatpush1.msra.mxu0 0.0
    %496 = vmatprep.subr.mxu0 0.0
    %497 = vmatpush1.msra.mxu0 0.0
    %498 = vmatprep.subr.mxu0 0.0
    %499 = vmatpush1.msra.mxu0 0.0
    %500 = vmatprep.subr.mxu0 0.0
    %501 = vmatpush1.msra.mxu0 0.0
    %502 = vmatprep.subr.mxu0 0.0
    %503 = vmatpush1.msra.mxu0 0.0
    %504 = vmatprep.subr.mxu0 0.0
    %505 = vmatpush1.msra.mxu0 0.0
    %506 = vmatprep.subr.mxu0 0.0
    %507 = vmatpush1.msra.mxu0 0.0
    %508 = vmatprep.subr.mxu0 0.0
    %509 = vmatpush1.msra.mxu0 0.0
    %510 = vmatprep.subr.mxu0 0.0
    %511 = vmatpush1.msra.mxu0 0.0
    %512 = vmatprep.subr.mxu0 0.0
    %513 = vmatpush1.msra.mxu0 0.0
    %514 = vmatprep.subr.mxu0 0.0
    %515 = vmatpush1.msra.mxu0 0.0
    %516 = vmatprep.subr.mxu0 0.0
    %517 = vmatpush1.msra.mxu0 0.0
    %518 = vmatprep.subr.mxu0 0.0
    %519 = vmatpush1.msra.mxu0 0.0
    %520 = vmatprep.subr.mxu0 0.0
    %521 = vmatpush1.msra.mxu0 0.0
    %522 = vmatprep.subr.mxu0 0.0
    %523 = vmatpush1.msra.mxu0 0.0
    %524 = vmatprep.subr.mxu0 0.0
    %525 = vmatpush1.msra.mxu0 0.0
    %526 = vmatprep.mubr.f32.mxu0 0.0
    %527 = vmatmul.mubr.f32.gmra.mrb[0].mxu0 %v460
    %v528 = vpop.f32.mrb[0].mxu0
    %v529 = vadd.f32 0.0, %v528
    %v530 = vpop.f32.mrb[0].mxu0
    %531 = vdwg.mxu0
    %v533 = vsel %vm436, %v458, 0
    %535 = vmatprep.subr.mxu0 0.0
    %536 = vmatpush1.msra.mxu0 %v278
    %537 = vmatprep.subr.mxu0 0.0
    %538 = vmatpush1.msra.mxu0 0.0
    %539 = vmatprep.subr.mxu0 0.0
    %540 = vmatpush1.msra.mxu0 0.0
    %541 = vmatprep.subr.mxu0 0.0
    %542 = vmatpush1.msra.mxu0 0.0
    %543 = vmatprep.subr.mxu0 0.0
    %544 = vmatpush1.msra.mxu0 0.0
    %545 = vmatprep.subr.mxu0 0.0
    %546 = vmatpush1.msra.mxu0 0.0
    %547 = vmatprep.subr.mxu0 0.0
    %548 = vmatpush1.msra.mxu0 0.0
    %549 = vmatprep.subr.mxu0 0.0
    %550 = vmatpush1.msra.mxu0 0.0
    %551 = vmatprep.subr.mxu0 0.0
    %552 = vmatpush1.msra.mxu0 0.0
    %553 = vmatprep.subr.mxu0 0.0
    %554 = vmatpush1.msra.mxu0 0.0
    %555 = vmatprep.subr.mxu0 0.0
    %556 = vmatpush1.msra.mxu0 0.0
    %557 = vmatprep.subr.mxu0 0.0
    %558 = vmatpush1.msra.mxu0 0.0
    %559 = vmatprep.subr.mxu0 0.0
    %560 = vmatpush1.msra.mxu0 0.0
    %561 = vmatprep.subr.mxu0 0.0
    %562 = vmatpush1.msra.mxu0 0.0
    %563 = vmatprep.subr.mxu0 0.0
    %564 = vmatpush1.msra.mxu0 0.0
    %565 = vmatprep.subr.mxu0 0.0
    %566 = vmatpush1.msra.mxu0 0.0
    %567 = vmatprep.subr.mxu0 0.0
    %568 = vmatpush1.msra.mxu0 0.0
    %569 = vmatprep.subr.mxu0 0.0
    %570 = vmatpush1.msra.mxu0 0.0
    %571 = vmatprep.subr.mxu0 0.0
    %572 = vmatpush1.msra.mxu0 0.0
    %573 = vmatprep.subr.mxu0 0.0
    %574 = vmatpush1.msra.mxu0 0.0
    %575 = vmatprep.subr.mxu0 0.0
    %576 = vmatpush1.msra.mxu0 0.0
    %577 = vmatprep.subr.mxu0 0.0
    %578 = vmatpush1.msra.mxu0 0.0
    %579 = vmatprep.subr.mxu0 0.0
    %580 = vmatpush1.msra.mxu0 0.0
    %581 = vmatprep.subr.mxu0 0.0
    %582 = vmatpush1.msra.mxu0 0.0
    %583 = vmatprep.subr.mxu0 0.0
    %584 = vmatpush1.msra.mxu0 0.0
    %585 = vmatprep.subr.mxu0 0.0
    %586 = vmatpush1.msra.mxu0 0.0
    %587 = vmatprep.subr.mxu0 0.0
    %588 = vmatpush1.msra.mxu0 0.0
    %589 = vmatprep.subr.mxu0 0.0
    %590 = vmatpush1.msra.mxu0 0.0
    %591 = vmatprep.subr.mxu0 0.0
    %592 = vmatpush1.msra.mxu0 0.0
    %593 = vmatprep.subr.mxu0 0.0
    %594 = vmatpush1.msra.mxu0 0.0
    %595 = vmatprep.subr.mxu0 0.0
    %596 = vmatpush1.msra.mxu0 0.0
    %597 = vmatprep.subr.mxu0 0.0
    %598 = vmatpush1.msra.mxu0 0.0
    %599 = vmatprep.mubr.f32.mxu0 0.0
    %600 = vmatmul.mubr.f32.gmra.mrb[0].mxu0 %v533
    %v601 = vpop.f32.mrb[0].mxu0
    %v602 = vadd.f32 0.0, %v601
    %v603 = vpop.f32.mrb[0].mxu0
    %604 = vdwg.mxu0
    %605 = vrot.lane.b32.xlu0 %v281, 112
    %v606 = vpop.permute.xlu0 %605
    %607 = vrot.lane.b32.xlu0 %v198, 112
    %v608 = vpop.permute.xlu0 %607
    %v609 = vsel %vm283, %v606, 0
    %v611 = vsel %vm283, %v608, 0
    %613 = vmatprep.subr.mxu0 0.0
    %614 = vmatpush1.xpose.msra.mxu0 %v611
    %615 = vmatprep.subr.mxu0 0.0
    %616 = vmatpush1.xpose.msra.mxu0 0.0
    %617 = vmatprep.subr.mxu0 0.0
    %618 = vmatpush1.xpose.msra.mxu0 0.0
    %619 = vmatprep.subr.mxu0 0.0
    %620 = vmatpush1.xpose.msra.mxu0 0.0
    %621 = vmatprep.subr.mxu0 0.0
    %622 = vmatpush1.xpose.msra.mxu0 0.0
    %623 = vmatprep.subr.mxu0 0.0
    %624 = vmatpush1.xpose.msra.mxu0 0.0
    %625 = vmatprep.subr.mxu0 0.0
    %626 = vmatpush1.xpose.msra.mxu0 0.0
    %627 = vmatprep.subr.mxu0 0.0
    %628 = vmatpush1.xpose.msra.mxu0 0.0
    %629 = vmatprep.subr.mxu0 0.0
    %630 = vmatpush1.xpose.msra.mxu0 0.0
    %631 = vmatprep.subr.mxu0 0.0
    %632 = vmatpush1.xpose.msra.mxu0 0.0
    %633 = vmatprep.subr.mxu0 0.0
    %634 = vmatpush1.xpose.msra.mxu0 0.0
    %635 = vmatprep.subr.mxu0 0.0
    %636 = vmatpush1.xpose.msra.mxu0 0.0
    %637 = vmatprep.subr.mxu0 0.0
    %638 = vmatpush1.xpose.msra.mxu0 0.0
    %639 = vmatprep.subr.mxu0 0.0
    %640 = vmatpush1.xpose.msra.mxu0 0.0
    %641 = vmatprep.subr.mxu0 0.0
    %642 = vmatpush1.xpose.msra.mxu0 0.0
    %643 = vmatprep.subr.mxu0 0.0
    %644 = vmatpush1.xpose.msra.mxu0 0.0
    %645 = vmatprep.subr.mxu0 0.0
    %646 = vmatpush1.xpose.msra.mxu0 0.0
    %647 = vmatprep.subr.mxu0 0.0
    %648 = vmatpush1.xpose.msra.mxu0 0.0
    %649 = vmatprep.subr.mxu0 0.0
    %650 = vmatpush1.xpose.msra.mxu0 0.0
    %651 = vmatprep.subr.mxu0 0.0
    %652 = vmatpush1.xpose.msra.mxu0 0.0
    %653 = vmatprep.subr.mxu0 0.0
    %654 = vmatpush1.xpose.msra.mxu0 0.0
    %655 = vmatprep.subr.mxu0 0.0
    %656 = vmatpush1.xpose.msra.mxu0 0.0
    %657 = vmatprep.subr.mxu0 0.0
    %658 = vmatpush1.xpose.msra.mxu0 0.0
    %659 = vmatprep.subr.mxu0 0.0
    %660 = vmatpush1.xpose.msra.mxu0 0.0
    %661 = vmatprep.subr.mxu0 0.0
    %662 = vmatpush1.xpose.msra.mxu0 0.0
    %663 = vmatprep.subr.mxu0 0.0
    %664 = vmatpush1.xpose.msra.mxu0 0.0
    %665 = vmatprep.subr.mxu0 0.0
    %666 = vmatpush1.xpose.msra.mxu0 0.0
    %667 = vmatprep.subr.mxu0 0.0
    %668 = vmatpush1.xpose.msra.mxu0 0.0
    %669 = vmatprep.subr.mxu0 0.0
    %670 = vmatpush1.xpose.msra.mxu0 0.0
    %671 = vmatprep.subr.mxu0 0.0
    %672 = vmatpush1.xpose.msra.mxu0 0.0
    %673 = vmatprep.subr.mxu0 0.0
    %674 = vmatpush1.xpose.msra.mxu0 0.0
    %675 = vmatprep.subr.mxu0 0.0
    %676 = vmatpush1.xpose.msra.mxu0 0.0
    %677 = vmatprep.mubr.f32.mxu0 0.0
    %678 = vmatmul.mubr.f32.gmra.mrb[0].mxu0 %v609
    %v679 = vpop.f32.mrb[0].mxu0
    %v680 = vadd.f32 0.0, %v679
    %v681 = vpop.f32.mrb[0].mxu0
    %682 = vdwg.mxu0
    %683 = vrot.lane.b32.xlu0 %v282, 112
    %v684 = vpop.permute.xlu0 %683
    %685 = vrot.lane.b32.xlu0 %v204, 112
    %v686 = vpop.permute.xlu0 %685
    %v687 = vsel %vm283, %v684, 0
    %v689 = vsel %vm283, %v686, 0
    %691 = vmatprep.subr.mxu0 0.0
    %692 = vmatpush1.xpose.msra.mxu0 %v689
    %693 = vmatprep.subr.mxu0 0.0
    %694 = vmatpush1.xpose.msra.mxu0 0.0
    %695 = vmatprep.subr.mxu0 0.0
    %696 = vmatpush1.xpose.msra.mxu0 0.0
    %697 = vmatprep.subr.mxu0 0.0
    %698 = vmatpush1.xpose.msra.mxu0 0.0
    %699 = vmatprep.subr.mxu0 0.0
    %700 = vmatpush1.xpose.msra.mxu0 0.0
    %701 = vmatprep.subr.mxu0 0.0
    %702 = vmatpush1.xpose.msra.mxu0 0.0
    %703 = vmatprep.subr.mxu0 0.0
    %704 = vmatpush1.xpose.msra.mxu0 0.0
    %705 = vmatprep.subr.mxu0 0.0
    %706 = vmatpush1.xpose.msra.mxu0 0.0
    %707 = vmatprep.subr.mxu0 0.0
    %708 = vmatpush1.xpose.msra.mxu0 0.0
    %709 = vmatprep.subr.mxu0 0.0
    %710 = vmatpush1.xpose.msra.mxu0 0.0
    %711 = vmatprep.subr.mxu0 0.0
    %712 = vmatpush1.xpose.msra.mxu0 0.0
    %713 = vmatprep.subr.mxu0 0.0
    %714 = vmatpush1.xpose.msra.mxu0 0.0
    %715 = vmatprep.subr.mxu0 0.0
    %716 = vmatpush1.xpose.msra.mxu0 0.0
    %717 = vmatprep.subr.mxu0 0.0
    %718 = vmatpush1.xpose.msra.mxu0 0.0
    %719 = vmatprep.subr.mxu0 0.0
    %720 = vmatpush1.xpose.msra.mxu0 0.0
    %721 = vmatprep.subr.mxu0 0.0
    %722 = vmatpush1.xpose.msra.mxu0 0.0
    %723 = vmatprep.subr.mxu0 0.0
    %724 = vmatpush1.xpose.msra.mxu0 0.0
    %725 = vmatprep.subr.mxu0 0.0
    %726 = vmatpush1.xpose.msra.mxu0 0.0
    %727 = vmatprep.subr.mxu0 0.0
    %728 = vmatpush1.xpose.msra.mxu0 0.0
    %729 = vmatprep.subr.mxu0 0.0
    %730 = vmatpush1.xpose.msra.mxu0 0.0
    %731 = vmatprep.subr.mxu0 0.0
    %732 = vmatpush1.xpose.msra.mxu0 0.0
    %733 = vmatprep.subr.mxu0 0.0
    %734 = vmatpush1.xpose.msra.mxu0 0.0
    %735 = vmatprep.subr.mxu0 0.0
    %736 = vmatpush1.xpose.msra.mxu0 0.0
    %737 = vmatprep.subr.mxu0 0.0
    %738 = vmatpush1.xpose.msra.mxu0 0.0
    %739 = vmatprep.subr.mxu0 0.0
    %740 = vmatpush1.xpose.msra.mxu0 0.0
    %741 = vmatprep.subr.mxu0 0.0
    %742 = vmatpush1.xpose.msra.mxu0 0.0
    %743 = vmatprep.subr.mxu0 0.0
    %744 = vmatpush1.xpose.msra.mxu0 0.0
    %745 = vmatprep.subr.mxu0 0.0
    %746 = vmatpush1.xpose.msra.mxu0 0.0
    %747 = vmatprep.subr.mxu0 0.0
    %748 = vmatpush1.xpose.msra.mxu0 0.0
    %749 = vmatprep.subr.mxu0 0.0
    %750 = vmatpush1.xpose.msra.mxu0 0.0
    %751 = vmatprep.subr.mxu0 0.0
    %752 = vmatpush1.xpose.msra.mxu0 0.0
    %753 = vmatprep.subr.mxu0 0.0
    %754 = vmatpush1.xpose.msra.mxu0 0.0
    %755 = vmatprep.mubr.f32.mxu0 0.0
    %756 = vmatmul.mubr.f32.gmra.mrb[0].mxu0 %v687
    %v757 = vpop.f32.mrb[0].mxu0
    %v758 = vadd.f32 0.0, %v757
    %v759 = vpop.f32.mrb[0].mxu0
    %760 = vdwg.mxu0
    %v761 = vsel %vm436, %v680, -inf
    %762 = vmax.xlane.f32.xlu0 %v761
    %v763 = vpop.xlane.xlu0 %762
    %v764 = vsel %vm436, %v758, -inf
    %765 = vmax.xlane.f32.xlu0 %v764
    %v766 = vpop.xlane.xlu0 %765
    %v767 = vsub.f32 %v680, %v763
    %v768 = vsub.f32 %v758, %v766
    %v769 = vmul.f32 %v767, 1.442695
    %v770 = vpow.pop %v769
    %v771 = vmul.f32 %v768, 1.442695
    %v772 = vpow.pop %v771
    %v773 = vsel %vm436, %v770, 0.0
    %774 = vadd.xlane.f32.xlu0 %v773
    %v775 = vpop.xlane.xlu0 %774
    %v776 = vsel %vm436, %v772, 0.0
    %777 = vadd.xlane.f32.xlu0 %v776
    %v778 = vpop.xlane.xlu0 %777
    %v779 = vrcp.pop %v775
    %v780 = vrcp.pop %v778
    %v781 = vmul.f32 %v770, %v779
    %v782 = vmul.f32 %v772, %v780
    %784 = vrot.lane.b32.xlu0 %v273, 112
    %v785 = vpop.permute.xlu0 %784
    %v788 = vsel %vm436, %v781, 0
    %790 = vmatprep.subr.mxu0 0.0
    %791 = vmatpush1.msra.mxu0 %v785
    %792 = vmatprep.subr.mxu0 0.0
    %793 = vmatpush1.msra.mxu0 0.0
    %794 = vmatprep.subr.mxu0 0.0
    %795 = vmatpush1.msra.mxu0 0.0
    %796 = vmatprep.subr.mxu0 0.0
    %797 = vmatpush1.msra.mxu0 0.0
    %798 = vmatprep.subr.mxu0 0.0
    %799 = vmatpush1.msra.mxu0 0.0
    %800 = vmatprep.subr.mxu0 0.0
    %801 = vmatpush1.msra.mxu0 0.0
    %802 = vmatprep.subr.mxu0 0.0
    %803 = vmatpush1.msra.mxu0 0.0
    %804 = vmatprep.subr.mxu0 0.0
    %805 = vmatpush1.msra.mxu0 0.0
    %806 = vmatprep.subr.mxu0 0.0
    %807 = vmatpush1.msra.mxu0 0.0
    %808 = vmatprep.subr.mxu0 0.0
    %809 = vmatpush1.msra.mxu0 0.0
    %810 = vmatprep.subr.mxu0 0.0
    %811 = vmatpush1.msra.mxu0 0.0
    %812 = vmatprep.subr.mxu0 0.0
    %813 = vmatpush1.msra.mxu0 0.0
    %814 = vmatprep.subr.mxu0 0.0
    %815 = vmatpush1.msra.mxu0 0.0
    %816 = vmatprep.subr.mxu0 0.0
    %817 = vmatpush1.msra.mxu0 0.0
    %818 = vmatprep.subr.mxu0 0.0
    %819 = vmatpush1.msra.mxu0 0.0
    %820 = vmatprep.subr.mxu0 0.0
    %821 = vmatpush1.msra.mxu0 0.0
    %822 = vmatprep.subr.mxu0 0.0
    %823 = vmatpush1.msra.mxu0 0.0
    %824 = vmatprep.subr.mxu0 0.0
    %825 = vmatpush1.msra.mxu0 0.0
    %826 = vmatprep.subr.mxu0 0.0
    %827 = vmatpush1.msra.mxu0 0.0
    %828 = vmatprep.subr.mxu0 0.0
    %829 = vmatpush1.msra.mxu0 0.0
    %830 = vmatprep.subr.mxu0 0.0
    %831 = vmatpush1.msra.mxu0 0.0
    %832 = vmatprep.subr.mxu0 0.0
    %833 = vmatpush1.msra.mxu0 0.0
    %834 = vmatprep.subr.mxu0 0.0
    %835 = vmatpush1.msra.mxu0 0.0
    %836 = vmatprep.subr.mxu0 0.0
    %837 = vmatpush1.msra.mxu0 0.0
    %838 = vmatprep.subr.mxu0 0.0
    %839 = vmatpush1.msra.mxu0 0.0
    %840 = vmatprep.subr.mxu0 0.0
    %841 = vmatpush1.msra.mxu0 0.0
    %842 = vmatprep.subr.mxu0 0.0
    %843 = vmatpush1.msra.mxu0 0.0
    %844 = vmatprep.subr.mxu0 0.0
    %845 = vmatpush1.msra.mxu0 0.0
    %846 = vmatprep.subr.mxu0 0.0
    %847 = vmatpush1.msra.mxu0 0.0
    %848 = vmatprep.subr.mxu0 0.0
    %849 = vmatpush1.msra.mxu0 0.0
    %850 = vmatprep.subr.mxu0 0.0
    %851 = vmatpush1.msra.mxu0 0.0
    %852 = vmatprep.subr.mxu0 0.0
    %853 = vmatpush1.msra.mxu0 0.0
    %854 = vmatprep.mubr.f32.mxu0 0.0
    %855 = vmatmul.mubr.f32.gmra.mrb[0].mxu0 %v788
    %v856 = vpop.f32.mrb[0].mxu0
    %v857 = vadd.f32 0.0, %v856
    %v858 = vpop.f32.mrb[0].mxu0
    %859 = vdwg.mxu0
    %861 = vrot.lane.b32.xlu0 %v278, 112
    %v862 = vpop.permute.xlu0 %861
    %v865 = vsel %vm436, %v782, 0
    %867 = vmatprep.subr.mxu0 0.0
    %868 = vmatpush1.msra.mxu0 %v862
    %869 = vmatprep.subr.mxu0 0.0
    %870 = vmatpush1.msra.mxu0 0.0
    %871 = vmatprep.subr.mxu0 0.0
    %872 = vmatpush1.msra.mxu0 0.0
    %873 = vmatprep.subr.mxu0 0.0
    %874 = vmatpush1.msra.mxu0 0.0
    %875 = vmatprep.subr.mxu0 0.0
    %876 = vmatpush1.msra.mxu0 0.0
    %877 = vmatprep.subr.mxu0 0.0
    %878 = vmatpush1.msra.mxu0 0.0
    %879 = vmatprep.subr.mxu0 0.0
    %880 = vmatpush1.msra.mxu0 0.0
    %881 = vmatprep.subr.mxu0 0.0
    %882 = vmatpush1.msra.mxu0 0.0
    %883 = vmatprep.subr.mxu0 0.0
    %884 = vmatpush1.msra.mxu0 0.0
    %885 = vmatprep.subr.mxu0 0.0
    %886 = vmatpush1.msra.mxu0 0.0
    %887 = vmatprep.subr.mxu0 0.0
    %888 = vmatpush1.msra.mxu0 0.0
    %889 = vmatprep.subr.mxu0 0.0
    %890 = vmatpush1.msra.mxu0 0.0
    %891 = vmatprep.subr.mxu0 0.0
    %892 = vmatpush1.msra.mxu0 0.0
    %893 = vmatprep.subr.mxu0 0.0
    %894 = vmatpush1.msra.mxu0 0.0
    %895 = vmatprep.subr.mxu0 0.0
    %896 = vmatpush1.msra.mxu0 0.0
    %897 = vmatprep.subr.mxu0 0.0
    %898 = vmatpush1.msra.mxu0 0.0
    %899 = vmatprep.subr.mxu0 0.0
    %900 = vmatpush1.msra.mxu0 0.0
    %901 = vmatprep.subr.mxu0 0.0
    %902 = vmatpush1.msra.mxu0 0.0
    %903 = vmatprep.subr.mxu0 0.0
    %904 = vmatpush1.msra.mxu0 0.0
    %905 = vmatprep.subr.mxu0 0.0
    %906 = vmatpush1.msra.mxu0 0.0
    %907 = vmatprep.subr.mxu0 0.0
    %908 = vmatpush1.msra.mxu0 0.0
    %909 = vmatprep.subr.mxu0 0.0
    %910 = vmatpush1.msra.mxu0 0.0
    %911 = vmatprep.subr.mxu0 0.0
    %912 = vmatpush1.msra.mxu0 0.0
    %913 = vmatprep.subr.mxu0 0.0
    %914 = vmatpush1.msra.mxu0 0.0
    %915 = vmatprep.subr.mxu0 0.0
    %916 = vmatpush1.msra.mxu0 0.0
    %917 = vmatprep.subr.mxu0 0.0
    %918 = vmatpush1.msra.mxu0 0.0
    %919 = vmatprep.subr.mxu0 0.0
    %920 = vmatpush1.msra.mxu0 0.0
    %921 = vmatprep.subr.mxu0 0.0
    %922 = vmatpush1.msra.mxu0 0.0
    %923 = vmatprep.subr.mxu0 0.0
    %924 = vmatpush1.msra.mxu0 0.0
    %925 = vmatprep.subr.mxu0 0.0
    %926 = vmatpush1.msra.mxu0 0.0
    %927 = vmatprep.subr.mxu0 0.0
    %928 = vmatpush1.msra.mxu0 0.0
    %929 = vmatprep.subr.mxu0 0.0
    %930 = vmatpush1.msra.mxu0 0.0
    %931 = vmatprep.mubr.f32.mxu0 0.0
    %932 = vmatmul.mubr.f32.gmra.mrb[0].mxu0 %v865
    %v933 = vpop.f32.mrb[0].mxu0
    %v934 = vadd.f32 0.0, %v933
    %v935 = vpop.f32.mrb[0].mxu0
    %936 = vdwg.mxu0
    %937 = vrot.lane.b32.xlu0 %v281, 96
    %v938 = vpop.permute.xlu0 %937
    %939 = vrot.lane.b32.xlu0 %v198, 96
    %v940 = vpop.permute.xlu0 %939
    %v941 = vsel %vm283, %v938, 0
    %v943 = vsel %vm283, %v940, 0
    %945 = vmatprep.subr.mxu0 0.0
    %946 = vmatpush1.xpose.msra.mxu0 %v943
    %947 = vmatprep.subr.mxu0 0.0
    %948 = vmatpush1.xpose.msra.mxu0 0.0
    %949 = vmatprep.subr.mxu0 0.0
    %950 = vmatpush1.xpose.msra.mxu0 0.0
    %951 = vmatprep.subr.mxu0 0.0
    %952 = vmatpush1.xpose.msra.mxu0 0.0
    %953 = vmatprep.subr.mxu0 0.0
    %954 = vmatpush1.xpose.msra.mxu0 0.0
    %955 = vmatprep.subr.mxu0 0.0
    %956 = vmatpush1.xpose.msra.mxu0 0.0
    %957 = vmatprep.subr.mxu0 0.0
    %958 = vmatpush1.xpose.msra.mxu0 0.0
    %959 = vmatprep.subr.mxu0 0.0
    %960 = vmatpush1.xpose.msra.mxu0 0.0
    %961 = vmatprep.subr.mxu0 0.0
    %962 = vmatpush1.xpose.msra.mxu0 0.0
    %963 = vmatprep.subr.mxu0 0.0
    %964 = vmatpush1.xpose.msra.mxu0 0.0
    %965 = vmatprep.subr.mxu0 0.0
    %966 = vmatpush1.xpose.msra.mxu0 0.0
    %967 = vmatprep.subr.mxu0 0.0
    %968 = vmatpush1.xpose.msra.mxu0 0.0
    %969 = vmatprep.subr.mxu0 0.0
    %970 = vmatpush1.xpose.msra.mxu0 0.0
    %971 = vmatprep.subr.mxu0 0.0
    %972 = vmatpush1.xpose.msra.mxu0 0.0
    %973 = vmatprep.subr.mxu0 0.0
    %974 = vmatpush1.xpose.msra.mxu0 0.0
    %975 = vmatprep.subr.mxu0 0.0
    %976 = vmatpush1.xpose.msra.mxu0 0.0
    %977 = vmatprep.subr.mxu0 0.0
    %978 = vmatpush1.xpose.msra.mxu0 0.0
    %979 = vmatprep.subr.mxu0 0.0
    %980 = vmatpush1.xpose.msra.mxu0 0.0
    %981 = vmatprep.subr.mxu0 0.0
    %982 = vmatpush1.xpose.msra.mxu0 0.0
    %983 = vmatprep.subr.mxu0 0.0
    %984 = vmatpush1.xpose.msra.mxu0 0.0
    %985 = vmatprep.subr.mxu0 0.0
    %986 = vmatpush1.xpose.msra.mxu0 0.0
    %987 = vmatprep.subr.mxu0 0.0
    %988 = vmatpush1.xpose.msra.mxu0 0.0
    %989 = vmatprep.subr.mxu0 0.0
    %990 = vmatpush1.xpose.msra.mxu0 0.0
    %991 = vmatprep.subr.mxu0 0.0
    %992 = vmatpush1.xpose.msra.mxu0 0.0
    %993 = vmatprep.subr.mxu0 0.0
    %994 = vmatpush1.xpose.msra.mxu0 0.0
    %995 = vmatprep.subr.mxu0 0.0
    %996 = vmatpush1.xpose.msra.mxu0 0.0
    %997 = vmatprep.subr.mxu0 0.0
    %998 = vmatpush1.xpose.msra.mxu0 0.0
    %999 = vmatprep.subr.mxu0 0.0
    %1000 = vmatpush1.xpose.msra.mxu0 0.0
    %1001 = vmatprep.subr.mxu0 0.0
    %1002 = vmatpush1.xpose.msra.mxu0 0.0
    %1003 = vmatprep.subr.mxu0 0.0
    %1004 = vmatpush1.xpose.msra.mxu0 0.0
    %1005 = vmatprep.subr.mxu0 0.0
    %1006 = vmatpush1.xpose.msra.mxu0 0.0
    %1007 = vmatprep.subr.mxu0 0.0
    %1008 = vmatpush1.xpose.msra.mxu0 0.0
    %1009 = vmatprep.mubr.f32.mxu0 0.0
    %1010 = vmatmul.mubr.f32.gmra.mrb[0].mxu0 %v941
    %v1011 = vpop.f32.mrb[0].mxu0
    %v1012 = vadd.f32 0.0, %v1011
    %v1013 = vpop.f32.mrb[0].mxu0
    %1014 = vdwg.mxu0
    %1015 = vrot.lane.b32.xlu0 %v282, 96
    %v1016 = vpop.permute.xlu0 %1015
    %1017 = vrot.lane.b32.xlu0 %v204, 96
    %v1018 = vpop.permute.xlu0 %1017
    %v1019 = vsel %vm283, %v1016, 0
    %v1021 = vsel %vm283, %v1018, 0
    %1023 = vmatprep.subr.mxu0 0.0
    %1024 = vmatpush1.xpose.msra.mxu0 %v1021
    %1025 = vmatprep.subr.mxu0 0.0
    %1026 = vmatpush1.xpose.msra.mxu0 0.0
    %1027 = vmatprep.subr.mxu0 0.0
    %1028 = vmatpush1.xpose.msra.mxu0 0.0
    %1029 = vmatprep.subr.mxu0 0.0
    %1030 = vmatpush1.xpose.msra.mxu0 0.0
    %1031 = vmatprep.subr.mxu0 0.0
    %1032 = vmatpush1.xpose.msra.mxu0 0.0
    %1033 = vmatprep.subr.mxu0 0.0
    %1034 = vmatpush1.xpose.msra.mxu0 0.0
    %1035 = vmatprep.subr.mxu0 0.0
    %1036 = vmatpush1.xpose.msra.mxu0 0.0
    %1037 = vmatprep.subr.mxu0 0.0
    %1038 = vmatpush1.xpose.msra.mxu0 0.0
    %1039 = vmatprep.subr.mxu0 0.0
    %1040 = vmatpush1.xpose.msra.mxu0 0.0
    %1041 = vmatprep.subr.mxu0 0.0
    %1042 = vmatpush1.xpose.msra.mxu0 0.0
    %1043 = vmatprep.subr.mxu0 0.0
    %1044 = vmatpush1.xpose.msra.mxu0 0.0
    %1045 = vmatprep.subr.mxu0 0.0
    %1046 = vmatpush1.xpose.msra.mxu0 0.0
    %1047 = vmatprep.subr.mxu0 0.0
    %1048 = vmatpush1.xpose.msra.mxu0 0.0
    %1049 = vmatprep.subr.mxu0 0.0
    %1050 = vmatpush1.xpose.msra.mxu0 0.0
    %1051 = vmatprep.subr.mxu0 0.0
    %1052 = vmatpush1.xpose.msra.mxu0 0.0
    %1053 = vmatprep.subr.mxu0 0.0
    %1054 = vmatpush1.xpose.msra.mxu0 0.0
    %1055 = vmatprep.subr.mxu0 0.0
    %1056 = vmatpush1.xpose.msra.mxu0 0.0
    %1057 = vmatprep.subr.mxu0 0.0
    %1058 = vmatpush1.xpose.msra.mxu0 0.0
    %1059 = vmatprep.subr.mxu0 0.0
    %1060 = vmatpush1.xpose.msra.mxu0 0.0
    %1061 = vmatprep.subr.mxu0 0.0
    %1062 = vmatpush1.xpose.msra.mxu0 0.0
    %1063 = vmatprep.subr.mxu0 0.0
    %1064 = vmatpush1.xpose.msra.mxu0 0.0
    %1065 = vmatprep.subr.mxu0 0.0
    %1066 = vmatpush1.xpose.msra.mxu0 0.0
    %1067 = vmatprep.subr.mxu0 0.0
    %1068 = vmatpush1.xpose.msra.mxu0 0.0
    %1069 = vmatprep.subr.mxu0 0.0
    %1070 = vmatpush1.xpose.msra.mxu0 0.0
    %1071 = vmatprep.subr.mxu0 0.0
    %1072 = vmatpush1.xpose.msra.mxu0 0.0
    %1073 = vmatprep.subr.mxu0 0.0
    %1074 = vmatpush1.xpose.msra.mxu0 0.0
    %1075 = vmatprep.subr.mxu0 0.0
    %1076 = vmatpush1.xpose.msra.mxu0 0.0
    %1077 = vmatprep.subr.mxu0 0.0
    %1078 = vmatpush1.xpose.msra.mxu0 0.0
    %1079 = vmatprep.subr.mxu0 0.0
    %1080 = vmatpush1.xpose.msra.mxu0 0.0
    %1081 = vmatprep.subr.mxu0 0.0
    %1082 = vmatpush1.xpose.msra.mxu0 0.0
    %1083 = vmatprep.subr.mxu0 0.0
    %1084 = vmatpush1.xpose.msra.mxu0 0.0
    %1085 = vmatprep.subr.mxu0 0.0
    %1086 = vmatpush1.xpose.msra.mxu0 0.0
    %1087 = vmatprep.mubr.f32.mxu0 0.0
    %1088 = vmatmul.mubr.f32.gmra.mrb[0].mxu0 %v1019
    %v1089 = vpop.f32.mrb[0].mxu0
    %v1090 = vadd.f32 0.0, %v1089
    %v1091 = vpop.f32.mrb[0].mxu0
    %1092 = vdwg.mxu0
    %v1093 = vsel %vm436, %v1012, -inf
    %1094 = vmax.xlane.f32.xlu0 %v1093
    %v1095 = vpop.xlane.xlu0 %1094
    %v1096 = vsel %vm436, %v1090, -inf
    %1097 = vmax.xlane.f32.xlu0 %v1096
    %v1098 = vpop.xlane.xlu0 %1097
    %v1099 = vsub.f32 %v1012, %v1095
    %v1100 = vsub.f32 %v1090, %v1098
    %v1101 = vmul.f32 %v1099, 1.442695
    %v1102 = vpow.pop %v1101
    %v1103 = vmul.f32 %v1100, 1.442695
    %v1104 = vpow.pop %v1103
    %v1105 = vsel %vm436, %v1102, 0.0
    %1106 = vadd.xlane.f32.xlu0 %v1105
    %v1107 = vpop.xlane.xlu0 %1106
    %v1108 = vsel %vm436, %v1104, 0.0
    %1109 = vadd.xlane.f32.xlu0 %v1108
    %v1110 = vpop.xlane.xlu0 %1109
    %v1111 = vrcp.pop %v1107
    %v1112 = vrcp.pop %v1110
    %v1113 = vmul.f32 %v1102, %v1111
    %v1114 = vmul.f32 %v1104, %v1112
    %1115 = vrot.lane.b32.xlu0 %v273, 96
    %v1116 = vpop.permute.xlu0 %1115
    %v1119 = vsel %vm436, %v1113, 0
    %1121 = vmatprep.subr.mxu0 0.0
    %1122 = vmatpush1.msra.mxu0 %v1116
    %1123 = vmatprep.subr.mxu0 0.0
    %1124 = vmatpush1.msra.mxu0 0.0
    %1125 = vmatprep.subr.mxu0 0.0
    %1126 = vmatpush1.msra.mxu0 0.0
    %1127 = vmatprep.subr.mxu0 0.0
    %1128 = vmatpush1.msra.mxu0 0.0
    %1129 = vmatprep.subr.mxu0 0.0
    %1130 = vmatpush1.msra.mxu0 0.0
    %1131 = vmatprep.subr.mxu0 0.0
    %1132 = vmatpush1.msra.mxu0 0.0
    %1133 = vmatprep.subr.mxu0 0.0
    %1134 = vmatpush1.msra.mxu0 0.0
    %1135 = vmatprep.subr.mxu0 0.0
    %1136 = vmatpush1.msra.mxu0 0.0
    %1137 = vmatprep.subr.mxu0 0.0
    %1138 = vmatpush1.msra.mxu0 0.0
    %1139 = vmatprep.subr.mxu0 0.0
    %1140 = vmatpush1.msra.mxu0 0.0
    %1141 = vmatprep.subr.mxu0 0.0
    %1142 = vmatpush1.msra.mxu0 0.0
    %1143 = vmatprep.subr.mxu0 0.0
    %1144 = vmatpush1.msra.mxu0 0.0
    %1145 = vmatprep.subr.mxu0 0.0
    %1146 = vmatpush1.msra.mxu0 0.0
    %1147 = vmatprep.subr.mxu0 0.0
    %1148 = vmatpush1.msra.mxu0 0.0
    %1149 = vmatprep.subr.mxu0 0.0
    %1150 = vmatpush1.msra.mxu0 0.0
    %1151 = vmatprep.subr.mxu0 0.0
    %1152 = vmatpush1.msra.mxu0 0.0
    %1153 = vmatprep.subr.mxu0 0.0
    %1154 = vmatpush1.msra.mxu0 0.0
    %1155 = vmatprep.subr.mxu0 0.0
    %1156 = vmatpush1.msra.mxu0 0.0
    %1157 = vmatprep.subr.mxu0 0.0
    %1158 = vmatpush1.msra.mxu0 0.0
    %1159 = vmatprep.subr.mxu0 0.0
    %1160 = vmatpush1.msra.mxu0 0.0
    %1161 = vmatprep.subr.mxu0 0.0
    %1162 = vmatpush1.msra.mxu0 0.0
    %1163 = vmatprep.subr.mxu0 0.0
    %1164 = vmatpush1.msra.mxu0 0.0
    %1165 = vmatprep.subr.mxu0 0.0
    %1166 = vmatpush1.msra.mxu0 0.0
    %1167 = vmatprep.subr.mxu0 0.0
    %1168 = vmatpush1.msra.mxu0 0.0
    %1169 = vmatprep.subr.mxu0 0.0
    %1170 = vmatpush1.msra.mxu0 0.0
    %1171 = vmatprep.subr.mxu0 0.0
    %1172 = vmatpush1.msra.mxu0 0.0
    %1173 = vmatprep.subr.mxu0 0.0
    %1174 = vmatpush1.msra.mxu0 0.0
    %1175 = vmatprep.subr.mxu0 0.0
    %1176 = vmatpush1.msra.mxu0 0.0
    %1177 = vmatprep.subr.mxu0 0.0
    %1178 = vmatpush1.msra.mxu0 0.0
    %1179 = vmatprep.subr.mxu0 0.0
    %1180 = vmatpush1.msra.mxu0 0.0
    %1181 = vmatprep.subr.mxu0 0.0
    %1182 = vmatpush1.msra.mxu0 0.0
    %1183 = vmatprep.subr.mxu0 0.0
    %1184 = vmatpush1.msra.mxu0 0.0
    %1185 = vmatprep.mubr.f32.mxu0 0.0
    %1186 = vmatmul.mubr.f32.gmra.mrb[0].mxu0 %v1119
    %v1187 = vpop.f32.mrb[0].mxu0
    %v1188 = vadd.f32 0.0, %v1187
    %v1189 = vpop.f32.mrb[0].mxu0
    %1190 = vdwg.mxu0
    %1191 = vrot.lane.b32.xlu0 %v278, 96
    %v1192 = vpop.permute.xlu0 %1191
    %v1195 = vsel %vm436, %v1114, 0
    %1197 = vmatprep.subr.mxu0 0.0
    %1198 = vmatpush1.msra.mxu0 %v1192
    %1199 = vmatprep.subr.mxu0 0.0
    %1200 = vmatpush1.msra.mxu0 0.0
    %1201 = vmatprep.subr.mxu0 0.0
    %1202 = vmatpush1.msra.mxu0 0.0
    %1203 = vmatprep.subr.mxu0 0.0
    %1204 = vmatpush1.msra.mxu0 0.0
    %1205 = vmatprep.subr.mxu0 0.0
    %1206 = vmatpush1.msra.mxu0 0.0
    %1207 = vmatprep.subr.mxu0 0.0
    %1208 = vmatpush1.msra.mxu0 0.0
    %1209 = vmatprep.subr.mxu0 0.0
    %1210 = vmatpush1.msra.mxu0 0.0
    %1211 = vmatprep.subr.mxu0 0.0
    %1212 = vmatpush1.msra.mxu0 0.0
    %1213 = vmatprep.subr.mxu0 0.0
    %1214 = vmatpush1.msra.mxu0 0.0
    %1215 = vmatprep.subr.mxu0 0.0
    %1216 = vmatpush1.msra.mxu0 0.0
    %1217 = vmatprep.subr.mxu0 0.0
    %1218 = vmatpush1.msra.mxu0 0.0
    %1219 = vmatprep.subr.mxu0 0.0
    %1220 = vmatpush1.msra.mxu0 0.0
    %1221 = vmatprep.subr.mxu0 0.0
    %1222 = vmatpush1.msra.mxu0 0.0
    %1223 = vmatprep.subr.mxu0 0.0
    %1224 = vmatpush1.msra.mxu0 0.0
    %1225 = vmatprep.subr.mxu0 0.0
    %1226 = vmatpush1.msra.mxu0 0.0
    %1227 = vmatprep.subr.mxu0 0.0
    %1228 = vmatpush1.msra.mxu0 0.0
    %1229 = vmatprep.subr.mxu0 0.0
    %1230 = vmatpush1.msra.mxu0 0.0
    %1231 = vmatprep.subr.mxu0 0.0
    %1232 = vmatpush1.msra.mxu0 0.0
    %1233 = vmatprep.subr.mxu0 0.0
    %1234 = vmatpush1.msra.mxu0 0.0
    %1235 = vmatprep.subr.mxu0 0.0
    %1236 = vmatpush1.msra.mxu0 0.0
    %1237 = vmatprep.subr.mxu0 0.0
    %1238 = vmatpush1.msra.mxu0 0.0
    %1239 = vmatprep.subr.mxu0 0.0
    %1240 = vmatpush1.msra.mxu0 0.0
    %1241 = vmatprep.subr.mxu0 0.0
    %1242 = vmatpush1.msra.mxu0 0.0
    %1243 = vmatprep.subr.mxu0 0.0
    %1244 = vmatpush1.msra.mxu0 0.0
    %1245 = vmatprep.subr.mxu0 0.0
    %1246 = vmatpush1.msra.mxu0 0.0
    %1247 = vmatprep.subr.mxu0 0.0
    %1248 = vmatpush1.msra.mxu0 0.0
    %1249 = vmatprep.subr.mxu0 0.0
    %1250 = vmatpush1.msra.mxu0 0.0
    %1251 = vmatprep.subr.mxu0 0.0
    %1252 = vmatpush1.msra.mxu0 0.0
    %1253 = vmatprep.subr.mxu0 0.0
    %1254 = vmatpush1.msra.mxu0 0.0
    %1255 = vmatprep.subr.mxu0 0.0
    %1256 = vmatpush1.msra.mxu0 0.0
    %1257 = vmatprep.subr.mxu0 0.0
    %1258 = vmatpush1.msra.mxu0 0.0
    %1259 = vmatprep.subr.mxu0 0.0
    %1260 = vmatpush1.msra.mxu0 0.0
    %1261 = vmatprep.mubr.f32.mxu0 0.0
    %1262 = vmatmul.mubr.f32.gmra.mrb[0].mxu0 %v1195
    %v1263 = vpop.f32.mrb[0].mxu0
    %v1264 = vadd.f32 0.0, %v1263
    %v1265 = vpop.f32.mrb[0].mxu0
    %1266 = vdwg.mxu0
    %1267 = vrot.lane.b32.xlu0 %v281, 80
    %v1268 = vpop.permute.xlu0 %1267
    %1269 = vrot.lane.b32.xlu0 %v198, 80
    %v1270 = vpop.permute.xlu0 %1269
    %v1271 = vsel %vm283, %v1268, 0
    %v1273 = vsel %vm283, %v1270, 0
    %1275 = vmatprep.subr.mxu0 0.0
    %1276 = vmatpush1.xpose.msra.mxu0 %v1273
    %1277 = vmatprep.subr.mxu0 0.0
    %1278 = vmatpush1.xpose.msra.mxu0 0.0
    %1279 = vmatprep.subr.mxu0 0.0
    %1280 = vmatpush1.xpose.msra.mxu0 0.0
    %1281 = vmatprep.subr.mxu0 0.0
    %1282 = vmatpush1.xpose.msra.mxu0 0.0
    %1283 = vmatprep.subr.mxu0 0.0
    %1284 = vmatpush1.xpose.msra.mxu0 0.0
    %1285 = vmatprep.subr.mxu0 0.0
    %1286 = vmatpush1.xpose.msra.mxu0 0.0
    %1287 = vmatprep.subr.mxu0 0.0
    %1288 = vmatpush1.xpose.msra.mxu0 0.0
    %1289 = vmatprep.subr.mxu0 0.0
    %1290 = vmatpush1.xpose.msra.mxu0 0.0
    %1291 = vmatprep.subr.mxu0 0.0
    %1292 = vmatpush1.xpose.msra.mxu0 0.0
    %1293 = vmatprep.subr.mxu0 0.0
    %1294 = vmatpush1.xpose.msra.mxu0 0.0
    %1295 = vmatprep.subr.mxu0 0.0
    %1296 = vmatpush1.xpose.msra.mxu0 0.0
    %1297 = vmatprep.subr.mxu0 0.0
    %1298 = vmatpush1.xpose.msra.mxu0 0.0
    %1299 = vmatprep.subr.mxu0 0.0
    %1300 = vmatpush1.xpose.msra.mxu0 0.0
    %1301 = vmatprep.subr.mxu0 0.0
    %1302 = vmatpush1.xpose.msra.mxu0 0.0
    %1303 = vmatprep.subr.mxu0 0.0
    %1304 = vmatpush1.xpose.msra.mxu0 0.0
    %1305 = vmatprep.subr.mxu0 0.0
    %1306 = vmatpush1.xpose.msra.mxu0 0.0
    %1307 = vmatprep.subr.mxu0 0.0
    %1308 = vmatpush1.xpose.msra.mxu0 0.0
    %1309 = vmatprep.subr.mxu0 0.0
    %1310 = vmatpush1.xpose.msra.mxu0 0.0
    %1311 = vmatprep.subr.mxu0 0.0
    %1312 = vmatpush1.xpose.msra.mxu0 0.0
    %1313 = vmatprep.subr.mxu0 0.0
    %1314 = vmatpush1.xpose.msra.mxu0 0.0
    %1315 = vmatprep.subr.mxu0 0.0
    %1316 = vmatpush1.xpose.msra.mxu0 0.0
    %1317 = vmatprep.subr.mxu0 0.0
    %1318 = vmatpush1.xpose.msra.mxu0 0.0
    %1319 = vmatprep.subr.mxu0 0.0
    %1320 = vmatpush1.xpose.msra.mxu0 0.0
    %1321 = vmatprep.subr.mxu0 0.0
    %1322 = vmatpush1.xpose.msra.mxu0 0.0
    %1323 = vmatprep.subr.mxu0 0.0
    %1324 = vmatpush1.xpose.msra.mxu0 0.0
    %1325 = vmatprep.subr.mxu0 0.0
    %1326 = vmatpush1.xpose.msra.mxu0 0.0
    %1327 = vmatprep.subr.mxu0 0.0
    %1328 = vmatpush1.xpose.msra.mxu0 0.0
    %1329 = vmatprep.subr.mxu0 0.0
    %1330 = vmatpush1.xpose.msra.mxu0 0.0
    %1331 = vmatprep.subr.mxu0 0.0
    %1332 = vmatpush1.xpose.msra.mxu0 0.0
    %1333 = vmatprep.subr.mxu0 0.0
    %1334 = vmatpush1.xpose.msra.mxu0 0.0
    %1335 = vmatprep.subr.mxu0 0.0
    %1336 = vmatpush1.xpose.msra.mxu0 0.0
    %1337 = vmatprep.subr.mxu0 0.0
    %1338 = vmatpush1.xpose.msra.mxu0 0.0
    %1339 = vmatprep.mubr.f32.mxu0 0.0
    %1340 = vmatmul.mubr.f32.gmra.mrb[0].mxu0 %v1271
    %v1341 = vpop.f32.mrb[0].mxu0
    %v1342 = vadd.f32 0.0, %v1341
    %v1343 = vpop.f32.mrb[0].mxu0
    %1344 = vdwg.mxu0
    %1345 = vrot.lane.b32.xlu0 %v282, 80
    %v1346 = vpop.permute.xlu0 %1345
    %1347 = vrot.lane.b32.xlu0 %v204, 80
    %v1348 = vpop.permute.xlu0 %1347
    %v1349 = vsel %vm283, %v1346, 0
    %v1351 = vsel %vm283, %v1348, 0
    %1353 = vmatprep.subr.mxu0 0.0
    %1354 = vmatpush1.xpose.msra.mxu0 %v1351
    %1355 = vmatprep.subr.mxu0 0.0
    %1356 = vmatpush1.xpose.msra.mxu0 0.0
    %1357 = vmatprep.subr.mxu0 0.0
    %1358 = vmatpush1.xpose.msra.mxu0 0.0
    %1359 = vmatprep.subr.mxu0 0.0
    %1360 = vmatpush1.xpose.msra.mxu0 0.0
    %1361 = vmatprep.subr.mxu0 0.0
    %1362 = vmatpush1.xpose.msra.mxu0 0.0
    %1363 = vmatprep.subr.mxu0 0.0
    %1364 = vmatpush1.xpose.msra.mxu0 0.0
    %1365 = vmatprep.subr.mxu0 0.0
    %1366 = vmatpush1.xpose.msra.mxu0 0.0
    %1367 = vmatprep.subr.mxu0 0.0
    %1368 = vmatpush1.xpose.msra.mxu0 0.0
    %1369 = vmatprep.subr.mxu0 0.0
    %1370 = vmatpush1.xpose.msra.mxu0 0.0
    %1371 = vmatprep.subr.mxu0 0.0
    %1372 = vmatpush1.xpose.msra.mxu0 0.0
    %1373 = vmatprep.subr.mxu0 0.0
    %1374 = vmatpush1.xpose.msra.mxu0 0.0
    %1375 = vmatprep.subr.mxu0 0.0
    %1376 = vmatpush1.xpose.msra.mxu0 0.0
    %1377 = vmatprep.subr.mxu0 0.0
    %1378 = vmatpush1.xpose.msra.mxu0 0.0
    %1379 = vmatprep.subr.mxu0 0.0
    %1380 = vmatpush1.xpose.msra.mxu0 0.0
    %1381 = vmatprep.subr.mxu0 0.0
    %1382 = vmatpush1.xpose.msra.mxu0 0.0
    %1383 = vmatprep.subr.mxu0 0.0
    %1384 = vmatpush1.xpose.msra.mxu0 0.0
    %1385 = vmatprep.subr.mxu0 0.0
    %1386 = vmatpush1.xpose.msra.mxu0 0.0
    %1387 = vmatprep.subr.mxu0 0.0
    %1388 = vmatpush1.xpose.msra.mxu0 0.0
    %1389 = vmatprep.subr.mxu0 0.0
    %1390 = vmatpush1.xpose.msra.mxu0 0.0
    %1391 = vmatprep.subr.mxu0 0.0
    %1392 = vmatpush1.xpose.msra.mxu0 0.0
    %1393 = vmatprep.subr.mxu0 0.0
    %1394 = vmatpush1.xpose.msra.mxu0 0.0
    %1395 = vmatprep.subr.mxu0 0.0
    %1396 = vmatpush1.xpose.msra.mxu0 0.0
    %1397 = vmatprep.subr.mxu0 0.0
    %1398 = vmatpush1.xpose.msra.mxu0 0.0
    %1399 = vmatprep.subr.mxu0 0.0
    %1400 = vmatpush1.xpose.msra.mxu0 0.0
    %1401 = vmatprep.subr.mxu0 0.0
    %1402 = vmatpush1.xpose.msra.mxu0 0.0
    %1403 = vmatprep.subr.mxu0 0.0
    %1404 = vmatpush1.xpose.msra.mxu0 0.0
    %1405 = vmatprep.subr.mxu0 0.0
    %1406 = vmatpush1.xpose.msra.mxu0 0.0
    %1407 = vmatprep.subr.mxu0 0.0
    %1408 = vmatpush1.xpose.msra.mxu0 0.0
    %1409 = vmatprep.subr.mxu0 0.0
    %1410 = vmatpush1.xpose.msra.mxu0 0.0
    %1411 = vmatprep.subr.mxu0 0.0
    %1412 = vmatpush1.xpose.msra.mxu0 0.0
    %1413 = vmatprep.subr.mxu0 0.0
    %1414 = vmatpush1.xpose.msra.mxu0 0.0
    %1415 = vmatprep.subr.mxu0 0.0
    %1416 = vmatpush1.xpose.msra.mxu0 0.0
    %1417 = vmatprep.mubr.f32.mxu0 0.0
    %1418 = vmatmul.mubr.f32.gmra.mrb[0].mxu0 %v1349
    %v1419 = vpop.f32.mrb[0].mxu0
    %v1420 = vadd.f32 0.0, %v1419
    %v1421 = vpop.f32.mrb[0].mxu0
    %1422 = vdwg.mxu0
    %v1423 = vsel %vm436, %v1342, -inf
    %1424 = vmax.xlane.f32.xlu0 %v1423
    %v1425 = vpop.xlane.xlu0 %1424
    %v1426 = vsel %vm436, %v1420, -inf
    %1427 = vmax.xlane.f32.xlu0 %v1426
    %v1428 = vpop.xlane.xlu0 %1427
    %v1429 = vsub.f32 %v1342, %v1425
    %v1430 = vsub.f32 %v1420, %v1428
    %v1431 = vmul.f32 %v1429, 1.442695
    %v1432 = vpow.pop %v1431
    %v1433 = vmul.f32 %v1430, 1.442695
    %v1434 = vpow.pop %v1433
    %v1435 = vsel %vm436, %v1432, 0.0
    %1436 = vadd.xlane.f32.xlu0 %v1435
    %v1437 = vpop.xlane.xlu0 %1436
    %v1438 = vsel %vm436, %v1434, 0.0
    %1439 = vadd.xlane.f32.xlu0 %v1438
    %v1440 = vpop.xlane.xlu0 %1439
    %v1441 = vrcp.pop %v1437
    %v1442 = vrcp.pop %v1440
    %v1443 = vmul.f32 %v1432, %v1441
    %v1444 = vmul.f32 %v1434, %v1442
    %1445 = vrot.lane.b32.xlu0 %v273, 80
    %v1446 = vpop.permute.xlu0 %1445
    %v1449 = vsel %vm436, %v1443, 0
    %1451 = vmatprep.subr.mxu0 0.0
    %1452 = vmatpush1.msra.mxu0 %v1446
    %1453 = vmatprep.subr.mxu0 0.0
    %1454 = vmatpush1.msra.mxu0 0.0
    %1455 = vmatprep.subr.mxu0 0.0
    %1456 = vmatpush1.msra.mxu0 0.0
    %1457 = vmatprep.subr.mxu0 0.0
    %1458 = vmatpush1.msra.mxu0 0.0
    %1459 = vmatprep.subr.mxu0 0.0
    %1460 = vmatpush1.msra.mxu0 0.0
    %1461 = vmatprep.subr.mxu0 0.0
    %1462 = vmatpush1.msra.mxu0 0.0
    %1463 = vmatprep.subr.mxu0 0.0
    %1464 = vmatpush1.msra.mxu0 0.0
    %1465 = vmatprep.subr.mxu0 0.0
    %1466 = vmatpush1.msra.mxu0 0.0
    %1467 = vmatprep.subr.mxu0 0.0
    %1468 = vmatpush1.msra.mxu0 0.0
    %1469 = vmatprep.subr.mxu0 0.0
    %1470 = vmatpush1.msra.mxu0 0.0
    %1471 = vmatprep.subr.mxu0 0.0
    %1472 = vmatpush1.msra.mxu0 0.0
    %1473 = vmatprep.subr.mxu0 0.0
    %1474 = vmatpush1.msra.mxu0 0.0
    %1475 = vmatprep.subr.mxu0 0.0
    %1476 = vmatpush1.msra.mxu0 0.0
    %1477 = vmatprep.subr.mxu0 0.0
    %1478 = vmatpush1.msra.mxu0 0.0
    %1479 = vmatprep.subr.mxu0 0.0
    %1480 = vmatpush1.msra.mxu0 0.0
    %1481 = vmatprep.subr.mxu0 0.0
    %1482 = vmatpush1.msra.mxu0 0.0
    %1483 = vmatprep.subr.mxu0 0.0
    %1484 = vmatpush1.msra.mxu0 0.0
    %1485 = vmatprep.subr.mxu0 0.0
    %1486 = vmatpush1.msra.mxu0 0.0
    %1487 = vmatprep.subr.mxu0 0.0
    %1488 = vmatpush1.msra.mxu0 0.0
    %1489 = vmatprep.subr.mxu0 0.0
    %1490 = vmatpush1.msra.mxu0 0.0
    %1491 = vmatprep.subr.mxu0 0.0
    %1492 = vmatpush1.msra.mxu0 0.0
    %1493 = vmatprep.subr.mxu0 0.0
    %1494 = vmatpush1.msra.mxu0 0.0
    %1495 = vmatprep.subr.mxu0 0.0
    %1496 = vmatpush1.msra.mxu0 0.0
    %1497 = vmatprep.subr.mxu0 0.0
    %1498 = vmatpush1.msra.mxu0 0.0
    %1499 = vmatprep.subr.mxu0 0.0
    %1500 = vmatpush1.msra.mxu0 0.0
    %1501 = vmatprep.subr.mxu0 0.0
    %1502 = vmatpush1.msra.mxu0 0.0
    %1503 = vmatprep.subr.mxu0 0.0
    %1504 = vmatpush1.msra.mxu0 0.0
    %1505 = vmatprep.subr.mxu0 0.0
    %1506 = vmatpush1.msra.mxu0 0.0
    %1507 = vmatprep.subr.mxu0 0.0
    %1508 = vmatpush1.msra.mxu0 0.0
    %1509 = vmatprep.subr.mxu0 0.0
    %1510 = vmatpush1.msra.mxu0 0.0
    %1511 = vmatprep.subr.mxu0 0.0
    %1512 = vmatpush1.msra.mxu0 0.0
    %1513 = vmatprep.subr.mxu0 0.0
    %1514 = vmatpush1.msra.mxu0 0.0
    %1515 = vmatprep.mubr.f32.mxu0 0.0
    %1516 = vmatmul.mubr.f32.gmra.mrb[0].mxu0 %v1449
    %v1517 = vpop.f32.mrb[0].mxu0
    %v1518 = vadd.f32 0.0, %v1517
    %v1519 = vpop.f32.mrb[0].mxu0
    %1520 = vdwg.mxu0
    %1521 = vrot.lane.b32.xlu0 %v278, 80
    %v1522 = vpop.permute.xlu0 %1521
    %v1525 = vsel %vm436, %v1444, 0
    %1527 = vmatprep.subr.mxu0 0.0
    %1528 = vmatpush1.msra.mxu0 %v1522
    %1529 = vmatprep.subr.mxu0 0.0
    %1530 = vmatpush1.msra.mxu0 0.0
    %1531 = vmatprep.subr.mxu0 0.0
    %1532 = vmatpush1.msra.mxu0 0.0
    %1533 = vmatprep.subr.mxu0 0.0
    %1534 = vmatpush1.msra.mxu0 0.0
    %1535 = vmatprep.subr.mxu0 0.0
    %1536 = vmatpush1.msra.mxu0 0.0
    %1537 = vmatprep.subr.mxu0 0.0
    %1538 = vmatpush1.msra.mxu0 0.0
    %1539 = vmatprep.subr.mxu0 0.0
    %1540 = vmatpush1.msra.mxu0 0.0
    %1541 = vmatprep.subr.mxu0 0.0
    %1542 = vmatpush1.msra.mxu0 0.0
    %1543 = vmatprep.subr.mxu0 0.0
    %1544 = vmatpush1.msra.mxu0 0.0
    %1545 = vmatprep.subr.mxu0 0.0
    %1546 = vmatpush1.msra.mxu0 0.0
    %1547 = vmatprep.subr.mxu0 0.0
    %1548 = vmatpush1.msra.mxu0 0.0
    %1549 = vmatprep.subr.mxu0 0.0
    %1550 = vmatpush1.msra.mxu0 0.0
    %1551 = vmatprep.subr.mxu0 0.0
    %1552 = vmatpush1.msra.mxu0 0.0
    %1553 = vmatprep.subr.mxu0 0.0
    %1554 = vmatpush1.msra.mxu0 0.0
    %1555 = vmatprep.subr.mxu0 0.0
    %1556 = vmatpush1.msra.mxu0 0.0
    %1557 = vmatprep.subr.mxu0 0.0
    %1558 = vmatpush1.msra.mxu0 0.0
    %1559 = vmatprep.subr.mxu0 0.0
    %1560 = vmatpush1.msra.mxu0 0.0
    %1561 = vmatprep.subr.mxu0 0.0
    %1562 = vmatpush1.msra.mxu0 0.0
    %1563 = vmatprep.subr.mxu0 0.0
    %1564 = vmatpush1.msra.mxu0 0.0
    %1565 = vmatprep.subr.mxu0 0.0
    %1566 = vmatpush1.msra.mxu0 0.0
    %1567 = vmatprep.subr.mxu0 0.0
    %1568 = vmatpush1.msra.mxu0 0.0
    %1569 = vmatprep.subr.mxu0 0.0
    %1570 = vmatpush1.msra.mxu0 0.0
    %1571 = vmatprep.subr.mxu0 0.0
    %1572 = vmatpush1.msra.mxu0 0.0
    %1573 = vmatprep.subr.mxu0 0.0
    %1574 = vmatpush1.msra.mxu0 0.0
    %1575 = vmatprep.subr.mxu0 0.0
    %1576 = vmatpush1.msra.mxu0 0.0
    %1577 = vmatprep.subr.mxu0 0.0
    %1578 = vmatpush1.msra.mxu0 0.0
    %1579 = vmatprep.subr.mxu0 0.0
    %1580 = vmatpush1.msra.mxu0 0.0
    %1581 = vmatprep.subr.mxu0 0.0
    %1582 = vmatpush1.msra.mxu0 0.0
    %1583 = vmatprep.subr.mxu0 0.0
    %1584 = vmatpush1.msra.mxu0 0.0
    %1585 = vmatprep.subr.mxu0 0.0
    %1586 = vmatpush1.msra.mxu0 0.0
    %1587 = vmatprep.subr.mxu0 0.0
    %1588 = vmatpush1.msra.mxu0 0.0
    %1589 = vmatprep.subr.mxu0 0.0
    %1590 = vmatpush1.msra.mxu0 0.0
    %1591 = vmatprep.mubr.f32.mxu0 0.0
    %1592 = vmatmul.mubr.f32.gmra.mrb[0].mxu0 %v1525
    %v1593 = vpop.f32.mrb[0].mxu0
    %v1594 = vadd.f32 0.0, %v1593
    %v1595 = vpop.f32.mrb[0].mxu0
    %1596 = vdwg.mxu0
    %1597 = vrot.lane.b32.xlu0 %v281, 64
    %v1598 = vpop.permute.xlu0 %1597
    %1599 = vrot.lane.b32.xlu0 %v198, 64
    %v1600 = vpop.permute.xlu0 %1599
    %v1601 = vsel %vm283, %v1598, 0
    %v1603 = vsel %vm283, %v1600, 0
    %1605 = vmatprep.subr.mxu0 0.0
    %1606 = vmatpush1.xpose.msra.mxu0 %v1603
    %1607 = vmatprep.subr.mxu0 0.0
    %1608 = vmatpush1.xpose.msra.mxu0 0.0
    %1609 = vmatprep.subr.mxu0 0.0
    %1610 = vmatpush1.xpose.msra.mxu0 0.0
    %1611 = vmatprep.subr.mxu0 0.0
    %1612 = vmatpush1.xpose.msra.mxu0 0.0
    %1613 = vmatprep.subr.mxu0 0.0
    %1614 = vmatpush1.xpose.msra.mxu0 0.0
    %1615 = vmatprep.subr.mxu0 0.0
    %1616 = vmatpush1.xpose.msra.mxu0 0.0
    %1617 = vmatprep.subr.mxu0 0.0
    %1618 = vmatpush1.xpose.msra.mxu0 0.0
    %1619 = vmatprep.subr.mxu0 0.0
    %1620 = vmatpush1.xpose.msra.mxu0 0.0
    %1621 = vmatprep.subr.mxu0 0.0
    %1622 = vmatpush1.xpose.msra.mxu0 0.0
    %1623 = vmatprep.subr.mxu0 0.0
    %1624 = vmatpush1.xpose.msra.mxu0 0.0
    %1625 = vmatprep.subr.mxu0 0.0
    %1626 = vmatpush1.xpose.msra.mxu0 0.0
    %1627 = vmatprep.subr.mxu0 0.0
    %1628 = vmatpush1.xpose.msra.mxu0 0.0
    %1629 = vmatprep.subr.mxu0 0.0
    %1630 = vmatpush1.xpose.msra.mxu0 0.0
    %1631 = vmatprep.subr.mxu0 0.0
    %1632 = vmatpush1.xpose.msra.mxu0 0.0
    %1633 = vmatprep.subr.mxu0 0.0
    %1634 = vmatpush1.xpose.msra.mxu0 0.0
    %1635 = vmatprep.subr.mxu0 0.0
    %1636 = vmatpush1.xpose.msra.mxu0 0.0
    %1637 = vmatprep.subr.mxu0 0.0
    %1638 = vmatpush1.xpose.msra.mxu0 0.0
    %1639 = vmatprep.subr.mxu0 0.0
    %1640 = vmatpush1.xpose.msra.mxu0 0.0
    %1641 = vmatprep.subr.mxu0 0.0
    %1642 = vmatpush1.xpose.msra.mxu0 0.0
    %1643 = vmatprep.subr.mxu0 0.0
    %1644 = vmatpush1.xpose.msra.mxu0 0.0
    %1645 = vmatprep.subr.mxu0 0.0
    %1646 = vmatpush1.xpose.msra.mxu0 0.0
    %1647 = vmatprep.subr.mxu0 0.0
    %1648 = vmatpush1.xpose.msra.mxu0 0.0
    %1649 = vmatprep.subr.mxu0 0.0
    %1650 = vmatpush1.xpose.msra.mxu0 0.0
    %1651 = vmatprep.subr.mxu0 0.0
    %1652 = vmatpush1.xpose.msra.mxu0 0.0
    %1653 = vmatprep.subr.mxu0 0.0
    %1654 = vmatpush1.xpose.msra.mxu0 0.0
    %1655 = vmatprep.subr.mxu0 0.0
    %1656 = vmatpush1.xpose.msra.mxu0 0.0
    %1657 = vmatprep.subr.mxu0 0.0
    %1658 = vmatpush1.xpose.msra.mxu0 0.0
    %1659 = vmatprep.subr.mxu0 0.0
    %1660 = vmatpush1.xpose.msra.mxu0 0.0
    %1661 = vmatprep.subr.mxu0 0.0
    %1662 = vmatpush1.xpose.msra.mxu0 0.0
    %1663 = vmatprep.subr.mxu0 0.0
    %1664 = vmatpush1.xpose.msra.mxu0 0.0
    %1665 = vmatprep.subr.mxu0 0.0
    %1666 = vmatpush1.xpose.msra.mxu0 0.0
    %1667 = vmatprep.subr.mxu0 0.0
    %1668 = vmatpush1.xpose.msra.mxu0 0.0
    %1669 = vmatprep.mubr.f32.mxu0 0.0
    %1670 = vmatmul.mubr.f32.gmra.mrb[0].mxu0 %v1601
    %v1671 = vpop.f32.mrb[0].mxu0
    %v1672 = vadd.f32 0.0, %v1671
    %v1673 = vpop.f32.mrb[0].mxu0
    %1674 = vdwg.mxu0
    %1675 = vrot.lane.b32.xlu0 %v282, 64
    %v1676 = vpop.permute.xlu0 %1675
    %1677 = vrot.lane.b32.xlu0 %v204, 64
    %v1678 = vpop.permute.xlu0 %1677
    %v1679 = vsel %vm283, %v1676, 0
    %v1681 = vsel %vm283, %v1678, 0
    %1683 = vmatprep.subr.mxu0 0.0
    %1684 = vmatpush1.xpose.msra.mxu0 %v1681
    %1685 = vmatprep.subr.mxu0 0.0
    %1686 = vmatpush1.xpose.msra.mxu0 0.0
    %1687 = vmatprep.subr.mxu0 0.0
    %1688 = vmatpush1.xpose.msra.mxu0 0.0
    %1689 = vmatprep.subr.mxu0 0.0
    %1690 = vmatpush1.xpose.msra.mxu0 0.0
    %1691 = vmatprep.subr.mxu0 0.0
    %1692 = vmatpush1.xpose.msra.mxu0 0.0
    %1693 = vmatprep.subr.mxu0 0.0
    %1694 = vmatpush1.xpose.msra.mxu0 0.0
    %1695 = vmatprep.subr.mxu0 0.0
    %1696 = vmatpush1.xpose.msra.mxu0 0.0
    %1697 = vmatprep.subr.mxu0 0.0
    %1698 = vmatpush1.xpose.msra.mxu0 0.0
    %1699 = vmatprep.subr.mxu0 0.0
    %1700 = vmatpush1.xpose.msra.mxu0 0.0
    %1701 = vmatprep.subr.mxu0 0.0
    %1702 = vmatpush1.xpose.msra.mxu0 0.0
    %1703 = vmatprep.subr.mxu0 0.0
    %1704 = vmatpush1.xpose.msra.mxu0 0.0
    %1705 = vmatprep.subr.mxu0 0.0
    %1706 = vmatpush1.xpose.msra.mxu0 0.0
    %1707 = vmatprep.subr.mxu0 0.0
    %1708 = vmatpush1.xpose.msra.mxu0 0.0
    %1709 = vmatprep.subr.mxu0 0.0
    %1710 = vmatpush1.xpose.msra.mxu0 0.0
    %1711 = vmatprep.subr.mxu0 0.0
    %1712 = vmatpush1.xpose.msra.mxu0 0.0
    %1713 = vmatprep.subr.mxu0 0.0
    %1714 = vmatpush1.xpose.msra.mxu0 0.0
    %1715 = vmatprep.subr.mxu0 0.0
    %1716 = vmatpush1.xpose.msra.mxu0 0.0
    %1717 = vmatprep.subr.mxu0 0.0
    %1718 = vmatpush1.xpose.msra.mxu0 0.0
    %1719 = vmatprep.subr.mxu0 0.0
    %1720 = vmatpush1.xpose.msra.mxu0 0.0
    %1721 = vmatprep.subr.mxu0 0.0
    %1722 = vmatpush1.xpose.msra.mxu0 0.0
    %1723 = vmatprep.subr.mxu0 0.0
    %1724 = vmatpush1.xpose.msra.mxu0 0.0
    %1725 = vmatprep.subr.mxu0 0.0
    %1726 = vmatpush1.xpose.msra.mxu0 0.0
    %1727 = vmatprep.subr.mxu0 0.0
    %1728 = vmatpush1.xpose.msra.mxu0 0.0
    %1729 = vmatprep.subr.mxu0 0.0
    %1730 = vmatpush1.xpose.msra.mxu0 0.0
    %1731 = vmatprep.subr.mxu0 0.0
    %1732 = vmatpush1.xpose.msra.mxu0 0.0
    %1733 = vmatprep.subr.mxu0 0.0
    %1734 = vmatpush1.xpose.msra.mxu0 0.0
    %1735 = vmatprep.subr.mxu0 0.0
    %1736 = vmatpush1.xpose.msra.mxu0 0.0
    %1737 = vmatprep.subr.mxu0 0.0
    %1738 = vmatpush1.xpose.msra.mxu0 0.0
    %1739 = vmatprep.subr.mxu0 0.0
    %1740 = vmatpush1.xpose.msra.mxu0 0.0
    %1741 = vmatprep.subr.mxu0 0.0
    %1742 = vmatpush1.xpose.msra.mxu0 0.0
    %1743 = vmatprep.subr.mxu0 0.0
    %1744 = vmatpush1.xpose.msra.mxu0 0.0
    %1745 = vmatprep.subr.mxu0 0.0
    %1746 = vmatpush1.xpose.msra.mxu0 0.0
    %1747 = vmatprep.mubr.f32.mxu0 0.0
    %1748 = vmatmul.mubr.f32.gmra.mrb[0].mxu0 %v1679
    %v1749 = vpop.f32.mrb[0].mxu0
    %v1750 = vadd.f32 0.0, %v1749
    %v1751 = vpop.f32.mrb[0].mxu0
    %1752 = vdwg.mxu0
    %v1753 = vsel %vm436, %v1672, -inf
    %1754 = vmax.xlane.f32.xlu0 %v1753
    %v1755 = vpop.xlane.xlu0 %1754
    %v1756 = vsel %vm436, %v1750, -inf
    %1757 = vmax.xlane.f32.xlu0 %v1756
    %v1758 = vpop.xlane.xlu0 %1757
    %v1759 = vsub.f32 %v1672, %v1755
    %v1760 = vsub.f32 %v1750, %v1758
    %v1761 = vmul.f32 %v1759, 1.442695
    %v1762 = vpow.pop %v1761
    %v1763 = vmul.f32 %v1760, 1.442695
    %v1764 = vpow.pop %v1763
    %v1765 = vsel %vm436, %v1762, 0.0
    %1766 = vadd.xlane.f32.xlu0 %v1765
    %v1767 = vpop.xlane.xlu0 %1766
    %v1768 = vsel %vm436, %v1764, 0.0
    %1769 = vadd.xlane.f32.xlu0 %v1768
    %v1770 = vpop.xlane.xlu0 %1769
    %v1771 = vrcp.pop %v1767
    %v1772 = vrcp.pop %v1770
    %v1773 = vmul.f32 %v1762, %v1771
    %v1774 = vmul.f32 %v1764, %v1772
    %1775 = vrot.lane.b32.xlu0 %v273, 64
    %v1776 = vpop.permute.xlu0 %1775
    %v1779 = vsel %vm436, %v1773, 0
    %1781 = vmatprep.subr.mxu0 0.0
    %1782 = vmatpush1.msra.mxu0 %v1776
    %1783 = vmatprep.subr.mxu0 0.0
    %1784 = vmatpush1.msra.mxu0 0.0
    %1785 = vmatprep.subr.mxu0 0.0
    %1786 = vmatpush1.msra.mxu0 0.0
    %1787 = vmatprep.subr.mxu0 0.0
    %1788 = vmatpush1.msra.mxu0 0.0
    %1789 = vmatprep.subr.mxu0 0.0
    %1790 = vmatpush1.msra.mxu0 0.0
    %1791 = vmatprep.subr.mxu0 0.0
    %1792 = vmatpush1.msra.mxu0 0.0
    %1793 = vmatprep.subr.mxu0 0.0
    %1794 = vmatpush1.msra.mxu0 0.0
    %1795 = vmatprep.subr.mxu0 0.0
    %1796 = vmatpush1.msra.mxu0 0.0
    %1797 = vmatprep.subr.mxu0 0.0
    %1798 = vmatpush1.msra.mxu0 0.0
    %1799 = vmatprep.subr.mxu0 0.0
    %1800 = vmatpush1.msra.mxu0 0.0
    %1801 = vmatprep.subr.mxu0 0.0
    %1802 = vmatpush1.msra.mxu0 0.0
    %1803 = vmatprep.subr.mxu0 0.0
    %1804 = vmatpush1.msra.mxu0 0.0
    %1805 = vmatprep.subr.mxu0 0.0
    %1806 = vmatpush1.msra.mxu0 0.0
    %1807 = vmatprep.subr.mxu0 0.0
    %1808 = vmatpush1.msra.mxu0 0.0
    %1809 = vmatprep.subr.mxu0 0.0
    %1810 = vmatpush1.msra.mxu0 0.0
    %1811 = vmatprep.subr.mxu0 0.0
    %1812 = vmatpush1.msra.mxu0 0.0
    %1813 = vmatprep.subr.mxu0 0.0
    %1814 = vmatpush1.msra.mxu0 0.0
    %1815 = vmatprep.subr.mxu0 0.0
    %1816 = vmatpush1.msra.mxu0 0.0
    %1817 = vmatprep.subr.mxu0 0.0
    %1818 = vmatpush1.msra.mxu0 0.0
    %1819 = vmatprep.subr.mxu0 0.0
    %1820 = vmatpush1.msra.mxu0 0.0
    %1821 = vmatprep.subr.mxu0 0.0
    %1822 = vmatpush1.msra.mxu0 0.0
    %1823 = vmatprep.subr.mxu0 0.0
    %1824 = vmatpush1.msra.mxu0 0.0
    %1825 = vmatprep.subr.mxu0 0.0
    %1826 = vmatpush1.msra.mxu0 0.0
    %1827 = vmatprep.subr.mxu0 0.0
    %1828 = vmatpush1.msra.mxu0 0.0
    %1829 = vmatprep.subr.mxu0 0.0
    %1830 = vmatpush1.msra.mxu0 0.0
    %1831 = vmatprep.subr.mxu0 0.0
    %1832 = vmatpush1.msra.mxu0 0.0
    %1833 = vmatprep.subr.mxu0 0.0
    %1834 = vmatpush1.msra.mxu0 0.0
    %1835 = vmatprep.subr.mxu0 0.0
    %1836 = vmatpush1.msra.mxu0 0.0
    %1837 = vmatprep.subr.mxu0 0.0
    %1838 = vmatpush1.msra.mxu0 0.0
    %1839 = vmatprep.subr.mxu0 0.0
    %1840 = vmatpush1.msra.mxu0 0.0
    %1841 = vmatprep.subr.mxu0 0.0
    %1842 = vmatpush1.msra.mxu0 0.0
    %1843 = vmatprep.subr.mxu0 0.0
    %1844 = vmatpush1.msra.mxu0 0.0
    %1845 = vmatprep.mubr.f32.mxu0 0.0
    %1846 = vmatmul.mubr.f32.gmra.mrb[0].mxu0 %v1779
    %v1847 = vpop.f32.mrb[0].mxu0
    %v1848 = vadd.f32 0.0, %v1847
    %v1849 = vpop.f32.mrb[0].mxu0
    %1850 = vdwg.mxu0
    %1851 = vrot.lane.b32.xlu0 %v278, 64
    %v1852 = vpop.permute.xlu0 %1851
    %v1855 = vsel %vm436, %v1774, 0
    %1857 = vmatprep.subr.mxu0 0.0
    %1858 = vmatpush1.msra.mxu0 %v1852
    %1859 = vmatprep.subr.mxu0 0.0
    %1860 = vmatpush1.msra.mxu0 0.0
    %1861 = vmatprep.subr.mxu0 0.0
    %1862 = vmatpush1.msra.mxu0 0.0
    %1863 = vmatprep.subr.mxu0 0.0
    %1864 = vmatpush1.msra.mxu0 0.0
    %1865 = vmatprep.subr.mxu0 0.0
    %1866 = vmatpush1.msra.mxu0 0.0
    %1867 = vmatprep.subr.mxu0 0.0
    %1868 = vmatpush1.msra.mxu0 0.0
    %1869 = vmatprep.subr.mxu0 0.0
    %1870 = vmatpush1.msra.mxu0 0.0
    %1871 = vmatprep.subr.mxu0 0.0
    %1872 = vmatpush1.msra.mxu0 0.0
    %1873 = vmatprep.subr.mxu0 0.0
    %1874 = vmatpush1.msra.mxu0 0.0
    %1875 = vmatprep.subr.mxu0 0.0
    %1876 = vmatpush1.msra.mxu0 0.0
    %1877 = vmatprep.subr.mxu0 0.0
    %1878 = vmatpush1.msra.mxu0 0.0
    %1879 = vmatprep.subr.mxu0 0.0
    %1880 = vmatpush1.msra.mxu0 0.0
    %1881 = vmatprep.subr.mxu0 0.0
    %1882 = vmatpush1.msra.mxu0 0.0
    %1883 = vmatprep.subr.mxu0 0.0
    %1884 = vmatpush1.msra.mxu0 0.0
    %1885 = vmatprep.subr.mxu0 0.0
    %1886 = vmatpush1.msra.mxu0 0.0
    %1887 = vmatprep.subr.mxu0 0.0
    %1888 = vmatpush1.msra.mxu0 0.0
    %1889 = vmatprep.subr.mxu0 0.0
    %1890 = vmatpush1.msra.mxu0 0.0
    %1891 = vmatprep.subr.mxu0 0.0
    %1892 = vmatpush1.msra.mxu0 0.0
    %1893 = vmatprep.subr.mxu0 0.0
    %1894 = vmatpush1.msra.mxu0 0.0
    %1895 = vmatprep.subr.mxu0 0.0
    %1896 = vmatpush1.msra.mxu0 0.0
    %1897 = vmatprep.subr.mxu0 0.0
    %1898 = vmatpush1.msra.mxu0 0.0
    %1899 = vmatprep.subr.mxu0 0.0
    %1900 = vmatpush1.msra.mxu0 0.0
    %1901 = vmatprep.subr.mxu0 0.0
    %1902 = vmatpush1.msra.mxu0 0.0
    %1903 = vmatprep.subr.mxu0 0.0
    %1904 = vmatpush1.msra.mxu0 0.0
    %1905 = vmatprep.subr.mxu0 0.0
    %1906 = vmatpush1.msra.mxu0 0.0
    %1907 = vmatprep.subr.mxu0 0.0
    %1908 = vmatpush1.msra.mxu0 0.0
    %1909 = vmatprep.subr.mxu0 0.0
    %1910 = vmatpush1.msra.mxu0 0.0
    %1911 = vmatprep.subr.mxu0 0.0
    %1912 = vmatpush1.msra.mxu0 0.0
    %1913 = vmatprep.subr.mxu0 0.0
    %1914 = vmatpush1.msra.mxu0 0.0
    %1915 = vmatprep.subr.mxu0 0.0
    %1916 = vmatpush1.msra.mxu0 0.0
    %1917 = vmatprep.subr.mxu0 0.0
    %1918 = vmatpush1.msra.mxu0 0.0
    %1919 = vmatprep.subr.mxu0 0.0
    %1920 = vmatpush1.msra.mxu0 0.0
    %1921 = vmatprep.mubr.f32.mxu0 0.0
    %1922 = vmatmul.mubr.f32.gmra.mrb[0].mxu0 %v1855
    %v1923 = vpop.f32.mrb[0].mxu0
    %v1924 = vadd.f32 0.0, %v1923
    %v1925 = vpop.f32.mrb[0].mxu0
    %1926 = vdwg.mxu0
    %1927 = vrot.lane.b32.xlu0 %v281, 48
    %v1928 = vpop.permute.xlu0 %1927
    %1929 = vrot.lane.b32.xlu0 %v198, 48
    %v1930 = vpop.permute.xlu0 %1929
    %v1931 = vsel %vm283, %v1928, 0
    %v1933 = vsel %vm283, %v1930, 0
    %1935 = vmatprep.subr.mxu0 0.0
    %1936 = vmatpush1.xpose.msra.mxu0 %v1933
    %1937 = vmatprep.subr.mxu0 0.0
    %1938 = vmatpush1.xpose.msra.mxu0 0.0
    %1939 = vmatprep.subr.mxu0 0.0
    %1940 = vmatpush1.xpose.msra.mxu0 0.0
    %1941 = vmatprep.subr.mxu0 0.0
    %1942 = vmatpush1.xpose.msra.mxu0 0.0
    %1943 = vmatprep.subr.mxu0 0.0
    %1944 = vmatpush1.xpose.msra.mxu0 0.0
    %1945 = vmatprep.subr.mxu0 0.0
    %1946 = vmatpush1.xpose.msra.mxu0 0.0
    %1947 = vmatprep.subr.mxu0 0.0
    %1948 = vmatpush1.xpose.msra.mxu0 0.0
    %1949 = vmatprep.subr.mxu0 0.0
    %1950 = vmatpush1.xpose.msra.mxu0 0.0
    %1951 = vmatprep.subr.mxu0 0.0
    %1952 = vmatpush1.xpose.msra.mxu0 0.0
    %1953 = vmatprep.subr.mxu0 0.0
    %1954 = vmatpush1.xpose.msra.mxu0 0.0
    %1955 = vmatprep.subr.mxu0 0.0
    %1956 = vmatpush1.xpose.msra.mxu0 0.0
    %1957 = vmatprep.subr.mxu0 0.0
    %1958 = vmatpush1.xpose.msra.mxu0 0.0
    %1959 = vmatprep.subr.mxu0 0.0
    %1960 = vmatpush1.xpose.msra.mxu0 0.0
    %1961 = vmatprep.subr.mxu0 0.0
    %1962 = vmatpush1.xpose.msra.mxu0 0.0
    %1963 = vmatprep.subr.mxu0 0.0
    %1964 = vmatpush1.xpose.msra.mxu0 0.0
    %1965 = vmatprep.subr.mxu0 0.0
    %1966 = vmatpush1.xpose.msra.mxu0 0.0
    %1967 = vmatprep.subr.mxu0 0.0
    %1968 = vmatpush1.xpose.msra.mxu0 0.0
    %1969 = vmatprep.subr.mxu0 0.0
    %1970 = vmatpush1.xpose.msra.mxu0 0.0
    %1971 = vmatprep.subr.mxu0 0.0
    %1972 = vmatpush1.xpose.msra.mxu0 0.0
    %1973 = vmatprep.subr.mxu0 0.0
    %1974 = vmatpush1.xpose.msra.mxu0 0.0
    %1975 = vmatprep.subr.mxu0 0.0
    %1976 = vmatpush1.xpose.msra.mxu0 0.0
    %1977 = vmatprep.subr.mxu0 0.0
    %1978 = vmatpush1.xpose.msra.mxu0 0.0
    %1979 = vmatprep.subr.mxu0 0.0
    %1980 = vmatpush1.xpose.msra.mxu0 0.0
    %1981 = vmatprep.subr.mxu0 0.0
    %1982 = vmatpush1.xpose.msra.mxu0 0.0
    %1983 = vmatprep.subr.mxu0 0.0
    %1984 = vmatpush1.xpose.msra.mxu0 0.0
    %1985 = vmatprep.subr.mxu0 0.0
    %1986 = vmatpush1.xpose.msra.mxu0 0.0
    %1987 = vmatprep.subr.mxu0 0.0
    %1988 = vmatpush1.xpose.msra.mxu0 0.0
    %1989 = vmatprep.subr.mxu0 0.0
    %1990 = vmatpush1.xpose.msra.mxu0 0.0
    %1991 = vmatprep.subr.mxu0 0.0
    %1992 = vmatpush1.xpose.msra.mxu0 0.0
    %1993 = vmatprep.subr.mxu0 0.0
    %1994 = vmatpush1.xpose.msra.mxu0 0.0
    %1995 = vmatprep.subr.mxu0 0.0
    %1996 = vmatpush1.xpose.msra.mxu0 0.0
    %1997 = vmatprep.subr.mxu0 0.0
    %1998 = vmatpush1.xpose.msra.mxu0 0.0
    %1999 = vmatprep.mubr.f32.mxu0 0.0
    %2000 = vmatmul.mubr.f32.gmra.mrb[0].mxu0 %v1931
    %v2001 = vpop.f32.mrb[0].mxu0
    %v2002 = vadd.f32 0.0, %v2001
    %v2003 = vpop.f32.mrb[0].mxu0
    %2004 = vdwg.mxu0
    %2005 = vrot.lane.b32.xlu0 %v282, 48
    %v2006 = vpop.permute.xlu0 %2005
    %2007 = vrot.lane.b32.xlu0 %v204, 48
    %v2008 = vpop.permute.xlu0 %2007
    %v2009 = vsel %vm283, %v2006, 0
    %v2011 = vsel %vm283, %v2008, 0
    %2013 = vmatprep.subr.mxu0 0.0
    %2014 = vmatpush1.xpose.msra.mxu0 %v2011
    %2015 = vmatprep.subr.mxu0 0.0
    %2016 = vmatpush1.xpose.msra.mxu0 0.0
    %2017 = vmatprep.subr.mxu0 0.0
    %2018 = vmatpush1.xpose.msra.mxu0 0.0
    %2019 = vmatprep.subr.mxu0 0.0
    %2020 = vmatpush1.xpose.msra.mxu0 0.0
    %2021 = vmatprep.subr.mxu0 0.0
    %2022 = vmatpush1.xpose.msra.mxu0 0.0
    %2023 = vmatprep.subr.mxu0 0.0
    %2024 = vmatpush1.xpose.msra.mxu0 0.0
    %2025 = vmatprep.subr.mxu0 0.0
    %2026 = vmatpush1.xpose.msra.mxu0 0.0
    %2027 = vmatprep.subr.mxu0 0.0
    %2028 = vmatpush1.xpose.msra.mxu0 0.0
    %2029 = vmatprep.subr.mxu0 0.0
    %2030 = vmatpush1.xpose.msra.mxu0 0.0
    %2031 = vmatprep.subr.mxu0 0.0
    %2032 = vmatpush1.xpose.msra.mxu0 0.0
    %2033 = vmatprep.subr.mxu0 0.0
    %2034 = vmatpush1.xpose.msra.mxu0 0.0
    %2035 = vmatprep.subr.mxu0 0.0
    %2036 = vmatpush1.xpose.msra.mxu0 0.0
    %2037 = vmatprep.subr.mxu0 0.0
    %2038 = vmatpush1.xpose.msra.mxu0 0.0
    %2039 = vmatprep.subr.mxu0 0.0
    %2040 = vmatpush1.xpose.msra.mxu0 0.0
    %2041 = vmatprep.subr.mxu0 0.0
    %2042 = vmatpush1.xpose.msra.mxu0 0.0
    %2043 = vmatprep.subr.mxu0 0.0
    %2044 = vmatpush1.xpose.msra.mxu0 0.0
    %2045 = vmatprep.subr.mxu0 0.0
    %2046 = vmatpush1.xpose.msra.mxu0 0.0
    %2047 = vmatprep.subr.mxu0 0.0
    %2048 = vmatpush1.xpose.msra.mxu0 0.0
    %2049 = vmatprep.subr.mxu0 0.0
    %2050 = vmatpush1.xpose.msra.mxu0 0.0
    %2051 = vmatprep.subr.mxu0 0.0
    %2052 = vmatpush1.xpose.msra.mxu0 0.0
    %2053 = vmatprep.subr.mxu0 0.0
    %2054 = vmatpush1.xpose.msra.mxu0 0.0
    %2055 = vmatprep.subr.mxu0 0.0
    %2056 = vmatpush1.xpose.msra.mxu0 0.0
    %2057 = vmatprep.subr.mxu0 0.0
    %2058 = vmatpush1.xpose.msra.mxu0 0.0
    %2059 = vmatprep.subr.mxu0 0.0
    %2060 = vmatpush1.xpose.msra.mxu0 0.0
    %2061 = vmatprep.subr.mxu0 0.0
    %2062 = vmatpush1.xpose.msra.mxu0 0.0
    %2063 = vmatprep.subr.mxu0 0.0
    %2064 = vmatpush1.xpose.msra.mxu0 0.0
    %2065 = vmatprep.subr.mxu0 0.0
    %2066 = vmatpush1.xpose.msra.mxu0 0.0
    %2067 = vmatprep.subr.mxu0 0.0
    %2068 = vmatpush1.xpose.msra.mxu0 0.0
    %2069 = vmatprep.subr.mxu0 0.0
    %2070 = vmatpush1.xpose.msra.mxu0 0.0
    %2071 = vmatprep.subr.mxu0 0.0
    %2072 = vmatpush1.xpose.msra.mxu0 0.0
    %2073 = vmatprep.subr.mxu0 0.0
    %2074 = vmatpush1.xpose.msra.mxu0 0.0
    %2075 = vmatprep.subr.mxu0 0.0
    %2076 = vmatpush1.xpose.msra.mxu0 0.0
    %2077 = vmatprep.mubr.f32.mxu0 0.0
    %2078 = vmatmul.mubr.f32.gmra.mrb[0].mxu0 %v2009
    %v2079 = vpop.f32.mrb[0].mxu0
    %v2080 = vadd.f32 0.0, %v2079
    %v2081 = vpop.f32.mrb[0].mxu0
    %2082 = vdwg.mxu0
    %v2083 = vsel %vm436, %v2002, -inf
    %2084 = vmax.xlane.f32.xlu0 %v2083
    %v2085 = vpop.xlane.xlu0 %2084
    %v2086 = vsel %vm436, %v2080, -inf
    %2087 = vmax.xlane.f32.xlu0 %v2086
    %v2088 = vpop.xlane.xlu0 %2087
    %v2089 = vsub.f32 %v2002, %v2085
    %v2090 = vsub.f32 %v2080, %v2088
    %v2091 = vmul.f32 %v2089, 1.442695
    %v2092 = vpow.pop %v2091
    %v2093 = vmul.f32 %v2090, 1.442695
    %v2094 = vpow.pop %v2093
    %v2095 = vsel %vm436, %v2092, 0.0
    %2096 = vadd.xlane.f32.xlu0 %v2095
    %v2097 = vpop.xlane.xlu0 %2096
    %v2098 = vsel %vm436, %v2094, 0.0
    %2099 = vadd.xlane.f32.xlu0 %v2098
    %v2100 = vpop.xlane.xlu0 %2099
    %v2101 = vrcp.pop %v2097
    %v2102 = vrcp.pop %v2100
    %v2103 = vmul.f32 %v2092, %v2101
    %v2104 = vmul.f32 %v2094, %v2102
    %2105 = vrot.lane.b32.xlu0 %v273, 48
    %v2106 = vpop.permute.xlu0 %2105
    %v2109 = vsel %vm436, %v2103, 0
    %2111 = vmatprep.subr.mxu0 0.0
    %2112 = vmatpush1.msra.mxu0 %v2106
    %2113 = vmatprep.subr.mxu0 0.0
    %2114 = vmatpush1.msra.mxu0 0.0
    %2115 = vmatprep.subr.mxu0 0.0
    %2116 = vmatpush1.msra.mxu0 0.0
    %2117 = vmatprep.subr.mxu0 0.0
    %2118 = vmatpush1.msra.mxu0 0.0
    %2119 = vmatprep.subr.mxu0 0.0
    %2120 = vmatpush1.msra.mxu0 0.0
    %2121 = vmatprep.subr.mxu0 0.0
    %2122 = vmatpush1.msra.mxu0 0.0
    %2123 = vmatprep.subr.mxu0 0.0
    %2124 = vmatpush1.msra.mxu0 0.0
    %2125 = vmatprep.subr.mxu0 0.0
    %2126 = vmatpush1.msra.mxu0 0.0
    %2127 = vmatprep.subr.mxu0 0.0
    %2128 = vmatpush1.msra.mxu0 0.0
    %2129 = vmatprep.subr.mxu0 0.0
    %2130 = vmatpush1.msra.mxu0 0.0
    %2131 = vmatprep.subr.mxu0 0.0
    %2132 = vmatpush1.msra.mxu0 0.0
    %2133 = vmatprep.subr.mxu0 0.0
    %2134 = vmatpush1.msra.mxu0 0.0
    %2135 = vmatprep.subr.mxu0 0.0
    %2136 = vmatpush1.msra.mxu0 0.0
    %2137 = vmatprep.subr.mxu0 0.0
    %2138 = vmatpush1.msra.mxu0 0.0
    %2139 = vmatprep.subr.mxu0 0.0
    %2140 = vmatpush1.msra.mxu0 0.0
    %2141 = vmatprep.subr.mxu0 0.0
    %2142 = vmatpush1.msra.mxu0 0.0
    %2143 = vmatprep.subr.mxu0 0.0
    %2144 = vmatpush1.msra.mxu0 0.0
    %2145 = vmatprep.subr.mxu0 0.0
    %2146 = vmatpush1.msra.mxu0 0.0
    %2147 = vmatprep.subr.mxu0 0.0
    %2148 = vmatpush1.msra.mxu0 0.0
    %2149 = vmatprep.subr.mxu0 0.0
    %2150 = vmatpush1.msra.mxu0 0.0
    %2151 = vmatprep.subr.mxu0 0.0
    %2152 = vmatpush1.msra.mxu0 0.0
    %2153 = vmatprep.subr.mxu0 0.0
    %2154 = vmatpush1.msra.mxu0 0.0
    %2155 = vmatprep.subr.mxu0 0.0
    %2156 = vmatpush1.msra.mxu0 0.0
    %2157 = vmatprep.subr.mxu0 0.0
    %2158 = vmatpush1.msra.mxu0 0.0
    %2159 = vmatprep.subr.mxu0 0.0
    %2160 = vmatpush1.msra.mxu0 0.0
    %2161 = vmatprep.subr.mxu0 0.0
    %2162 = vmatpush1.msra.mxu0 0.0
    %2163 = vmatprep.subr.mxu0 0.0
    %2164 = vmatpush1.msra.mxu0 0.0
    %2165 = vmatprep.subr.mxu0 0.0
    %2166 = vmatpush1.msra.mxu0 0.0
    %2167 = vmatprep.subr.mxu0 0.0
    %2168 = vmatpush1.msra.mxu0 0.0
    %2169 = vmatprep.subr.mxu0 0.0
    %2170 = vmatpush1.msra.mxu0 0.0
    %2171 = vmatprep.subr.mxu0 0.0
    %2172 = vmatpush1.msra.mxu0 0.0
    %2173 = vmatprep.subr.mxu0 0.0
    %2174 = vmatpush1.msra.mxu0 0.0
    %2175 = vmatprep.mubr.f32.mxu0 0.0
    %2176 = vmatmul.mubr.f32.gmra.mrb[0].mxu0 %v2109
    %v2177 = vpop.f32.mrb[0].mxu0
    %v2178 = vadd.f32 0.0, %v2177
    %v2179 = vpop.f32.mrb[0].mxu0
    %2180 = vdwg.mxu0
    %2181 = vrot.lane.b32.xlu0 %v278, 48
    %v2182 = vpop.permute.xlu0 %2181
    %v2185 = vsel %vm436, %v2104, 0
    %2187 = vmatprep.subr.mxu0 0.0
    %2188 = vmatpush1.msra.mxu0 %v2182
    %2189 = vmatprep.subr.mxu0 0.0
    %2190 = vmatpush1.msra.mxu0 0.0
    %2191 = vmatprep.subr.mxu0 0.0
    %2192 = vmatpush1.msra.mxu0 0.0
    %2193 = vmatprep.subr.mxu0 0.0
    %2194 = vmatpush1.msra.mxu0 0.0
    %2195 = vmatprep.subr.mxu0 0.0
    %2196 = vmatpush1.msra.mxu0 0.0
    %2197 = vmatprep.subr.mxu0 0.0
    %2198 = vmatpush1.msra.mxu0 0.0
    %2199 = vmatprep.subr.mxu0 0.0
    %2200 = vmatpush1.msra.mxu0 0.0
    %2201 = vmatprep.subr.mxu0 0.0
    %2202 = vmatpush1.msra.mxu0 0.0
    %2203 = vmatprep.subr.mxu0 0.0
    %2204 = vmatpush1.msra.mxu0 0.0
    %2205 = vmatprep.subr.mxu0 0.0
    %2206 = vmatpush1.msra.mxu0 0.0
    %2207 = vmatprep.subr.mxu0 0.0
    %2208 = vmatpush1.msra.mxu0 0.0
    %2209 = vmatprep.subr.mxu0 0.0
    %2210 = vmatpush1.msra.mxu0 0.0
    %2211 = vmatprep.subr.mxu0 0.0
    %2212 = vmatpush1.msra.mxu0 0.0
    %2213 = vmatprep.subr.mxu0 0.0
    %2214 = vmatpush1.msra.mxu0 0.0
    %2215 = vmatprep.subr.mxu0 0.0
    %2216 = vmatpush1.msra.mxu0 0.0
    %2217 = vmatprep.subr.mxu0 0.0
    %2218 = vmatpush1.msra.mxu0 0.0
    %2219 = vmatprep.subr.mxu0 0.0
    %2220 = vmatpush1.msra.mxu0 0.0
    %2221 = vmatprep.subr.mxu0 0.0
    %2222 = vmatpush1.msra.mxu0 0.0
    %2223 = vmatprep.subr.mxu0 0.0
    %2224 = vmatpush1.msra.mxu0 0.0
    %2225 = vmatprep.subr.mxu0 0.0
    %2226 = vmatpush1.msra.mxu0 0.0
    %2227 = vmatprep.subr.mxu0 0.0
    %2228 = vmatpush1.msra.mxu0 0.0
    %2229 = vmatprep.subr.mxu0 0.0
    %2230 = vmatpush1.msra.mxu0 0.0
    %2231 = vmatprep.subr.mxu0 0.0
    %2232 = vmatpush1.msra.mxu0 0.0
    %2233 = vmatprep.subr.mxu0 0.0
    %2234 = vmatpush1.msra.mxu0 0.0
    %2235 = vmatprep.subr.mxu0 0.0
    %2236 = vmatpush1.msra.mxu0 0.0
    %2237 = vmatprep.subr.mxu0 0.0
    %2238 = vmatpush1.msra.mxu0 0.0
    %2239 = vmatprep.subr.mxu0 0.0
    %2240 = vmatpush1.msra.mxu0 0.0
    %2241 = vmatprep.subr.mxu0 0.0
    %2242 = vmatpush1.msra.mxu0 0.0
    %2243 = vmatprep.subr.mxu0 0.0
    %2244 = vmatpush1.msra.mxu0 0.0
    %2245 = vmatprep.subr.mxu0 0.0
    %2246 = vmatpush1.msra.mxu0 0.0
    %2247 = vmatprep.subr.mxu0 0.0
    %2248 = vmatpush1.msra.mxu0 0.0
    %2249 = vmatprep.subr.mxu0 0.0
    %2250 = vmatpush1.msra.mxu0 0.0
    %2251 = vmatprep.mubr.f32.mxu0 0.0
    %2252 = vmatmul.mubr.f32.gmra.mrb[0].mxu0 %v2185
    %v2253 = vpop.f32.mrb[0].mxu0
    %v2254 = vadd.f32 0.0, %v2253
    %v2255 = vpop.f32.mrb[0].mxu0
    %2256 = vdwg.mxu0
    %2257 = vrot.lane.b32.xlu0 %v281, 32
    %v2258 = vpop.permute.xlu0 %2257
    %2259 = vrot.lane.b32.xlu0 %v198, 32
    %v2260 = vpop.permute.xlu0 %2259
    %v2261 = vsel %vm283, %v2258, 0
    %v2263 = vsel %vm283, %v2260, 0
    %2265 = vmatprep.subr.mxu0 0.0
    %2266 = vmatpush1.xpose.msra.mxu0 %v2263
    %2267 = vmatprep.subr.mxu0 0.0
    %2268 = vmatpush1.xpose.msra.mxu0 0.0
    %2269 = vmatprep.subr.mxu0 0.0
    %2270 = vmatpush1.xpose.msra.mxu0 0.0
    %2271 = vmatprep.subr.mxu0 0.0
    %2272 = vmatpush1.xpose.msra.mxu0 0.0
    %2273 = vmatprep.subr.mxu0 0.0
    %2274 = vmatpush1.xpose.msra.mxu0 0.0
    %2275 = vmatprep.subr.mxu0 0.0
    %2276 = vmatpush1.xpose.msra.mxu0 0.0
    %2277 = vmatprep.subr.mxu0 0.0
    %2278 = vmatpush1.xpose.msra.mxu0 0.0
    %2279 = vmatprep.subr.mxu0 0.0
    %2280 = vmatpush1.xpose.msra.mxu0 0.0
    %2281 = vmatprep.subr.mxu0 0.0
    %2282 = vmatpush1.xpose.msra.mxu0 0.0
    %2283 = vmatprep.subr.mxu0 0.0
    %2284 = vmatpush1.xpose.msra.mxu0 0.0
    %2285 = vmatprep.subr.mxu0 0.0
    %2286 = vmatpush1.xpose.msra.mxu0 0.0
    %2287 = vmatprep.subr.mxu0 0.0
    %2288 = vmatpush1.xpose.msra.mxu0 0.0
    %2289 = vmatprep.subr.mxu0 0.0
    %2290 = vmatpush1.xpose.msra.mxu0 0.0
    %2291 = vmatprep.subr.mxu0 0.0
    %2292 = vmatpush1.xpose.msra.mxu0 0.0
    %2293 = vmatprep.subr.mxu0 0.0
    %2294 = vmatpush1.xpose.msra.mxu0 0.0
    %2295 = vmatprep.subr.mxu0 0.0
    %2296 = vmatpush1.xpose.msra.mxu0 0.0
    %2297 = vmatprep.subr.mxu0 0.0
    %2298 = vmatpush1.xpose.msra.mxu0 0.0
    %2299 = vmatprep.subr.mxu0 0.0
    %2300 = vmatpush1.xpose.msra.mxu0 0.0
    %2301 = vmatprep.subr.mxu0 0.0
    %2302 = vmatpush1.xpose.msra.mxu0 0.0
    %2303 = vmatprep.subr.mxu0 0.0
    %2304 = vmatpush1.xpose.msra.mxu0 0.0
    %2305 = vmatprep.subr.mxu0 0.0
    %2306 = vmatpush1.xpose.msra.mxu0 0.0
    %2307 = vmatprep.subr.mxu0 0.0
    %2308 = vmatpush1.xpose.msra.mxu0 0.0
    %2309 = vmatprep.subr.mxu0 0.0
    %2310 = vmatpush1.xpose.msra.mxu0 0.0
    %2311 = vmatprep.subr.mxu0 0.0
    %2312 = vmatpush1.xpose.msra.mxu0 0.0
    %2313 = vmatprep.subr.mxu0 0.0
    %2314 = vmatpush1.xpose.msra.mxu0 0.0
    %2315 = vmatprep.subr.mxu0 0.0
    %2316 = vmatpush1.xpose.msra.mxu0 0.0
    %2317 = vmatprep.subr.mxu0 0.0
    %2318 = vmatpush1.xpose.msra.mxu0 0.0
    %2319 = vmatprep.subr.mxu0 0.0
    %2320 = vmatpush1.xpose.msra.mxu0 0.0
    %2321 = vmatprep.subr.mxu0 0.0
    %2322 = vmatpush1.xpose.msra.mxu0 0.0
    %2323 = vmatprep.subr.mxu0 0.0
    %2324 = vmatpush1.xpose.msra.mxu0 0.0
    %2325 = vmatprep.subr.mxu0 0.0
    %2326 = vmatpush1.xpose.msra.mxu0 0.0
    %2327 = vmatprep.subr.mxu0 0.0
    %2328 = vmatpush1.xpose.msra.mxu0 0.0
    %2329 = vmatprep.mubr.f32.mxu0 0.0
    %2330 = vmatmul.mubr.f32.gmra.mrb[0].mxu0 %v2261
    %v2331 = vpop.f32.mrb[0].mxu0
    %v2332 = vadd.f32 0.0, %v2331
    %v2333 = vpop.f32.mrb[0].mxu0
    %2334 = vdwg.mxu0
    %2335 = vrot.lane.b32.xlu0 %v282, 32
    %v2336 = vpop.permute.xlu0 %2335
    %2337 = vrot.lane.b32.xlu0 %v204, 32
    %v2338 = vpop.permute.xlu0 %2337
    %v2339 = vsel %vm283, %v2336, 0
    %v2341 = vsel %vm283, %v2338, 0
    %2343 = vmatprep.subr.mxu0 0.0
    %2344 = vmatpush1.xpose.msra.mxu0 %v2341
    %2345 = vmatprep.subr.mxu0 0.0
    %2346 = vmatpush1.xpose.msra.mxu0 0.0
    %2347 = vmatprep.subr.mxu0 0.0
    %2348 = vmatpush1.xpose.msra.mxu0 0.0
    %2349 = vmatprep.subr.mxu0 0.0
    %2350 = vmatpush1.xpose.msra.mxu0 0.0
    %2351 = vmatprep.subr.mxu0 0.0
    %2352 = vmatpush1.xpose.msra.mxu0 0.0
    %2353 = vmatprep.subr.mxu0 0.0
    %2354 = vmatpush1.xpose.msra.mxu0 0.0
    %2355 = vmatprep.subr.mxu0 0.0
    %2356 = vmatpush1.xpose.msra.mxu0 0.0
    %2357 = vmatprep.subr.mxu0 0.0
    %2358 = vmatpush1.xpose.msra.mxu0 0.0
    %2359 = vmatprep.subr.mxu0 0.0
    %2360 = vmatpush1.xpose.msra.mxu0 0.0
    %2361 = vmatprep.subr.mxu0 0.0
    %2362 = vmatpush1.xpose.msra.mxu0 0.0
    %2363 = vmatprep.subr.mxu0 0.0
    %2364 = vmatpush1.xpose.msra.mxu0 0.0
    %2365 = vmatprep.subr.mxu0 0.0
    %2366 = vmatpush1.xpose.msra.mxu0 0.0
    %2367 = vmatprep.subr.mxu0 0.0
    %2368 = vmatpush1.xpose.msra.mxu0 0.0
    %2369 = vmatprep.subr.mxu0 0.0
    %2370 = vmatpush1.xpose.msra.mxu0 0.0
    %2371 = vmatprep.subr.mxu0 0.0
    %2372 = vmatpush1.xpose.msra.mxu0 0.0
    %2373 = vmatprep.subr.mxu0 0.0
    %2374 = vmatpush1.xpose.msra.mxu0 0.0
    %2375 = vmatprep.subr.mxu0 0.0
    %2376 = vmatpush1.xpose.msra.mxu0 0.0
    %2377 = vmatprep.subr.mxu0 0.0
    %2378 = vmatpush1.xpose.msra.mxu0 0.0
    %2379 = vmatprep.subr.mxu0 0.0
    %2380 = vmatpush1.xpose.msra.mxu0 0.0
    %2381 = vmatprep.subr.mxu0 0.0
    %2382 = vmatpush1.xpose.msra.mxu0 0.0
    %2383 = vmatprep.subr.mxu0 0.0
    %2384 = vmatpush1.xpose.msra.mxu0 0.0
    %2385 = vmatprep.subr.mxu0 0.0
    %2386 = vmatpush1.xpose.msra.mxu0 0.0
    %2387 = vmatprep.subr.mxu0 0.0
    %2388 = vmatpush1.xpose.msra.mxu0 0.0
    %2389 = vmatprep.subr.mxu0 0.0
    %2390 = vmatpush1.xpose.msra.mxu0 0.0
    %2391 = vmatprep.subr.mxu0 0.0
    %2392 = vmatpush1.xpose.msra.mxu0 0.0
    %2393 = vmatprep.subr.mxu0 0.0
    %2394 = vmatpush1.xpose.msra.mxu0 0.0
    %2395 = vmatprep.subr.mxu0 0.0
    %2396 = vmatpush1.xpose.msra.mxu0 0.0
    %2397 = vmatprep.subr.mxu0 0.0
    %2398 = vmatpush1.xpose.msra.mxu0 0.0
    %2399 = vmatprep.subr.mxu0 0.0
    %2400 = vmatpush1.xpose.msra.mxu0 0.0
    %2401 = vmatprep.subr.mxu0 0.0
    %2402 = vmatpush1.xpose.msra.mxu0 0.0
    %2403 = vmatprep.subr.mxu0 0.0
    %2404 = vmatpush1.xpose.msra.mxu0 0.0
    %2405 = vmatprep.subr.mxu0 0.0
    %2406 = vmatpush1.xpose.msra.mxu0 0.0
    %2407 = vmatprep.mubr.f32.mxu0 0.0
    %2408 = vmatmul.mubr.f32.gmra.mrb[0].mxu0 %v2339
    %v2409 = vpop.f32.mrb[0].mxu0
    %v2410 = vadd.f32 0.0, %v2409
    %v2411 = vpop.f32.mrb[0].mxu0
    %2412 = vdwg.mxu0
    %v2413 = vsel %vm436, %v2332, -inf
    %2414 = vmax.xlane.f32.xlu0 %v2413
    %v2415 = vpop.xlane.xlu0 %2414
    %v2416 = vsel %vm436, %v2410, -inf
    %2417 = vmax.xlane.f32.xlu0 %v2416
    %v2418 = vpop.xlane.xlu0 %2417
    %v2419 = vsub.f32 %v2332, %v2415
    %v2420 = vsub.f32 %v2410, %v2418
    %v2421 = vmul.f32 %v2419, 1.442695
    %v2422 = vpow.pop %v2421
    %v2423 = vmul.f32 %v2420, 1.442695
    %v2424 = vpow.pop %v2423
    %v2425 = vsel %vm436, %v2422, 0.0
    %2426 = vadd.xlane.f32.xlu0 %v2425
    %v2427 = vpop.xlane.xlu0 %2426
    %v2428 = vsel %vm436, %v2424, 0.0
    %2429 = vadd.xlane.f32.xlu0 %v2428
    %v2430 = vpop.xlane.xlu0 %2429
    %v2431 = vrcp.pop %v2427
    %v2432 = vrcp.pop %v2430
    %v2433 = vmul.f32 %v2422, %v2431
    %v2434 = vmul.f32 %v2424, %v2432
    %2435 = vrot.lane.b32.xlu0 %v273, 32
    %v2436 = vpop.permute.xlu0 %2435
    %v2439 = vsel %vm436, %v2433, 0
    %2441 = vmatprep.subr.mxu0 0.0
    %2442 = vmatpush1.msra.mxu0 %v2436
    %2443 = vmatprep.subr.mxu0 0.0
    %2444 = vmatpush1.msra.mxu0 0.0
    %2445 = vmatprep.subr.mxu0 0.0
    %2446 = vmatpush1.msra.mxu0 0.0
    %2447 = vmatprep.subr.mxu0 0.0
    %2448 = vmatpush1.msra.mxu0 0.0
    %2449 = vmatprep.subr.mxu0 0.0
    %2450 = vmatpush1.msra.mxu0 0.0
    %2451 = vmatprep.subr.mxu0 0.0
    %2452 = vmatpush1.msra.mxu0 0.0
    %2453 = vmatprep.subr.mxu0 0.0
    %2454 = vmatpush1.msra.mxu0 0.0
    %2455 = vmatprep.subr.mxu0 0.0
    %2456 = vmatpush1.msra.mxu0 0.0
    %2457 = vmatprep.subr.mxu0 0.0
    %2458 = vmatpush1.msra.mxu0 0.0
    %2459 = vmatprep.subr.mxu0 0.0
    %2460 = vmatpush1.msra.mxu0 0.0
    %2461 = vmatprep.subr.mxu0 0.0
    %2462 = vmatpush1.msra.mxu0 0.0
    %2463 = vmatprep.subr.mxu0 0.0
    %2464 = vmatpush1.msra.mxu0 0.0
    %2465 = vmatprep.subr.mxu0 0.0
    %2466 = vmatpush1.msra.mxu0 0.0
    %2467 = vmatprep.subr.mxu0 0.0
    %2468 = vmatpush1.msra.mxu0 0.0
    %2469 = vmatprep.subr.mxu0 0.0
    %2470 = vmatpush1.msra.mxu0 0.0
    %2471 = vmatprep.subr.mxu0 0.0
    %2472 = vmatpush1.msra.mxu0 0.0
    %2473 = vmatprep.subr.mxu0 0.0
    %2474 = vmatpush1.msra.mxu0 0.0
    %2475 = vmatprep.subr.mxu0 0.0
    %2476 = vmatpush1.msra.mxu0 0.0
    %2477 = vmatprep.subr.mxu0 0.0
    %2478 = vmatpush1.msra.mxu0 0.0
    %2479 = vmatprep.subr.mxu0 0.0
    %2480 = vmatpush1.msra.mxu0 0.0
    %2481 = vmatprep.subr.mxu0 0.0
    %2482 = vmatpush1.msra.mxu0 0.0
    %2483 = vmatprep.subr.mxu0 0.0
    %2484 = vmatpush1.msra.mxu0 0.0
    %2485 = vmatprep.subr.mxu0 0.0
    %2486 = vmatpush1.msra.mxu0 0.0
    %2487 = vmatprep.subr.mxu0 0.0
    %2488 = vmatpush1.msra.mxu0 0.0
    %2489 = vmatprep.subr.mxu0 0.0
    %2490 = vmatpush1.msra.mxu0 0.0
    %2491 = vmatprep.subr.mxu0 0.0
    %2492 = vmatpush1.msra.mxu0 0.0
    %2493 = vmatprep.subr.mxu0 0.0
    %2494 = vmatpush1.msra.mxu0 0.0
    %2495 = vmatprep.subr.mxu0 0.0
    %2496 = vmatpush1.msra.mxu0 0.0
    %2497 = vmatprep.subr.mxu0 0.0
    %2498 = vmatpush1.msra.mxu0 0.0
    %2499 = vmatprep.subr.mxu0 0.0
    %2500 = vmatpush1.msra.mxu0 0.0
    %2501 = vmatprep.subr.mxu0 0.0
    %2502 = vmatpush1.msra.mxu0 0.0
    %2503 = vmatprep.subr.mxu0 0.0
    %2504 = vmatpush1.msra.mxu0 0.0
    %2505 = vmatprep.mubr.f32.mxu0 0.0
    %2506 = vmatmul.mubr.f32.gmra.mrb[0].mxu0 %v2439
    %v2507 = vpop.f32.mrb[0].mxu0
    %v2508 = vadd.f32 0.0, %v2507
    %v2509 = vpop.f32.mrb[0].mxu0
    %2510 = vdwg.mxu0
    %2511 = vrot.lane.b32.xlu0 %v278, 32
    %v2512 = vpop.permute.xlu0 %2511
    %v2515 = vsel %vm436, %v2434, 0
    %2517 = vmatprep.subr.mxu0 0.0
    %2518 = vmatpush1.msra.mxu0 %v2512
    %2519 = vmatprep.subr.mxu0 0.0
    %2520 = vmatpush1.msra.mxu0 0.0
    %2521 = vmatprep.subr.mxu0 0.0
    %2522 = vmatpush1.msra.mxu0 0.0
    %2523 = vmatprep.subr.mxu0 0.0
    %2524 = vmatpush1.msra.mxu0 0.0
    %2525 = vmatprep.subr.mxu0 0.0
    %2526 = vmatpush1.msra.mxu0 0.0
    %2527 = vmatprep.subr.mxu0 0.0
    %2528 = vmatpush1.msra.mxu0 0.0
    %2529 = vmatprep.subr.mxu0 0.0
    %2530 = vmatpush1.msra.mxu0 0.0
    %2531 = vmatprep.subr.mxu0 0.0
    %2532 = vmatpush1.msra.mxu0 0.0
    %2533 = vmatprep.subr.mxu0 0.0
    %2534 = vmatpush1.msra.mxu0 0.0
    %2535 = vmatprep.subr.mxu0 0.0
    %2536 = vmatpush1.msra.mxu0 0.0
    %2537 = vmatprep.subr.mxu0 0.0
    %2538 = vmatpush1.msra.mxu0 0.0
    %2539 = vmatprep.subr.mxu0 0.0
    %2540 = vmatpush1.msra.mxu0 0.0
    %2541 = vmatprep.subr.mxu0 0.0
    %2542 = vmatpush1.msra.mxu0 0.0
    %2543 = vmatprep.subr.mxu0 0.0
    %2544 = vmatpush1.msra.mxu0 0.0
    %2545 = vmatprep.subr.mxu0 0.0
    %2546 = vmatpush1.msra.mxu0 0.0
    %2547 = vmatprep.subr.mxu0 0.0
    %2548 = vmatpush1.msra.mxu0 0.0
    %2549 = vmatprep.subr.mxu0 0.0
    %2550 = vmatpush1.msra.mxu0 0.0
    %2551 = vmatprep.subr.mxu0 0.0
    %2552 = vmatpush1.msra.mxu0 0.0
    %2553 = vmatprep.subr.mxu0 0.0
    %2554 = vmatpush1.msra.mxu0 0.0
    %2555 = vmatprep.subr.mxu0 0.0
    %2556 = vmatpush1.msra.mxu0 0.0
    %2557 = vmatprep.subr.mxu0 0.0
    %2558 = vmatpush1.msra.mxu0 0.0
    %2559 = vmatprep.subr.mxu0 0.0
    %2560 = vmatpush1.msra.mxu0 0.0
    %2561 = vmatprep.subr.mxu0 0.0
    %2562 = vmatpush1.msra.mxu0 0.0
    %2563 = vmatprep.subr.mxu0 0.0
    %2564 = vmatpush1.msra.mxu0 0.0
    %2565 = vmatprep.subr.mxu0 0.0
    %2566 = vmatpush1.msra.mxu0 0.0
    %2567 = vmatprep.subr.mxu0 0.0
    %2568 = vmatpush1.msra.mxu0 0.0
    %2569 = vmatprep.subr.mxu0 0.0
    %2570 = vmatpush1.msra.mxu0 0.0
    %2571 = vmatprep.subr.mxu0 0.0
    %2572 = vmatpush1.msra.mxu0 0.0
    %2573 = vmatprep.subr.mxu0 0.0
    %2574 = vmatpush1.msra.mxu0 0.0
    %2575 = vmatprep.subr.mxu0 0.0
    %2576 = vmatpush1.msra.mxu0 0.0
    %2577 = vmatprep.subr.mxu0 0.0
    %2578 = vmatpush1.msra.mxu0 0.0
    %2579 = vmatprep.subr.mxu0 0.0
    %2580 = vmatpush1.msra.mxu0 0.0
    %2581 = vmatprep.mubr.f32.mxu0 0.0
    %2582 = vmatmul.mubr.f32.gmra.mrb[0].mxu0 %v2515
    %v2583 = vpop.f32.mrb[0].mxu0
    %v2584 = vadd.f32 0.0, %v2583
    %v2585 = vpop.f32.mrb[0].mxu0
    %2586 = vdwg.mxu0
    %2587 = vrot.lane.b32.xlu0 %v281, 16
    %v2588 = vpop.permute.xlu0 %2587
    %2589 = vrot.lane.b32.xlu0 %v198, 16
    %v2590 = vpop.permute.xlu0 %2589
    %v2591 = vsel %vm283, %v2588, 0
    %v2593 = vsel %vm283, %v2590, 0
    %2595 = vmatprep.subr.mxu0 0.0
    %2596 = vmatpush1.xpose.msra.mxu0 %v2593
    %2597 = vmatprep.subr.mxu0 0.0
    %2598 = vmatpush1.xpose.msra.mxu0 0.0
    %2599 = vmatprep.subr.mxu0 0.0
    %2600 = vmatpush1.xpose.msra.mxu0 0.0
    %2601 = vmatprep.subr.mxu0 0.0
    %2602 = vmatpush1.xpose.msra.mxu0 0.0
    %2603 = vmatprep.subr.mxu0 0.0
    %2604 = vmatpush1.xpose.msra.mxu0 0.0
    %2605 = vmatprep.subr.mxu0 0.0
    %2606 = vmatpush1.xpose.msra.mxu0 0.0
    %2607 = vmatprep.subr.mxu0 0.0
    %2608 = vmatpush1.xpose.msra.mxu0 0.0
    %2609 = vmatprep.subr.mxu0 0.0
    %2610 = vmatpush1.xpose.msra.mxu0 0.0
    %2611 = vmatprep.subr.mxu0 0.0
    %2612 = vmatpush1.xpose.msra.mxu0 0.0
    %2613 = vmatprep.subr.mxu0 0.0
    %2614 = vmatpush1.xpose.msra.mxu0 0.0
    %2615 = vmatprep.subr.mxu0 0.0
    %2616 = vmatpush1.xpose.msra.mxu0 0.0
    %2617 = vmatprep.subr.mxu0 0.0
    %2618 = vmatpush1.xpose.msra.mxu0 0.0
    %2619 = vmatprep.subr.mxu0 0.0
    %2620 = vmatpush1.xpose.msra.mxu0 0.0
    %2621 = vmatprep.subr.mxu0 0.0
    %2622 = vmatpush1.xpose.msra.mxu0 0.0
    %2623 = vmatprep.subr.mxu0 0.0
    %2624 = vmatpush1.xpose.msra.mxu0 0.0
    %2625 = vmatprep.subr.mxu0 0.0
    %2626 = vmatpush1.xpose.msra.mxu0 0.0
    %2627 = vmatprep.subr.mxu0 0.0
    %2628 = vmatpush1.xpose.msra.mxu0 0.0
    %2629 = vmatprep.subr.mxu0 0.0
    %2630 = vmatpush1.xpose.msra.mxu0 0.0
    %2631 = vmatprep.subr.mxu0 0.0
    %2632 = vmatpush1.xpose.msra.mxu0 0.0
    %2633 = vmatprep.subr.mxu0 0.0
    %2634 = vmatpush1.xpose.msra.mxu0 0.0
    %2635 = vmatprep.subr.mxu0 0.0
    %2636 = vmatpush1.xpose.msra.mxu0 0.0
    %2637 = vmatprep.subr.mxu0 0.0
    %2638 = vmatpush1.xpose.msra.mxu0 0.0
    %2639 = vmatprep.subr.mxu0 0.0
    %2640 = vmatpush1.xpose.msra.mxu0 0.0
    %2641 = vmatprep.subr.mxu0 0.0
    %2642 = vmatpush1.xpose.msra.mxu0 0.0
    %2643 = vmatprep.subr.mxu0 0.0
    %2644 = vmatpush1.xpose.msra.mxu0 0.0
    %2645 = vmatprep.subr.mxu0 0.0
    %2646 = vmatpush1.xpose.msra.mxu0 0.0
    %2647 = vmatprep.subr.mxu0 0.0
    %2648 = vmatpush1.xpose.msra.mxu0 0.0
    %2649 = vmatprep.subr.mxu0 0.0
    %2650 = vmatpush1.xpose.msra.mxu0 0.0
    %2651 = vmatprep.subr.mxu0 0.0
    %2652 = vmatpush1.xpose.msra.mxu0 0.0
    %2653 = vmatprep.subr.mxu0 0.0
    %2654 = vmatpush1.xpose.msra.mxu0 0.0
    %2655 = vmatprep.subr.mxu0 0.0
    %2656 = vmatpush1.xpose.msra.mxu0 0.0
    %2657 = vmatprep.subr.mxu0 0.0
    %2658 = vmatpush1.xpose.msra.mxu0 0.0
    %2659 = vmatprep.mubr.f32.mxu0 0.0
    %2660 = vmatmul.mubr.f32.gmra.mrb[0].mxu0 %v2591
    %v2661 = vpop.f32.mrb[0].mxu0
    %v2662 = vadd.f32 0.0, %v2661
    %v2663 = vpop.f32.mrb[0].mxu0
    %2664 = vdwg.mxu0
    %2665 = vrot.lane.b32.xlu0 %v282, 16
    %v2666 = vpop.permute.xlu0 %2665
    %2667 = vrot.lane.b32.xlu0 %v204, 16
    %v2668 = vpop.permute.xlu0 %2667
    %v2669 = vsel %vm283, %v2666, 0
    %v2671 = vsel %vm283, %v2668, 0
    %2673 = vmatprep.subr.mxu0 0.0
    %2674 = vmatpush1.xpose.msra.mxu0 %v2671
    %2675 = vmatprep.subr.mxu0 0.0
    %2676 = vmatpush1.xpose.msra.mxu0 0.0
    %2677 = vmatprep.subr.mxu0 0.0
    %2678 = vmatpush1.xpose.msra.mxu0 0.0
    %2679 = vmatprep.subr.mxu0 0.0
    %2680 = vmatpush1.xpose.msra.mxu0 0.0
    %2681 = vmatprep.subr.mxu0 0.0
    %2682 = vmatpush1.xpose.msra.mxu0 0.0
    %2683 = vmatprep.subr.mxu0 0.0
    %2684 = vmatpush1.xpose.msra.mxu0 0.0
    %2685 = vmatprep.subr.mxu0 0.0
    %2686 = vmatpush1.xpose.msra.mxu0 0.0
    %2687 = vmatprep.subr.mxu0 0.0
    %2688 = vmatpush1.xpose.msra.mxu0 0.0
    %2689 = vmatprep.subr.mxu0 0.0
    %2690 = vmatpush1.xpose.msra.mxu0 0.0
    %2691 = vmatprep.subr.mxu0 0.0
    %2692 = vmatpush1.xpose.msra.mxu0 0.0
    %2693 = vmatprep.subr.mxu0 0.0
    %2694 = vmatpush1.xpose.msra.mxu0 0.0
    %2695 = vmatprep.subr.mxu0 0.0
    %2696 = vmatpush1.xpose.msra.mxu0 0.0
    %2697 = vmatprep.subr.mxu0 0.0
    %2698 = vmatpush1.xpose.msra.mxu0 0.0
    %2699 = vmatprep.subr.mxu0 0.0
    %2700 = vmatpush1.xpose.msra.mxu0 0.0
    %2701 = vmatprep.subr.mxu0 0.0
    %2702 = vmatpush1.xpose.msra.mxu0 0.0
    %2703 = vmatprep.subr.mxu0 0.0
    %2704 = vmatpush1.xpose.msra.mxu0 0.0
    %2705 = vmatprep.subr.mxu0 0.0
    %2706 = vmatpush1.xpose.msra.mxu0 0.0
    %2707 = vmatprep.subr.mxu0 0.0
    %2708 = vmatpush1.xpose.msra.mxu0 0.0
    %2709 = vmatprep.subr.mxu0 0.0
    %2710 = vmatpush1.xpose.msra.mxu0 0.0
    %2711 = vmatprep.subr.mxu0 0.0
    %2712 = vmatpush1.xpose.msra.mxu0 0.0
    %2713 = vmatprep.subr.mxu0 0.0
    %2714 = vmatpush1.xpose.msra.mxu0 0.0
    %2715 = vmatprep.subr.mxu0 0.0
    %2716 = vmatpush1.xpose.msra.mxu0 0.0
    %2717 = vmatprep.subr.mxu0 0.0
    %2718 = vmatpush1.xpose.msra.mxu0 0.0
    %2719 = vmatprep.subr.mxu0 0.0
    %2720 = vmatpush1.xpose.msra.mxu0 0.0
    %2721 = vmatprep.subr.mxu0 0.0
    %2722 = vmatpush1.xpose.msra.mxu0 0.0
    %2723 = vmatprep.subr.mxu0 0.0
    %2724 = vmatpush1.xpose.msra.mxu0 0.0
    %2725 = vmatprep.subr.mxu0 0.0
    %2726 = vmatpush1.xpose.msra.mxu0 0.0
    %2727 = vmatprep.subr.mxu0 0.0
    %2728 = vmatpush1.xpose.msra.mxu0 0.0
    %2729 = vmatprep.subr.mxu0 0.0
    %2730 = vmatpush1.xpose.msra.mxu0 0.0
    %2731 = vmatprep.subr.mxu0 0.0
    %2732 = vmatpush1.xpose.msra.mxu0 0.0
    %2733 = vmatprep.subr.mxu0 0.0
    %2734 = vmatpush1.xpose.msra.mxu0 0.0
    %2735 = vmatprep.subr.mxu0 0.0
    %2736 = vmatpush1.xpose.msra.mxu0 0.0
    %2737 = vmatprep.mubr.f32.mxu0 0.0
    %2738 = vmatmul.mubr.f32.gmra.mrb[0].mxu0 %v2669
    %v2739 = vpop.f32.mrb[0].mxu0
    %v2740 = vadd.f32 0.0, %v2739
    %v2741 = vpop.f32.mrb[0].mxu0
    %2742 = vdwg.mxu0
    %v2743 = vsel %vm436, %v2662, -inf
    %2744 = vmax.xlane.f32.xlu0 %v2743
    %v2745 = vpop.xlane.xlu0 %2744
    %v2746 = vsel %vm436, %v2740, -inf
    %2747 = vmax.xlane.f32.xlu0 %v2746
    %v2748 = vpop.xlane.xlu0 %2747
    %v2749 = vsub.f32 %v2662, %v2745
    %v2750 = vsub.f32 %v2740, %v2748
    %v2751 = vmul.f32 %v2749, 1.442695
    %v2752 = vpow.pop %v2751
    %v2753 = vmul.f32 %v2750, 1.442695
    %v2754 = vpow.pop %v2753
    %v2755 = vsel %vm436, %v2752, 0.0
    %2756 = vadd.xlane.f32.xlu0 %v2755
    %v2757 = vpop.xlane.xlu0 %2756
    %v2758 = vsel %vm436, %v2754, 0.0
    %2759 = vadd.xlane.f32.xlu0 %v2758
    %v2760 = vpop.xlane.xlu0 %2759
    %v2761 = vrcp.pop %v2757
    %v2762 = vrcp.pop %v2760
    %v2763 = vmul.f32 %v2752, %v2761
    %v2764 = vmul.f32 %v2754, %v2762
    %2765 = vrot.lane.b32.xlu0 %v273, 16
    %v2766 = vpop.permute.xlu0 %2765
    %v2769 = vsel %vm436, %v2763, 0
    %2771 = vmatprep.subr.mxu0 0.0
    %2772 = vmatpush1.msra.mxu0 %v2766
    %2773 = vmatprep.subr.mxu0 0.0
    %2774 = vmatpush1.msra.mxu0 0.0
    %2775 = vmatprep.subr.mxu0 0.0
    %2776 = vmatpush1.msra.mxu0 0.0
    %2777 = vmatprep.subr.mxu0 0.0
    %2778 = vmatpush1.msra.mxu0 0.0
    %2779 = vmatprep.subr.mxu0 0.0
    %2780 = vmatpush1.msra.mxu0 0.0
    %2781 = vmatprep.subr.mxu0 0.0
    %2782 = vmatpush1.msra.mxu0 0.0
    %2783 = vmatprep.subr.mxu0 0.0
    %2784 = vmatpush1.msra.mxu0 0.0
    %2785 = vmatprep.subr.mxu0 0.0
    %2786 = vmatpush1.msra.mxu0 0.0
    %2787 = vmatprep.subr.mxu0 0.0
    %2788 = vmatpush1.msra.mxu0 0.0
    %2789 = vmatprep.subr.mxu0 0.0
    %2790 = vmatpush1.msra.mxu0 0.0
    %2791 = vmatprep.subr.mxu0 0.0
    %2792 = vmatpush1.msra.mxu0 0.0
    %2793 = vmatprep.subr.mxu0 0.0
    %2794 = vmatpush1.msra.mxu0 0.0
    %2795 = vmatprep.subr.mxu0 0.0
    %2796 = vmatpush1.msra.mxu0 0.0
    %2797 = vmatprep.subr.mxu0 0.0
    %2798 = vmatpush1.msra.mxu0 0.0
    %2799 = vmatprep.subr.mxu0 0.0
    %2800 = vmatpush1.msra.mxu0 0.0
    %2801 = vmatprep.subr.mxu0 0.0
    %2802 = vmatpush1.msra.mxu0 0.0
    %2803 = vmatprep.subr.mxu0 0.0
    %2804 = vmatpush1.msra.mxu0 0.0
    %2805 = vmatprep.subr.mxu0 0.0
    %2806 = vmatpush1.msra.mxu0 0.0
    %2807 = vmatprep.subr.mxu0 0.0
    %2808 = vmatpush1.msra.mxu0 0.0
    %2809 = vmatprep.subr.mxu0 0.0
    %2810 = vmatpush1.msra.mxu0 0.0
    %2811 = vmatprep.subr.mxu0 0.0
    %2812 = vmatpush1.msra.mxu0 0.0
    %2813 = vmatprep.subr.mxu0 0.0
    %2814 = vmatpush1.msra.mxu0 0.0
    %2815 = vmatprep.subr.mxu0 0.0
    %2816 = vmatpush1.msra.mxu0 0.0
    %2817 = vmatprep.subr.mxu0 0.0
    %2818 = vmatpush1.msra.mxu0 0.0
    %2819 = vmatprep.subr.mxu0 0.0
    %2820 = vmatpush1.msra.mxu0 0.0
    %2821 = vmatprep.subr.mxu0 0.0
    %2822 = vmatpush1.msra.mxu0 0.0
    %2823 = vmatprep.subr.mxu0 0.0
    %2824 = vmatpush1.msra.mxu0 0.0
    %2825 = vmatprep.subr.mxu0 0.0
    %2826 = vmatpush1.msra.mxu0 0.0
    %2827 = vmatprep.subr.mxu0 0.0
    %2828 = vmatpush1.msra.mxu0 0.0
    %2829 = vmatprep.subr.mxu0 0.0
    %2830 = vmatpush1.msra.mxu0 0.0
    %2831 = vmatprep.subr.mxu0 0.0
    %2832 = vmatpush1.msra.mxu0 0.0
    %2833 = vmatprep.subr.mxu0 0.0
    %2834 = vmatpush1.msra.mxu0 0.0
    %2835 = vmatprep.mubr.f32.mxu0 0.0
    %2836 = vmatmul.mubr.f32.gmra.mrb[0].mxu0 %v2769
    %v2837 = vpop.f32.mrb[0].mxu0
    %v2838 = vadd.f32 0.0, %v2837
    %v2839 = vpop.f32.mrb[0].mxu0
    %2840 = vdwg.mxu0
    %2841 = vrot.lane.b32.xlu0 %v278, 16
    %v2842 = vpop.permute.xlu0 %2841
    %v2845 = vsel %vm436, %v2764, 0
    %2847 = vmatprep.subr.mxu0 0.0
    %2848 = vmatpush1.msra.mxu0 %v2842
    %2849 = vmatprep.subr.mxu0 0.0
    %2850 = vmatpush1.msra.mxu0 0.0
    %2851 = vmatprep.subr.mxu0 0.0
    %2852 = vmatpush1.msra.mxu0 0.0
    %2853 = vmatprep.subr.mxu0 0.0
    %2854 = vmatpush1.msra.mxu0 0.0
    %2855 = vmatprep.subr.mxu0 0.0
    %2856 = vmatpush1.msra.mxu0 0.0
    %2857 = vmatprep.subr.mxu0 0.0
    %2858 = vmatpush1.msra.mxu0 0.0
    %2859 = vmatprep.subr.mxu0 0.0
    %2860 = vmatpush1.msra.mxu0 0.0
    %2861 = vmatprep.subr.mxu0 0.0
    %2862 = vmatpush1.msra.mxu0 0.0
    %2863 = vmatprep.subr.mxu0 0.0
    %2864 = vmatpush1.msra.mxu0 0.0
    %2865 = vmatprep.subr.mxu0 0.0
    %2866 = vmatpush1.msra.mxu0 0.0
    %2867 = vmatprep.subr.mxu0 0.0
    %2868 = vmatpush1.msra.mxu0 0.0
    %2869 = vmatprep.subr.mxu0 0.0
    %2870 = vmatpush1.msra.mxu0 0.0
    %2871 = vmatprep.subr.mxu0 0.0
    %2872 = vmatpush1.msra.mxu0 0.0
    %2873 = vmatprep.subr.mxu0 0.0
    %2874 = vmatpush1.msra.mxu0 0.0
    %2875 = vmatprep.subr.mxu0 0.0
    %2876 = vmatpush1.msra.mxu0 0.0
    %2877 = vmatprep.subr.mxu0 0.0
    %2878 = vmatpush1.msra.mxu0 0.0
    %2879 = vmatprep.subr.mxu0 0.0
    %2880 = vmatpush1.msra.mxu0 0.0
    %2881 = vmatprep.subr.mxu0 0.0
    %2882 = vmatpush1.msra.mxu0 0.0
    %2883 = vmatprep.subr.mxu0 0.0
    %2884 = vmatpush1.msra.mxu0 0.0
    %2885 = vmatprep.subr.mxu0 0.0
    %2886 = vmatpush1.msra.mxu0 0.0
    %2887 = vmatprep.subr.mxu0 0.0
    %2888 = vmatpush1.msra.mxu0 0.0
    %2889 = vmatprep.subr.mxu0 0.0
    %2890 = vmatpush1.msra.mxu0 0.0
    %2891 = vmatprep.subr.mxu0 0.0
    %2892 = vmatpush1.msra.mxu0 0.0
    %2893 = vmatprep.subr.mxu0 0.0
    %2894 = vmatpush1.msra.mxu0 0.0
    %2895 = vmatprep.subr.mxu0 0.0
    %2896 = vmatpush1.msra.mxu0 0.0
    %2897 = vmatprep.subr.mxu0 0.0
    %2898 = vmatpush1.msra.mxu0 0.0
    %2899 = vmatprep.subr.mxu0 0.0
    %2900 = vmatpush1.msra.mxu0 0.0
    %2901 = vmatprep.subr.mxu0 0.0
    %2902 = vmatpush1.msra.mxu0 0.0
    %2903 = vmatprep.subr.mxu0 0.0
    %2904 = vmatpush1.msra.mxu0 0.0
    %2905 = vmatprep.subr.mxu0 0.0
    %2906 = vmatpush1.msra.mxu0 0.0
    %2907 = vmatprep.subr.mxu0 0.0
    %2908 = vmatpush1.msra.mxu0 0.0
    %2909 = vmatprep.subr.mxu0 0.0
    %2910 = vmatpush1.msra.mxu0 0.0
    %2911 = vmatprep.mubr.f32.mxu0 0.0
    %2912 = vmatmul.mubr.f32.gmra.mrb[0].mxu0 %v2845
    %v2913 = vpop.f32.mrb[0].mxu0
    %v2914 = vadd.f32 0.0, %v2913
    %v2915 = vpop.f32.mrb[0].mxu0
    %2916 = vdwg.mxu0
    %2919 = vrot.lane.b32.xlu0 %v857, 16
    %v2920 = vpop.permute.xlu0 %2919
    %2921 = vrot.lane.b32.xlu0 %v934, 16
    %v2922 = vpop.permute.xlu0 %2921
    %2927 = vrot.lane.b32.xlu0 %v1188, 32
    %v2928 = vpop.permute.xlu0 %2927
    %2929 = vrot.lane.b32.xlu0 %v1264, 32
    %v2930 = vpop.permute.xlu0 %2929
    %2935 = vrot.lane.b32.xlu0 %v1518, 48
    %v2936 = vpop.permute.xlu0 %2935
    %2937 = vrot.lane.b32.xlu0 %v1594, 48
    %v2938 = vpop.permute.xlu0 %2937
    %2943 = vrot.lane.b32.xlu0 %v1848, 64
    %v2944 = vpop.permute.xlu0 %2943
    %2945 = vrot.lane.b32.xlu0 %v1924, 64
    %v2946 = vpop.permute.xlu0 %2945
    %2951 = vrot.lane.b32.xlu0 %v2178, 80
    %v2952 = vpop.permute.xlu0 %2951
    %2953 = vrot.lane.b32.xlu0 %v2254, 80
    %v2954 = vpop.permute.xlu0 %2953
    %2959 = vrot.lane.b32.xlu0 %v2508, 96
    %v2960 = vpop.permute.xlu0 %2959
    %2961 = vrot.lane.b32.xlu0 %v2584, 96
    %v2962 = vpop.permute.xlu0 %2961
    %2967 = vrot.lane.b32.xlu0 %v2838, 112
    %v2968 = vpop.permute.xlu0 %2967
    %2969 = vrot.lane.b32.xlu0 %v2914, 112
    %v2970 = vpop.permute.xlu0 %2969
    %v2973 = vsel %vm283, %v529, %v2920
    %v2974 = vsel %vm283, %v602, %v2922
    %vm2975 = vcmask 261120
    %v2976 = vsel %vm2975, %v2973, %v2928
    %v2977 = vsel %vm2975, %v2974, %v2930
    %vm2978 = vcmask 392192
    %v2979 = vsel %vm2978, %v2976, %v2936
    %v2980 = vsel %vm2978, %v2977, %v2938
    %vm2981 = vcmask 523264
    %v2982 = vsel %vm2981, %v2979, %v2944
    %v2983 = vsel %vm2981, %v2980, %v2946
    %vm2984 = vcmask 654336
    %v2985 = vsel %vm2984, %v2982, %v2952
    %v2986 = vsel %vm2984, %v2983, %v2954
    %vm2987 = vcmask 785408
    %v2988 = vsel %vm2987, %v2985, %v2960
    %v2989 = vsel %vm2987, %v2986, %v2962
    %vm2990 = vcmask 916480
    %v2991 = vsel %vm2990, %v2988, %v2968
    %v2992 = vsel %vm2990, %v2989, %v2970
    %v2993 = vld [vmem:[#allocation7] sm:$0xff]
    %v2994 = vld [vmem:[#allocation7 + $0x8] sm:$0xff]
    %v2995 = vld [vmem:[#allocation7 + $0x10] sm:$0xff]
    %v2996 = vld [vmem:[#allocation7 + $0x18] sm:$0xff]
    %v2997 = vld [vmem:[#allocation7 + $0x20] sm:$0xff]
    %v2998 = vld [vmem:[#allocation7 + $0x28] sm:$0xff]
    %v2999 = vld [vmem:[#allocation7 + $0x30] sm:$0xff]
    %v3000 = vld [vmem:[#allocation7 + $0x38] sm:$0xff]
    %v3001 = vld [vmem:[#allocation7 + $0x40] sm:$0xff]
    %v3002 = vld [vmem:[#allocation7 + $0x48] sm:$0xff]
    %v3003 = vld [vmem:[#allocation7 + $0x50] sm:$0xff]
    %v3004 = vld [vmem:[#allocation7 + $0x58] sm:$0xff]
    %v3005 = vld [vmem:[#allocation7 + $0x60] sm:$0xff]
    %v3006 = vld [vmem:[#allocation7 + $0x68] sm:$0xff]
    %v3007 = vld [vmem:[#allocation7 + $0x70] sm:$0xff]
    %v3008 = vld [vmem:[#allocation7 + $0x78] sm:$0xff]
    %v3009 = vld [vmem:[%s4] sm:$0x1]
    %v3011 = vlaneseq
    %v3012 = vshrl.u32 %v3011, 7
    %v3013 = vsub.s32 0, %v3012
    %v3014 = vrot.slane %v3009, %v3013
    %3016 = vmatprep.subr.mxu0 0.0
    %3017 = vmatpush1.msra.mxu0 %v2993
    %3018 = vmatprep.subr.mxu0 0.0
    %3019 = vmatpush1.msra.mxu0 %v2994
    %3020 = vmatprep.subr.mxu0 0.0
    %3021 = vmatpush1.msra.mxu0 %v2995
    %3022 = vmatprep.subr.mxu0 0.0
    %3023 = vmatpush1.msra.mxu0 %v2996
    %3024 = vmatprep.subr.mxu0 0.0
    %3025 = vmatpush1.msra.mxu0 %v2997
    %3026 = vmatprep.subr.mxu0 0.0
    %3027 = vmatpush1.msra.mxu0 %v2998
    %3028 = vmatprep.subr.mxu0 0.0
    %3029 = vmatpush1.msra.mxu0 %v2999
    %3030 = vmatprep.subr.mxu0 0.0
    %3031 = vmatpush1.msra.mxu0 %v3000
    %3032 = vmatprep.subr.mxu0 0.0
    %3033 = vmatpush1.msra.mxu0 %v3001
    %3034 = vmatprep.subr.mxu0 0.0
    %3035 = vmatpush1.msra.mxu0 %v3002
    %3036 = vmatprep.subr.mxu0 0.0
    %3037 = vmatpush1.msra.mxu0 %v3003
    %3038 = vmatprep.subr.mxu0 0.0
    %3039 = vmatpush1.msra.mxu0 %v3004
    %3040 = vmatprep.subr.mxu0 0.0
    %3041 = vmatpush1.msra.mxu0 %v3005
    %3042 = vmatprep.subr.mxu0 0.0
    %3043 = vmatpush1.msra.mxu0 %v3006
    %3044 = vmatprep.subr.mxu0 0.0
    %3045 = vmatpush1.msra.mxu0 %v3007
    %3046 = vmatprep.subr.mxu0 0.0
    %3047 = vmatpush1.msra.mxu0 %v3008
    %3048 = vmatprep.subr.mxu0 0.0
    %3049 = vmatpush1.msra.mxu0 0.0
    %3050 = vmatprep.subr.mxu0 0.0
    %3051 = vmatpush1.msra.mxu0 0.0
    %3052 = vmatprep.subr.mxu0 0.0
    %3053 = vmatpush1.msra.mxu0 0.0
    %3054 = vmatprep.subr.mxu0 0.0
    %3055 = vmatpush1.msra.mxu0 0.0
    %3056 = vmatprep.subr.mxu0 0.0
    %3057 = vmatpush1.msra.mxu0 0.0
    %3058 = vmatprep.subr.mxu0 0.0
    %3059 = vmatpush1.msra.mxu0 0.0
    %3060 = vmatprep.subr.mxu0 0.0
    %3061 = vmatpush1.msra.mxu0 0.0
    %3062 = vmatprep.subr.mxu0 0.0
    %3063 = vmatpush1.msra.mxu0 0.0
    %3064 = vmatprep.subr.mxu0 0.0
    %3065 = vmatpush1.msra.mxu0 0.0
    %3066 = vmatprep.subr.mxu0 0.0
    %3067 = vmatpush1.msra.mxu0 0.0
    %3068 = vmatprep.subr.mxu0 0.0
    %3069 = vmatpush1.msra.mxu0 0.0
    %3070 = vmatprep.subr.mxu0 0.0
    %3071 = vmatpush1.msra.mxu0 0.0
    %3072 = vmatprep.subr.mxu0 0.0
    %3073 = vmatpush1.msra.mxu0 0.0
    %3074 = vmatprep.subr.mxu0 0.0
    %3075 = vmatpush1.msra.mxu0 0.0
    %3076 = vmatprep.subr.mxu0 0.0
    %3077 = vmatpush1.msra.mxu0 0.0
    %3078 = vmatprep.subr.mxu0 0.0
    %3079 = vmatpush1.msra.mxu0 0.0
    %3080 = vmatprep.mubr.f32.mxu0 0.0
    %3081 = vmatmul.mubr.f32.gmra.mrb[0].mxu0 %v2991
    %v3082 = vpop.f32.mrb[0].mxu0
    %v3083 = vadd.f32 %v3014, %v3082
    %v3084 = vpop.f32.mrb[0].mxu0
    %3085 = vmatprep.mubr.f32.mxu0 0.0
    %3086 = vmatmul.mubr.f32.gmra.mrb[0].mxu0 %v2992
    %v3087 = vpop.f32.mrb[0].mxu0
    %v3088 = vadd.f32 %v3014, %v3087
    %v3089 = vpop.f32.mrb[0].mxu0
    %3090 = vdwg.mxu0
    %3091 = vst [vmem:[#allocation8] sm:$0xff] %v3083
    %3092 = vst [vmem:[#allocation8 + $0x8] sm:$0xff] %v3088
    // Predicated region
    $region34: #{tpu_custom_call.1} parent=1 // pred_check
      _
    $region35: #{tpu_custom_call.1} parent=1 // pred_check_branch
      %3094 = sbr.rel (0) target = $region37
    $region36: #{tpu_custom_call.1} parent=1 // pred_region
      %s3096 = ssub.s32 256, 256
      %3097 = vsyncadd [#allocation4], %s3096
      %s3098 = sshll.u32 [#allocation8], 4
      %s3099 = int_to_ptr.vmem [resolvable:$true] %s3098
      %3104 = dma.vmem_to_hbm [thread:$0]  %s3099, 256, %s5, [#allocation4], 128, 128, 8
    $region37: #{tpu_custom_call.1} parent=1 // pred_fallthru
      _
    // Predicated region
    $region38: #{tpu_custom_call.1} parent=1 // pred_check
      _
    $region39: #{tpu_custom_call.1} parent=1 // pred_check_branch
      %3106 = sbr.rel (0) target = $region41
    $region40: #{tpu_custom_call.1} parent=1 // pred_region
      %3107 = dma.done [#allocation4], 256
    $region41: #{tpu_custom_call.1} parent=1 // pred_fallthru
      _
    %3108 = vsyncpa [#allocation3], 1
    %3109 = vsyncpa [#allocation6], 1
    %3110 = vsyncpa [#allocation4], 1

</llo_original>
